<compile_context>
chip_gen: v5e
topology: v5e:2x2
jax: 0.10.0
libtpu: 0.0.40
codegen_flags: <defaults>
</compile_context>

<pallas_src>
import math
from functools import reduce, partial
from operator import mul

import jax
import jax.numpy as jnp
from jax.experimental import pallas as pl
from jax.experimental.pallas import tpu as pltpu


def _round_up(x, m):
    return (x + m - 1) // m * m


def _resident_spec(shape, index_map):
    """BlockSpec whose block never changes across the grid: single-buffer it."""
    try:
        return pl.BlockSpec(shape, index_map, pipeline_mode=pl.Buffered(1))
    except (TypeError, AttributeError):
        # Older/newer API without pipeline_mode: fall back to default buffering.
        return pl.BlockSpec(shape, index_map)


def _vmem_budget_bytes():
    cap = 64 << 20  # conservative default: v7x per-TensorCore VMEM
    try:
        cap = int(pltpu.get_tpu_info().vmem_capacity_bytes)
    except Exception:
        pass
    return int(0.65 * cap)


# ----------------------------------------------------------------------------
# Kernel A (resident weights): whole MLP chain, one batch tile per grid step.
# Weights bf16 (in, out)-layout, VMEM-resident (single-buffered); activations
# stream in bf16; every dot accumulates in f32 on the MXU.
# ----------------------------------------------------------------------------
def solver_fwd_kernel(x_ref, w1_ref, b1_ref, w2_ref, b2_ref,
                      w3_ref, b3_ref, wh_ref, bh_ref, o_ref):
    x = jnp.maximum(x_ref[...], 0.0)                      # net: ReLU (bf16)
    h1 = jnp.dot(x, w1_ref[...],                          # Linear(D, D)
                 preferred_element_type=jnp.float32) + b1_ref[...]
    h1 = jnp.maximum(h1, 0.0)                             # Dropout -> id, ReLU
    h2 = jnp.dot(h1.astype(jnp.bfloat16), w2_ref[...],    # Linear(D, D//4)
                 preferred_element_type=jnp.float32) + b2_ref[...]
    h2 = jnp.maximum(h2, 0.0)                             # Dropout -> id, ReLU
    h3 = jnp.dot(h2.astype(jnp.bfloat16), w3_ref[...],    # Linear(D//4, D//4)
                 preferred_element_type=jnp.float32) + b3_ref[...]
    h3 = jnp.maximum(h3, 0.0)                             # forward(): ReLU
    out = jnp.dot(h3.astype(jnp.bfloat16), wh_ref[...],   # task head (padded)
                  preferred_element_type=jnp.float32) + bh_ref[...]
    o_ref[...] = out.astype(o_ref.dtype)


# ----------------------------------------------------------------------------
# Kernel B (streamed w1): grid = (batch tiles, K tiles of D). w1 is streamed as
# (TK, Dp) slabs and reduced into an f32 scratch accumulator; the rest of the
# chain runs once per batch tile on the last K step.
# ----------------------------------------------------------------------------
def solver_fwd_stream_kernel(x_ref, w1_ref, b1_ref, w2_ref, b2_ref,
                             w3_ref, b3_ref, wh_ref, bh_ref, o_ref, acc_ref):
    k = pl.program_id(1)

    @pl.when(k == 0)
    def _():
        acc_ref[...] = jnp.zeros_like(acc_ref)

    xk = jnp.maximum(x_ref[...], 0.0)                     # ReLU is elementwise
    acc_ref[...] += jnp.dot(xk, w1_ref[...],
                            preferred_element_type=jnp.float32)

    @pl.when(k == pl.num_programs(1) - 1)
    def _():
        h1 = jnp.maximum(acc_ref[...] + b1_ref[...], 0.0)
        h2 = jnp.maximum(
            jnp.dot(h1.astype(jnp.bfloat16), w2_ref[...],
                    preferred_element_type=jnp.float32) + b2_ref[...], 0.0)
        h3 = jnp.maximum(
            jnp.dot(h2.astype(jnp.bfloat16), w3_ref[...],
                    preferred_element_type=jnp.float32) + b3_ref[...], 0.0)
        out = jnp.dot(h3.astype(jnp.bfloat16), wh_ref[...],
                      preferred_element_type=jnp.float32) + bh_ref[...]
        o_ref[...] = out.astype(o_ref.dtype)


# ----------------------------------------------------------------------------
# One-time parameter preparation (hoisted out of the per-call path):
#   - transpose PyTorch (out, in) weights to (in, out) and cast to bf16
#   - zero-pad D and H=D//4 to multiples of 256 (full MXU tiles) and the task
#     head to a lane-dense 128-wide output
#   - biases kept f32 as (1, out) zero-padded rows
# TODO(synk): optionally quantize w1 to int8 (v5e/v6e) / fp8 (v7x) with
# per-output-channel scales folded into b1 to halve the dominant weight DMA.
# ----------------------------------------------------------------------------
def prepare_params(params, *, align=256):
    D = params["w1"].shape[1]
    Hd = params["w3"].shape[0]
    O = params["w"].shape[0]
    Dp = _round_up(D, align)
    Hp = _round_up(Hd, align)
    OP = _round_up(max(O, 128), 128)

    def pad2(a, r, c):
        return jnp.zeros((r, c), a.dtype).at[:a.shape[0], :a.shape[1]].set(a)

    w1t = pad2(params["w1"].T.astype(jnp.bfloat16), Dp, Dp)   # (Dp, Dp)
    w2t = pad2(params["w2"].T.astype(jnp.bfloat16), Dp, Hp)   # (Dp, Hp)
    w3t = pad2(params["w3"].T.astype(jnp.bfloat16), Hp, Hp)   # (Hp, Hp)
    wht = pad2(params["w"].T.astype(jnp.bfloat16), Hp, OP)    # (Hp, OP)
    b1 = pad2(params["b1"][None, :].astype(jnp.float32), 1, Dp)
    b2 = pad2(params["b2"][None, :].astype(jnp.float32), 1, Hp)
    b3 = pad2(params["b3"][None, :].astype(jnp.float32), 1, Hp)
    bh = pad2(params["b"][None, :].astype(jnp.float32), 1, OP)
    return dict(w1t=w1t, b1=b1, w2t=w2t, b2=b2, w3t=w3t, b3=b3, wht=wht, bh=bh)


# ----------------------------------------------------------------------------
# Wrapper: flatten, bf16 activation stream, batch tiling, path selection
# (resident vs streamed-w1) based on a generation-aware VMEM budget.
# ----------------------------------------------------------------------------
@partial(jax.jit, static_argnames=("out_features", "force_stream"))
def solver_forward(x_nchw, prep, *, out_features, force_stream=False):
    B = x_nchw.shape[0]
    x_flat = x_nchw.reshape(B, -1).astype(jnp.bfloat16)    # nn.Flatten + bf16
    D = x_flat.shape[1]

    w1t, w2t, w3t, wht = prep["w1t"], prep["w2t"], prep["w3t"], prep["wht"]
    b1, b2, b3, bh = prep["b1"], prep["b2"], prep["b3"], prep["bh"]
    Dp, Hp, OP = w1t.shape[0], w3t.shape[0], wht.shape[1]

    if D != Dp:                                            # feature-dim pad
        x_flat = jnp.pad(x_flat, ((0, 0), (0, Dp - D)))

    # Batch tile: multiple of the bf16 sublane tile (16), capped at 512 so per-
    # grid-step overhead amortizes. Small batches keep grid=1 (weight-DMA-bound
    # regime: splitting across v7x cores would only duplicate the weight DMA);
    # B > 512 yields n_bt >= 2 so the "parallel" axis feeds both TensorCores.
    TB = max(16, min(512, _round_up(B, 16)))
    Bp = _round_up(B, TB)
    if Bp != B:
        x_flat = jnp.pad(x_flat, ((0, Bp - B), (0, 0)))
    n_bt = Bp // TB

    weights = (w1t, b1, w2t, b2, w3t, b3, wht, bh)
    weight_bytes = sum(int(a.size) * a.dtype.itemsize for a in weights)
    w1_bytes = int(w1t.size) * w1t.dtype.itemsize

    x_tile_bytes = TB * Dp * 2                     # bf16 activation tile
    out_tile_bytes = TB * OP * 2                   # bf16 output tile
    act_bytes = TB * (Dp + 2 * Hp + OP) * 6        # f32 + bf16 temporaries
    margin = 4 << 20

    # Resident path: weights single-buffered, x/out double-buffered.
    vmem_resident = (weight_bytes + 2 * (x_tile_bytes + out_tile_bytes)
                     + act_bytes + margin)

    # Streamed-w1 path: (TK, Dp) slabs double-buffered + f32 accumulator.
    TK = 256
    n_k = Dp // TK
    x_slab_bytes = TB * TK * 2
    w1_slab_bytes = TK * Dp * 2
    acc_bytes = TB * Dp * 4
    vmem_stream = ((weight_bytes - w1_bytes)
                   + 2 * (x_slab_bytes + w1_slab_bytes + out_tile_bytes)
                   + acc_bytes + act_bytes + margin)

    budget = _vmem_budget_bytes()
    use_stream = force_stream or (vmem_resident > budget)
    if use_stream and vmem_stream > budget:
        # TODO(synk): also tile w2/w3 over K/N for extreme input_dim where even
        # the streamed-w1 design exceeds the per-core VMEM budget.
        raise ValueError("input_dim too large even for the streamed-w1 kernel")

    flops = 2 * Bp * (Dp * Dp + Dp * Hp + Hp * Hp + Hp * OP)
    bytes_accessed = weight_bytes + Bp * Dp * 2 + Bp * OP * 2
    cost = pl.CostEstimate(flops=flops, transcendentals=0,
                           bytes_accessed=bytes_accessed)

    if not use_stream:
        def resident(i):
            return (0, 0)

        in_specs = [
            pl.BlockSpec((TB, Dp), lambda i: (i, 0)),      # x: batch-tiled
            _resident_spec(w1t.shape, resident),
            _resident_spec(b1.shape, resident),
            _resident_spec(w2t.shape, resident),
            _resident_spec(b2.shape, resident),
            _resident_spec(w3t.shape, resident),
            _resident_spec(b3.shape, resident),
            _resident_spec(wht.shape, resident),
            _resident_spec(bh.shape, resident),
        ]
        out_padded = pl.pallas_call(
            solver_fwd_kernel,
            out_shape=jax.ShapeDtypeStruct((Bp, OP), jnp.bfloat16),
            grid=(n_bt,),
            in_specs=in_specs,
            out_specs=pl.BlockSpec((TB, OP), lambda i: (i, 0)),
            compiler_params=pltpu.CompilerParams(
                dimension_semantics=("parallel",),
                vmem_limit_bytes=int(vmem_resident)),
            cost_estimate=cost,
        )(x_flat, *weights)
    else:
        def resident(i, k):
            return (0, 0)

        in_specs = [
            pl.BlockSpec((TB, TK), lambda i, k: (i, k)),   # x: batch x K tiled
            pl.BlockSpec((TK, Dp), lambda i, k: (k, 0)),   # w1: streamed slabs
            _resident_spec(b1.shape, resident),
            _resident_spec(w2t.shape, resident),
            _resident_spec(b2.shape, resident),
            _resident_spec(w3t.shape, resident),
            _resident_spec(b3.shape, resident),
            _resident_spec(wht.shape, resident),
            _resident_spec(bh.shape, resident),
        ]
        out_padded = pl.pallas_call(
            solver_fwd_stream_kernel,
            out_shape=jax.ShapeDtypeStruct((Bp, OP), jnp.bfloat16),
            grid=(n_bt, n_k),
            in_specs=in_specs,
            out_specs=pl.BlockSpec((TB, OP), lambda i, k: (i, 0)),
            scratch_shapes=[pltpu.VMEM((TB, Dp), jnp.float32)],
            compiler_params=pltpu.CompilerParams(
                dimension_semantics=("parallel", "arbitrary"),
                vmem_limit_bytes=int(vmem_stream)),
            cost_estimate=cost,
        )(x_flat, *weights)

    return out_padded[:B, :out_features].astype(jnp.float32)


# ----------------------------------------------------------------------------
# Deterministic parameter init (matches shapes of the PyTorch module).
# kaiming_uniform_(a=sqrt(5)) on a (out, in) weight is U(-b, b), b=1/sqrt(fan_in);
# biases are U(-1/sqrt(fan_in), 1/sqrt(fan_in)).
# ----------------------------------------------------------------------------
def init_params(key, input_dim_tuple, output_size):
    D = reduce(mul, input_dim_tuple, 1)   # flat_input
    H = D // 4                            # last_layer_dimension

    def linear_init(key, in_f, out_f):
        kw, kb = jax.random.split(key)
        bound = 1.0 / math.sqrt(in_f)
        w = jax.random.uniform(kw, (out_f, in_f), jnp.float32, -bound, bound)
        b = jax.random.uniform(kb, (out_f,), jnp.float32, -bound, bound)
        return w, b

    k1, k2, k3, k4 = jax.random.split(key, 4)
    w1, b1 = linear_init(k1, D, D)            # Linear(D, D)
    w2, b2 = linear_init(k2, D, H)            # Linear(D, D//4)
    w3, b3 = linear_init(k3, H, H)            # Linear(D//4, D//4)
    w, b = linear_init(k4, H, output_size)    # add_task(output_size) head
    return dict(w1=w1, b1=b1, w2=w2, b2=b2, w3=w3, b3=b3, w=w, b=b), D, H


# Pure-JAX references for sanity checking.
def reference_forward_f32(x_nchw, p):
    x = x_nchw.reshape(x_nchw.shape[0], -1)
    x = jnp.maximum(x, 0.0)
    x = x @ p["w1"].T + p["b1"]
    x = jnp.maximum(x, 0.0)
    x = x @ p["w2"].T + p["b2"]
    x = jnp.maximum(x, 0.0)
    x = x @ p["w3"].T + p["b3"]
    x = jnp.maximum(x, 0.0)
    return x @ p["w"].T + p["b"]


def reference_forward_prepared(x_nchw, prep, out_features):
    """Mirrors the kernel's bf16-stream / f32-accumulate math exactly."""
    def lin(x, w, b):
        return jnp.dot(x.astype(jnp.bfloat16), w,
                       preferred_element_type=jnp.float32) + b
    x = x_nchw.reshape(x_nchw.shape[0], -1).astype(jnp.bfloat16)
    Dp = prep["w1t"].shape[0]
    if x.shape[1] != Dp:
        x = jnp.pad(x, ((0, 0), (0, Dp - x.shape[1])))
    x = jnp.maximum(x, 0.0)
    x = jnp.maximum(lin(x, prep["w1t"], prep["b1"]), 0.0)
    x = jnp.maximum(lin(x, prep["w2t"], prep["b2"]), 0.0)
    x = jnp.maximum(lin(x, prep["w3t"], prep["b3"]), 0.0)
    x = lin(x, prep["wht"], prep["bh"]).astype(jnp.bfloat16)
    return x[:, :out_features].astype(jnp.float32)


if __name__ == "__main__":
    key = jax.random.PRNGKey(0)
    kx, kp = jax.random.split(key)

    # Small shapes: batch=2, channels=4, spatial=16 -> input_dim = 1024.
    B, C, Hs, Ws = 2, 4, 16, 16
    output_size = 10  # add_task(10)

    x = jax.random.normal(kx, (B, C, Hs, Ws), jnp.float32)
    params, D, H = init_params(kp, (C, Hs, Ws), output_size)

    prep = prepare_params(params)   # one-time: transpose + bf16-cast + pad

    # Resident-weight path (default for this size).
    out = solver_forward(x, prep, out_features=output_size)
    out = jax.block_until_ready(out)
    assert out.shape == (B, output_size), out.shape

    # Streamed-w1 (K-tiled) path, exercised at small shapes via force_stream.
    out_s = solver_forward(x, prep, out_features=output_size, force_stream=True)
    out_s = jax.block_until_ready(out_s)
    assert out_s.shape == (B, output_size), out_s.shape

    # Exact-math check against a reference using the same bf16 operands.
    ref_bf16 = reference_forward_prepared(x, prep, output_size)
    assert jnp.allclose(out, ref_bf16, atol=2e-2, rtol=2e-2), (
        float(jnp.max(jnp.abs(out - ref_bf16))))
    assert jnp.allclose(out_s, ref_bf16, atol=2e-2, rtol=2e-2), (
        float(jnp.max(jnp.abs(out_s - ref_bf16))))

    # Semantic check against the full-f32 PyTorch-equivalent forward
    # (loose tolerance accounts for bf16 weight/activation quantization).
    ref_f32 = reference_forward_f32(x, params)
    assert jnp.allclose(out, ref_f32, atol=6e-2, rtol=6e-2), (
        float(jnp.max(jnp.abs(out - ref_f32))))
    assert jnp.allclose(out_s, ref_f32, atol=6e-2, rtol=6e-2), (
        float(jnp.max(jnp.abs(out_s - ref_f32))))

    print("KERNEL_OK")
</pallas_src>

<mosaic_0001>
module attributes {stable_mosaic.version = 11 : i64} {
  func.func @solver_fwd_kernel(%arg0: i32, %arg1: memref<16x1024xbf16, #tpu.memory_space<vmem>>, %arg2: memref<1024x1024xbf16, #tpu.memory_space<vmem>>, %arg3: memref<1x1024xf32, #tpu.memory_space<vmem>>, %arg4: memref<1024x256xbf16, #tpu.memory_space<vmem>>, %arg5: memref<1x256xf32, #tpu.memory_space<vmem>>, %arg6: memref<256x256xbf16, #tpu.memory_space<vmem>>, %arg7: memref<1x256xf32, #tpu.memory_space<vmem>>, %arg8: memref<256x128xbf16, #tpu.memory_space<vmem>>, %arg9: memref<1x128xf32, #tpu.memory_space<vmem>>, %arg10: memref<16x128xbf16, #tpu.memory_space<vmem>>) attributes {dimension_semantics = [#tpu.dimension_semantics<parallel>], iteration_bounds = array<i64: 1>, scalar_prefetch = 0 : i64, scratch_operands = 0 : i64, tpu.core_type = #tpu.core_type<tc>, window_params = [{transform_indices = @transform_0, window_bounds = array<i64: 16, 1024>}, {pipeline_mode = #tpu.pipeline_mode<synchronous>, transform_indices = @transform_1, window_bounds = array<i64: 1024, 1024>}, {pipeline_mode = #tpu.pipeline_mode<synchronous>, transform_indices = @transform_2, window_bounds = array<i64: 1, 1024>}, {pipeline_mode = #tpu.pipeline_mode<synchronous>, transform_indices = @transform_3, window_bounds = array<i64: 1024, 256>}, {pipeline_mode = #tpu.pipeline_mode<synchronous>, transform_indices = @transform_4, window_bounds = array<i64: 1, 256>}, {pipeline_mode = #tpu.pipeline_mode<synchronous>, transform_indices = @transform_5, window_bounds = array<i64: 256, 256>}, {pipeline_mode = #tpu.pipeline_mode<synchronous>, transform_indices = @transform_6, window_bounds = array<i64: 1, 256>}, {pipeline_mode = #tpu.pipeline_mode<synchronous>, transform_indices = @transform_7, window_bounds = array<i64: 256, 128>}, {pipeline_mode = #tpu.pipeline_mode<synchronous>, transform_indices = @transform_8, window_bounds = array<i64: 1, 128>}, {transform_indices = @transform_9, window_bounds = array<i64: 16, 128>}]} {
    %c0 = arith.constant 0 : index
    %c0_0 = arith.constant 0 : index
    %0 = vector.load %arg1[%c0, %c0_0] : memref<16x1024xbf16, #tpu.memory_space<vmem>>, vector<16x1024xbf16>
    %cst = arith.constant 0.000000e+00 : bf16
    %1 = vector.broadcast %cst : bf16 to vector<16x1024xbf16>
    %2 = arith.maximumf %0, %1 : vector<16x1024xbf16>
    %c0_1 = arith.constant 0 : index
    %c0_2 = arith.constant 0 : index
    %3 = vector.load %arg2[%c0_1, %c0_2] : memref<1024x1024xbf16, #tpu.memory_space<vmem>>, vector<1024x1024xbf16>
    %cst_3 = arith.constant dense<0.000000e+00> : vector<16x1024xf32>
    %4 = tpu.matmul %2, %3, %cst_3 {dimension_numbers = #tpu.dot_dimension_numbers<[1], [0], [0], [1], [0, 0, 1, 1], [], []>} : vector<16x1024xbf16>, vector<1024x1024xbf16>, vector<16x1024xf32> -> vector<16x1024xf32>
    %c0_4 = arith.constant 0 : index
    %c0_5 = arith.constant 0 : index
    %5 = vector.load %arg3[%c0_4, %c0_5] : memref<1x1024xf32, #tpu.memory_space<vmem>>, vector<1x1024xf32>
    %6 = vector.broadcast %5 : vector<1x1024xf32> to vector<16x1024xf32>
    %7 = arith.addf %4, %6 : vector<16x1024xf32>
    %cst_6 = arith.constant 0.000000e+00 : f32
    %8 = vector.broadcast %cst_6 : f32 to vector<16x1024xf32>
    %9 = arith.maximumf %7, %8 : vector<16x1024xf32>
    %10 = arith.truncf %9 : vector<16x1024xf32> to vector<16x1024xbf16>
    %c0_7 = arith.constant 0 : index
    %c0_8 = arith.constant 0 : index
    %11 = vector.load %arg4[%c0_7, %c0_8] : memref<1024x256xbf16, #tpu.memory_space<vmem>>, vector<1024x256xbf16>
    %cst_9 = arith.constant dense<0.000000e+00> : vector<16x256xf32>
    %12 = tpu.matmul %10, %11, %cst_9 {dimension_numbers = #tpu.dot_dimension_numbers<[1], [0], [0], [1], [0, 0, 1, 1], [], []>} : vector<16x1024xbf16>, vector<1024x256xbf16>, vector<16x256xf32> -> vector<16x256xf32>
    %c0_10 = arith.constant 0 : index
    %c0_11 = arith.constant 0 : index
    %13 = vector.load %arg5[%c0_10, %c0_11] : memref<1x256xf32, #tpu.memory_space<vmem>>, vector<1x256xf32>
    %14 = vector.broadcast %13 : vector<1x256xf32> to vector<16x256xf32>
    %15 = arith.addf %12, %14 : vector<16x256xf32>
    %cst_12 = arith.constant 0.000000e+00 : f32
    %16 = vector.broadcast %cst_12 : f32 to vector<16x256xf32>
    %17 = arith.maximumf %15, %16 : vector<16x256xf32>
    %18 = arith.truncf %17 : vector<16x256xf32> to vector<16x256xbf16>
    %c0_13 = arith.constant 0 : index
    %c0_14 = arith.constant 0 : index
    %19 = vector.load %arg6[%c0_13, %c0_14] : memref<256x256xbf16, #tpu.memory_space<vmem>>, vector<256x256xbf16>
    %cst_15 = arith.constant dense<0.000000e+00> : vector<16x256xf32>
    %20 = tpu.matmul %18, %19, %cst_15 {dimension_numbers = #tpu.dot_dimension_numbers<[1], [0], [0], [1], [0, 0, 1, 1], [], []>} : vector<16x256xbf16>, vector<256x256xbf16>, vector<16x256xf32> -> vector<16x256xf32>
    %c0_16 = arith.constant 0 : index
    %c0_17 = arith.constant 0 : index
    %21 = vector.load %arg7[%c0_16, %c0_17] : memref<1x256xf32, #tpu.memory_space<vmem>>, vector<1x256xf32>
    %22 = vector.broadcast %21 : vector<1x256xf32> to vector<16x256xf32>
    %23 = arith.addf %20, %22 : vector<16x256xf32>
    %cst_18 = arith.constant 0.000000e+00 : f32
    %24 = vector.broadcast %cst_18 : f32 to vector<16x256xf32>
    %25 = arith.maximumf %23, %24 : vector<16x256xf32>
    %26 = arith.truncf %25 : vector<16x256xf32> to vector<16x256xbf16>
    %c0_19 = arith.constant 0 : index
    %c0_20 = arith.constant 0 : index
    %27 = vector.load %arg8[%c0_19, %c0_20] : memref<256x128xbf16, #tpu.memory_space<vmem>>, vector<256x128xbf16>
    %cst_21 = arith.constant dense<0.000000e+00> : vector<16x128xf32>
    %28 = tpu.matmul %26, %27, %cst_21 {dimension_numbers = #tpu.dot_dimension_numbers<[1], [0], [0], [1], [0, 0, 1, 1], [], []>} : vector<16x256xbf16>, vector<256x128xbf16>, vector<16x128xf32> -> vector<16x128xf32>
    %c0_22 = arith.constant 0 : index
    %c0_23 = arith.constant 0 : index
    %29 = vector.load %arg9[%c0_22, %c0_23] : memref<1x128xf32, #tpu.memory_space<vmem>>, vector<1x128xf32>
    %30 = vector.broadcast %29 : vector<1x128xf32> to vector<16x128xf32>
    %31 = arith.addf %28, %30 : vector<16x128xf32>
    %32 = arith.truncf %31 : vector<16x128xf32> to vector<16x128xbf16>
    %c0_24 = arith.constant 0 : index
    %c0_25 = arith.constant 0 : index
    %33 = vector.load %arg10[%c0_24, %c0_25] : memref<16x128xbf16, #tpu.memory_space<vmem>>, vector<16x128xbf16>
    tpu.vector_store %arg10[%c0_24, %c0_25], %32 {strides = array<i32>} : memref<16x128xbf16, #tpu.memory_space<vmem>>, vector<16x128xbf16>,
    return
  }
  func.func @transform_0(%arg0: i32) -> (i32, i32) {
    %c0_i32 = arith.constant 0 : i32
    %c0_i32_0 = arith.constant 0 : i32
    return %arg0, %c0_i32 : i32, i32
  }
  func.func @transform_1(%arg0: i32) -> (i32, i32) {
    %c0_i32 = arith.constant 0 : i32
    %c0_i32_0 = arith.constant 0 : i32
    %c0_i32_1 = arith.constant 0 : i32
    return %c0_i32, %c0_i32_0 : i32, i32
  }
  func.func @transform_2(%arg0: i32) -> (i32, i32) {
    %c0_i32 = arith.constant 0 : i32
    %c0_i32_0 = arith.constant 0 : i32
    %c0_i32_1 = arith.constant 0 : i32
    return %c0_i32, %c0_i32_0 : i32, i32
  }
  func.func @transform_3(%arg0: i32) -> (i32, i32) {
    %c0_i32 = arith.constant 0 : i32
    %c0_i32_0 = arith.constant 0 : i32
    %c0_i32_1 = arith.constant 0 : i32
    return %c0_i32, %c0_i32_0 : i32, i32
  }
  func.func @transform_4(%arg0: i32) -> (i32, i32) {
    %c0_i32 = arith.constant 0 : i32
    %c0_i32_0 = arith.constant 0 : i32
    %c0_i32_1 = arith.constant 0 : i32
    return %c0_i32, %c0_i32_0 : i32, i32
  }
  func.func @transform_5(%arg0: i32) -> (i32, i32) {
    %c0_i32 = arith.constant 0 : i32
    %c0_i32_0 = arith.constant 0 : i32
    %c0_i32_1 = arith.constant 0 : i32
    return %c0_i32, %c0_i32_0 : i32, i32
  }
  func.func @transform_6(%arg0: i32) -> (i32, i32) {
    %c0_i32 = arith.constant 0 : i32
    %c0_i32_0 = arith.constant 0 : i32
    %c0_i32_1 = arith.constant 0 : i32
    return %c0_i32, %c0_i32_0 : i32, i32
  }
  func.func @transform_7(%arg0: i32) -> (i32, i32) {
    %c0_i32 = arith.constant 0 : i32
    %c0_i32_0 = arith.constant 0 : i32
    %c0_i32_1 = arith.constant 0 : i32
    return %c0_i32, %c0_i32_0 : i32, i32
  }
  func.func @transform_8(%arg0: i32) -> (i32, i32) {
    %c0_i32 = arith.constant 0 : i32
    %c0_i32_0 = arith.constant 0 : i32
    %c0_i32_1 = arith.constant 0 : i32
    return %c0_i32, %c0_i32_0 : i32, i32
  }
  func.func @transform_9(%arg0: i32) -> (i32, i32) {
    %c0_i32 = arith.constant 0 : i32
    %c0_i32_0 = arith.constant 0 : i32
    return %arg0, %c0_i32 : i32, i32
  }
}

</mosaic_0001>

<llo_original>
// kernel: solver_forward.1
$region0: #{solver_forward.1}
  #allocation0 [shape = 'u32[]', space=smem, size = 0x4, offset = 0x4, fixed_abs, tag = 'smem constant byte address 0x4 - core index']
  #allocation1 [shape = 'u32[72,128]{1,0:T(1,128)}', space=vmem, size = 0x9000, scoped, tag = 'internal scratch']
  %s0 = inlined_call_operand.vmem [shape: bf16[16,1024], index: 0, kind: input, shape index: {}]
  %s1 = inlined_call_operand.hbm [shape: bf16[1024,1024], index: 1, kind: input, shape index: {}]
  %s2 = inlined_call_operand.hbm [shape: f32[1,1024], index: 2, kind: input, shape index: {}]
  %s3 = inlined_call_operand.hbm [shape: bf16[1024,256], index: 3, kind: input, shape index: {}]
  %s4 = inlined_call_operand.hbm [shape: f32[1,256], index: 4, kind: input, shape index: {}]
  %s5 = inlined_call_operand.hbm [shape: bf16[256,256], index: 5, kind: input, shape index: {}]
  %s6 = inlined_call_operand.hbm [shape: f32[1,256], index: 6, kind: input, shape index: {}]
  %s7 = inlined_call_operand.hbm [shape: bf16[256,128], index: 7, kind: input, shape index: {}]
  %s8 = inlined_call_operand.hbm [shape: f32[1,128], index: 8, kind: input, shape index: {}]
  %s9 = inlined_call_operand.vmem [shape: bf16[16,128], index: 9, kind: output, shape index: {}]
  %s10 = sld [smem:[#allocation0]]
  $region78: #{solver_forward.1} parent=0
    _
  %s12 = ssub.s32 1, %s10
  %s13 = scalar_select 0, %s12, %s10
  $region1: #{solver_forward.1} parent=0
    #allocation2 [shape = 'u8[2097152]{0}', space=vmem, size = 0x200000, scoped, tag = 'input window, operand 1, single buffered']
    #allocation3 [shape = 's32[1]{0}', space=sflag, size = 0x4, scoped, tag = 'scoped memory for solver_forward.1']
    #allocation4 [shape = 'u8[4096]{0}', space=vmem, size = 0x1000, scoped, tag = 'input window, operand 2, single buffered']
    #allocation5 [shape = 's32[1]{0}', space=sflag, size = 0x4, scoped, tag = 'scoped memory for solver_forward.1']
    #allocation6 [shape = 'u8[524288]{0}', space=vmem, size = 0x80000, scoped, tag = 'input window, operand 3, single buffered']
    #allocation7 [shape = 'u8[1024]{0}', space=vmem, size = 0x400, scoped, tag = 'input window, operand 4, single buffered']
    #allocation8 [shape = 's32[1]{0}', space=sflag, size = 0x4, scoped, tag = 'scoped memory for solver_forward.1']
    #allocation9 [shape = 'u8[131072]{0}', space=vmem, size = 0x20000, scoped, tag = 'input window, operand 5, single buffered']
    #allocation10 [shape = 'u8[1024]{0}', space=vmem, size = 0x400, scoped, tag = 'input window, operand 6, single buffered']
    #allocation11 [shape = 's32[1]{0}', space=sflag, size = 0x4, scoped, tag = 'scoped memory for solver_forward.1']
    #allocation12 [shape = 'u8[65536]{0}', space=vmem, size = 0x10000, scoped, tag = 'input window, operand 7, single buffered']
    #allocation13 [shape = 'u8[512]{0}', space=vmem, size = 0x400, scoped, tag = 'input window, operand 8, single buffered']
    #allocation14 [shape = 's32[1]{0}', space=sflag, size = 0x4, scoped, tag = 'scoped memory for solver_forward.1']
    %14 = vsyncpa [#allocation3], 0
    %15 = vsyncpa [#allocation5], 0
    %16 = vsyncpa [#allocation8], 0
    %17 = vsyncpa [#allocation11], 0
    %18 = vsyncpa [#allocation14], 0
    // Predicated region
    $region2: #{solver_forward.1} parent=1 // pred_check
      _
    $region3: #{solver_forward.1} parent=1 // pred_check_branch
      %20 = sbr.rel (0) target = $region5
    $region4: #{solver_forward.1} parent=1 // pred_region
      _
    $region5: #{solver_forward.1} parent=1 // pred_fallthru
      _
    // Predicated region
    $region6: #{solver_forward.1} parent=1 // pred_check
      _
    $region7: #{solver_forward.1} parent=1 // pred_check_branch
      %22 = sbr.rel (0) target = $region9
    $region8: #{solver_forward.1} parent=1 // pred_region
      %24 = vsyncadd [#allocation3], 0
      %s25 = sshll.u32 %s1, 4
      %s26 = int_to_ptr.hbm [resolvable:$true] %s25
      %s27 = sshll.u32 [#allocation2], 4
      %s28 = int_to_ptr.vmem [resolvable:$true] %s27
      %33 = dma.hbm_to_vmem [thread:$0]  %s26, 65536, %s28, [#allocation3], 512, 512, 32
    $region9: #{solver_forward.1} parent=1 // pred_fallthru
      _
    // Predicated region
    $region10: #{solver_forward.1} parent=1 // pred_check
      _
    $region11: #{solver_forward.1} parent=1 // pred_check_branch
      %35 = sbr.rel (0) target = $region13
    $region12: #{solver_forward.1} parent=1 // pred_region
      %37 = vsyncadd [#allocation5], 0
      %s39 = sshll.u32 %s2, 4
      %s40 = int_to_ptr.hbm [resolvable:$true] %s39
      %s41 = sshll.u32 [#allocation4], 4
      %s42 = int_to_ptr.vmem [resolvable:$true] %s41
      %44 = dma.hbm_to_vmem [thread:$0]  %s40, 128, %s42, [#allocation5]
    $region13: #{solver_forward.1} parent=1 // pred_fallthru
      _
    // Predicated region
    $region14: #{solver_forward.1} parent=1 // pred_check
      _
    $region15: #{solver_forward.1} parent=1 // pred_check_branch
      %46 = sbr.rel (0) target = $region17
    $region16: #{solver_forward.1} parent=1 // pred_region
      %48 = vsyncadd [#allocation5], 0
      %s49 = sshll.u32 %s3, 4
      %s50 = int_to_ptr.hbm [resolvable:$true] %s49
      %s51 = sshll.u32 [#allocation6], 4
      %s52 = int_to_ptr.vmem [resolvable:$true] %s51
      %57 = dma.hbm_to_vmem [thread:$0]  %s50, 16384, %s52, [#allocation5], 128, 128, 8
    $region17: #{solver_forward.1} parent=1 // pred_fallthru
      _
    // Predicated region
    $region18: #{solver_forward.1} parent=1 // pred_check
      _
    $region19: #{solver_forward.1} parent=1 // pred_check_branch
      %59 = sbr.rel (0) target = $region21
    $region20: #{solver_forward.1} parent=1 // pred_region
      %61 = vsyncadd [#allocation8], 0
      %s63 = sshll.u32 %s4, 4
      %s64 = int_to_ptr.hbm [resolvable:$true] %s63
      %s65 = sshll.u32 [#allocation7], 4
      %s66 = int_to_ptr.vmem [resolvable:$true] %s65
      %68 = dma.hbm_to_vmem [thread:$0]  %s64, 32, %s66, [#allocation8]
    $region21: #{solver_forward.1} parent=1 // pred_fallthru
      _
    // Predicated region
    $region22: #{solver_forward.1} parent=1 // pred_check
      _
    $region23: #{solver_forward.1} parent=1 // pred_check_branch
      %70 = sbr.rel (0) target = $region25
    $region24: #{solver_forward.1} parent=1 // pred_region
      %72 = vsyncadd [#allocation8], 0
      %s73 = sshll.u32 %s5, 4
      %s74 = int_to_ptr.hbm [resolvable:$true] %s73
      %s75 = sshll.u32 [#allocation9], 4
      %s76 = int_to_ptr.vmem [resolvable:$true] %s75
      %81 = dma.hbm_to_vmem [thread:$0]  %s74, 4096, %s76, [#allocation8], 128, 128, 8
    $region25: #{solver_forward.1} parent=1 // pred_fallthru
      _
    // Predicated region
    $region26: #{solver_forward.1} parent=1 // pred_check
      _
    $region27: #{solver_forward.1} parent=1 // pred_check_branch
      %83 = sbr.rel (0) target = $region29
    $region28: #{solver_forward.1} parent=1 // pred_region
      %85 = vsyncadd [#allocation11], 0
      %s87 = sshll.u32 %s6, 4
      %s88 = int_to_ptr.hbm [resolvable:$true] %s87
      %s89 = sshll.u32 [#allocation10], 4
      %s90 = int_to_ptr.vmem [resolvable:$true] %s89
      %92 = dma.hbm_to_vmem [thread:$0]  %s88, 32, %s90, [#allocation11]
    $region29: #{solver_forward.1} parent=1 // pred_fallthru
      _
    // Predicated region
    $region30: #{solver_forward.1} parent=1 // pred_check
      _
    $region31: #{solver_forward.1} parent=1 // pred_check_branch
      %94 = sbr.rel (0) target = $region33
    $region32: #{solver_forward.1} parent=1 // pred_region
      %96 = vsyncadd [#allocation11], 0
      %s97 = sshll.u32 %s7, 4
      %s98 = int_to_ptr.hbm [resolvable:$true] %s97
      %s99 = sshll.u32 [#allocation12], 4
      %s100 = int_to_ptr.vmem [resolvable:$true] %s99
      %105 = dma.hbm_to_vmem [thread:$0]  %s98, 2048, %s100, [#allocation11], 64, 64, 4
    $region33: #{solver_forward.1} parent=1 // pred_fallthru
      _
    // Predicated region
    $region34: #{solver_forward.1} parent=1 // pred_check
      _
    $region35: #{solver_forward.1} parent=1 // pred_check_branch
      %107 = sbr.rel (0) target = $region37
    $region36: #{solver_forward.1} parent=1 // pred_region
      %109 = vsyncadd [#allocation14], 0
      %s111 = sshll.u32 %s8, 4
      %s112 = int_to_ptr.hbm [resolvable:$true] %s111
      %s113 = sshll.u32 [#allocation13], 4
      %s114 = int_to_ptr.vmem [resolvable:$true] %s113
      %116 = dma.hbm_to_vmem [thread:$0]  %s112, 16, %s114, [#allocation14]
    $region37: #{solver_forward.1} parent=1 // pred_fallthru
      _
    // Predicated region
    $region38: #{solver_forward.1} parent=1 // pred_check
      _
    $region39: #{solver_forward.1} parent=1 // pred_check_branch
      %118 = sbr.rel (0) target = $region41
    $region40: #{solver_forward.1} parent=1 // pred_region
      %120 = dma.done [#allocation3], 65536
    $region41: #{solver_forward.1} parent=1 // pred_fallthru
      _
    // Predicated region
    $region42: #{solver_forward.1} parent=1 // pred_check
      _
    $region43: #{solver_forward.1} parent=1 // pred_check_branch
      %122 = sbr.rel (0) target = $region45
    $region44: #{solver_forward.1} parent=1 // pred_region
      %124 = dma.done [#allocation5], 128
    $region45: #{solver_forward.1} parent=1 // pred_fallthru
      _
    // Predicated region
    $region46: #{solver_forward.1} parent=1 // pred_check
      _
    $region47: #{solver_forward.1} parent=1 // pred_check_branch
      %126 = sbr.rel (0) target = $region49
    $region48: #{solver_forward.1} parent=1 // pred_region
      %128 = dma.done [#allocation5], 16384
    $region49: #{solver_forward.1} parent=1 // pred_fallthru
      _
    // Predicated region
    $region50: #{solver_forward.1} parent=1 // pred_check
      _
    $region51: #{solver_forward.1} parent=1 // pred_check_branch
      %130 = sbr.rel (0) target = $region53
    $region52: #{solver_forward.1} parent=1 // pred_region
      %132 = dma.done [#allocation8], 32
    $region53: #{solver_forward.1} parent=1 // pred_fallthru
      _
    // Predicated region
    $region54: #{solver_forward.1} parent=1 // pred_check
      _
    $region55: #{solver_forward.1} parent=1 // pred_check_branch
      %134 = sbr.rel (0) target = $region57
    $region56: #{solver_forward.1} parent=1 // pred_region
      %136 = dma.done [#allocation8], 4096
    $region57: #{solver_forward.1} parent=1 // pred_fallthru
      _
    // Predicated region
    $region58: #{solver_forward.1} parent=1 // pred_check
      _
    $region59: #{solver_forward.1} parent=1 // pred_check_branch
      %138 = sbr.rel (0) target = $region61
    $region60: #{solver_forward.1} parent=1 // pred_region
      %140 = dma.done [#allocation11], 32
    $region61: #{solver_forward.1} parent=1 // pred_fallthru
      _
    // Predicated region
    $region62: #{solver_forward.1} parent=1 // pred_check
      _
    $region63: #{solver_forward.1} parent=1 // pred_check_branch
      %142 = sbr.rel (0) target = $region65
    $region64: #{solver_forward.1} parent=1 // pred_region
      %144 = dma.done [#allocation11], 2048
    $region65: #{solver_forward.1} parent=1 // pred_fallthru
      _
    // Predicated region
    $region66: #{solver_forward.1} parent=1 // pred_check
      _
    $region67: #{solver_forward.1} parent=1 // pred_check_branch
      %146 = sbr.rel (0) target = $region69
    $region68: #{solver_forward.1} parent=1 // pred_region
      %148 = dma.done [#allocation14], 16
    $region69: #{solver_forward.1} parent=1 // pred_fallthru
      _
    %v149 = vld [vmem:[%s0] sm:$0xff]
    %v150 = vld [vmem:[%s0 + $0x8] sm:$0xff]
    %v151 = vld [vmem:[%s0 + $0x10] sm:$0xff]
    %v152 = vld [vmem:[%s0 + $0x18] sm:$0xff]
    %v153 = vld [vmem:[%s0 + $0x20] sm:$0xff]
    %v154 = vld [vmem:[%s0 + $0x28] sm:$0xff]
    %v155 = vld [vmem:[%s0 + $0x30] sm:$0xff]
    %v156 = vld [vmem:[%s0 + $0x38] sm:$0xff]
    %v157 = vunpack.c.l.bf16 %v149
    %v158 = vunpack.c.h.bf16 %v149
    %v159 = vunpack.c.l.bf16 %v150
    %v160 = vunpack.c.h.bf16 %v150
    %v161 = vunpack.c.l.bf16 %v151
    %v162 = vunpack.c.h.bf16 %v151
    %v163 = vunpack.c.l.bf16 %v152
    %v164 = vunpack.c.h.bf16 %v152
    %v165 = vunpack.c.l.bf16 %v153
    %v166 = vunpack.c.h.bf16 %v153
    %v167 = vunpack.c.l.bf16 %v154
    %v168 = vunpack.c.h.bf16 %v154
    %v169 = vunpack.c.l.bf16 %v155
    %v170 = vunpack.c.h.bf16 %v155
    %v171 = vunpack.c.l.bf16 %v156
    %v172 = vunpack.c.h.bf16 %v156
    %v173 = vmax.f32 %v157, 0.0
    %v174 = vmax.f32 %v158, 0.0
    %v175 = vmax.f32 %v159, 0.0
    %v176 = vmax.f32 %v160, 0.0
    %v177 = vmax.f32 %v161, 0.0
    %v178 = vmax.f32 %v162, 0.0
    %v179 = vmax.f32 %v163, 0.0
    %v180 = vmax.f32 %v164, 0.0
    %v181 = vmax.f32 %v165, 0.0
    %v182 = vmax.f32 %v166, 0.0
    %v183 = vmax.f32 %v167, 0.0
    %v184 = vmax.f32 %v168, 0.0
    %v185 = vmax.f32 %v169, 0.0
    %v186 = vmax.f32 %v170, 0.0
    %v187 = vmax.f32 %v171, 0.0
    %v188 = vmax.f32 %v172, 0.0
    %v189 = vpack.c.bf16 %v181, %v173
    %v190 = vpack.c.bf16 %v182, %v174
    %v191 = vpack.c.bf16 %v183, %v175
    %v192 = vpack.c.bf16 %v184, %v176
    %v193 = vpack.c.bf16 %v185, %v177
    %v194 = vpack.c.bf16 %v186, %v178
    %v195 = vpack.c.bf16 %v187, %v179
    %v196 = vpack.c.bf16 %v188, %v180
    %v197 = vld [vmem:[#allocation2] sm:$0xff]
    %v198 = vld [vmem:[#allocation2 + $0x8] sm:$0xff]
    %v199 = vld [vmem:[#allocation2 + $0x10] sm:$0xff]
    %v200 = vld [vmem:[#allocation2 + $0x18] sm:$0xff]
    %v201 = vld [vmem:[#allocation2 + $0x20] sm:$0xff]
    %v202 = vld [vmem:[#allocation2 + $0x28] sm:$0xff]
    %v203 = vld [vmem:[#allocation2 + $0x30] sm:$0xff]
    %v204 = vld [vmem:[#allocation2 + $0x38] sm:$0xff]
    %v205 = vld [vmem:[#allocation2 + $0x40] sm:$0xff]
    %v206 = vld [vmem:[#allocation2 + $0x48] sm:$0xff]
    %v207 = vld [vmem:[#allocation2 + $0x50] sm:$0xff]
    %v208 = vld [vmem:[#allocation2 + $0x58] sm:$0xff]
    %v209 = vld [vmem:[#allocation2 + $0x60] sm:$0xff]
    %v210 = vld [vmem:[#allocation2 + $0x68] sm:$0xff]
    %v211 = vld [vmem:[#allocation2 + $0x70] sm:$0xff]
    %v212 = vld [vmem:[#allocation2 + $0x78] sm:$0xff]
    %v213 = vld [vmem:[#allocation2 + $0x80] sm:$0xff]
    %v214 = vld [vmem:[#allocation2 + $0x88] sm:$0xff]
    %v215 = vld [vmem:[#allocation2 + $0x90] sm:$0xff]
    %v216 = vld [vmem:[#allocation2 + $0x98] sm:$0xff]
    %v217 = vld [vmem:[#allocation2 + $0xa0] sm:$0xff]
    %v218 = vld [vmem:[#allocation2 + $0xa8] sm:$0xff]
    %v219 = vld [vmem:[#allocation2 + $0xb0] sm:$0xff]
    %v220 = vld [vmem:[#allocation2 + $0xb8] sm:$0xff]
    %v221 = vld [vmem:[#allocation2 + $0xc0] sm:$0xff]
    %v222 = vld [vmem:[#allocation2 + $0xc8] sm:$0xff]
    %v223 = vld [vmem:[#allocation2 + $0xd0] sm:$0xff]
    %v224 = vld [vmem:[#allocation2 + $0xd8] sm:$0xff]
    %v225 = vld [vmem:[#allocation2 + $0xe0] sm:$0xff]
    %v226 = vld [vmem:[#allocation2 + $0xe8] sm:$0xff]
    %v227 = vld [vmem:[#allocation2 + $0xf0] sm:$0xff]
    %v228 = vld [vmem:[#allocation2 + $0xf8] sm:$0xff]
    %v229 = vld [vmem:[#allocation2 + $0x100] sm:$0xff]
    %v230 = vld [vmem:[#allocation2 + $0x108] sm:$0xff]
    %v231 = vld [vmem:[#allocation2 + $0x110] sm:$0xff]
    %v232 = vld [vmem:[#allocation2 + $0x118] sm:$0xff]
    %v233 = vld [vmem:[#allocation2 + $0x120] sm:$0xff]
    %v234 = vld [vmem:[#allocation2 + $0x128] sm:$0xff]
    %v235 = vld [vmem:[#allocation2 + $0x130] sm:$0xff]
    %v236 = vld [vmem:[#allocation2 + $0x138] sm:$0xff]
    %v237 = vld [vmem:[#allocation2 + $0x140] sm:$0xff]
    %v238 = vld [vmem:[#allocation2 + $0x148] sm:$0xff]
    %v239 = vld [vmem:[#allocation2 + $0x150] sm:$0xff]
    %v240 = vld [vmem:[#allocation2 + $0x158] sm:$0xff]
    %v241 = vld [vmem:[#allocation2 + $0x160] sm:$0xff]
    %v242 = vld [vmem:[#allocation2 + $0x168] sm:$0xff]
    %v243 = vld [vmem:[#allocation2 + $0x170] sm:$0xff]
    %v244 = vld [vmem:[#allocation2 + $0x178] sm:$0xff]
    %v245 = vld [vmem:[#allocation2 + $0x180] sm:$0xff]
    %v246 = vld [vmem:[#allocation2 + $0x188] sm:$0xff]
    %v247 = vld [vmem:[#allocation2 + $0x190] sm:$0xff]
    %v248 = vld [vmem:[#allocation2 + $0x198] sm:$0xff]
    %v249 = vld [vmem:[#allocation2 + $0x1a0] sm:$0xff]
    %v250 = vld [vmem:[#allocation2 + $0x1a8] sm:$0xff]
    %v251 = vld [vmem:[#allocation2 + $0x1b0] sm:$0xff]
    %v252 = vld [vmem:[#allocation2 + $0x1b8] sm:$0xff]
    %v253 = vld [vmem:[#allocation2 + $0x1c0] sm:$0xff]
    %v254 = vld [vmem:[#allocation2 + $0x1c8] sm:$0xff]
    %v255 = vld [vmem:[#allocation2 + $0x1d0] sm:$0xff]
    %v256 = vld [vmem:[#allocation2 + $0x1d8] sm:$0xff]
    %v257 = vld [vmem:[#allocation2 + $0x1e0] sm:$0xff]
    %v258 = vld [vmem:[#allocation2 + $0x1e8] sm:$0xff]
    %v259 = vld [vmem:[#allocation2 + $0x1f0] sm:$0xff]
    %v260 = vld [vmem:[#allocation2 + $0x1f8] sm:$0xff]
    %v261 = vld [vmem:[#allocation2 + $0x200] sm:$0xff]
    %v262 = vld [vmem:[#allocation2 + $0x208] sm:$0xff]
    %v263 = vld [vmem:[#allocation2 + $0x210] sm:$0xff]
    %v264 = vld [vmem:[#allocation2 + $0x218] sm:$0xff]
    %v265 = vld [vmem:[#allocation2 + $0x220] sm:$0xff]
    %v266 = vld [vmem:[#allocation2 + $0x228] sm:$0xff]
    %v267 = vld [vmem:[#allocation2 + $0x230] sm:$0xff]
    %v268 = vld [vmem:[#allocation2 + $0x238] sm:$0xff]
    %v269 = vld [vmem:[#allocation2 + $0x240] sm:$0xff]
    %v270 = vld [vmem:[#allocation2 + $0x248] sm:$0xff]
    %v271 = vld [vmem:[#allocation2 + $0x250] sm:$0xff]
    %v272 = vld [vmem:[#allocation2 + $0x258] sm:$0xff]
    %v273 = vld [vmem:[#allocation2 + $0x260] sm:$0xff]
    %v274 = vld [vmem:[#allocation2 + $0x268] sm:$0xff]
    %v275 = vld [vmem:[#allocation2 + $0x270] sm:$0xff]
    %v276 = vld [vmem:[#allocation2 + $0x278] sm:$0xff]
    %v277 = vld [vmem:[#allocation2 + $0x280] sm:$0xff]
    %v278 = vld [vmem:[#allocation2 + $0x288] sm:$0xff]
    %v279 = vld [vmem:[#allocation2 + $0x290] sm:$0xff]
    %v280 = vld [vmem:[#allocation2 + $0x298] sm:$0xff]
    %v281 = vld [vmem:[#allocation2 + $0x2a0] sm:$0xff]
    %v282 = vld [vmem:[#allocation2 + $0x2a8] sm:$0xff]
    %v283 = vld [vmem:[#allocation2 + $0x2b0] sm:$0xff]
    %v284 = vld [vmem:[#allocation2 + $0x2b8] sm:$0xff]
    %v285 = vld [vmem:[#allocation2 + $0x2c0] sm:$0xff]
    %v286 = vld [vmem:[#allocation2 + $0x2c8] sm:$0xff]
    %v287 = vld [vmem:[#allocation2 + $0x2d0] sm:$0xff]
    %v288 = vld [vmem:[#allocation2 + $0x2d8] sm:$0xff]
    %v289 = vld [vmem:[#allocation2 + $0x2e0] sm:$0xff]
    %v290 = vld [vmem:[#allocation2 + $0x2e8] sm:$0xff]
    %v291 = vld [vmem:[#allocation2 + $0x2f0] sm:$0xff]
    %v292 = vld [vmem:[#allocation2 + $0x2f8] sm:$0xff]
    %v293 = vld [vmem:[#allocation2 + $0x300] sm:$0xff]
    %v294 = vld [vmem:[#allocation2 + $0x308] sm:$0xff]
    %v295 = vld [vmem:[#allocation2 + $0x310] sm:$0xff]
    %v296 = vld [vmem:[#allocation2 + $0x318] sm:$0xff]
    %v297 = vld [vmem:[#allocation2 + $0x320] sm:$0xff]
    %v298 = vld [vmem:[#allocation2 + $0x328] sm:$0xff]
    %v299 = vld [vmem:[#allocation2 + $0x330] sm:$0xff]
    %v300 = vld [vmem:[#allocation2 + $0x338] sm:$0xff]
    %v301 = vld [vmem:[#allocation2 + $0x340] sm:$0xff]
    %v302 = vld [vmem:[#allocation2 + $0x348] sm:$0xff]
    %v303 = vld [vmem:[#allocation2 + $0x350] sm:$0xff]
    %v304 = vld [vmem:[#allocation2 + $0x358] sm:$0xff]
    %v305 = vld [vmem:[#allocation2 + $0x360] sm:$0xff]
    %v306 = vld [vmem:[#allocation2 + $0x368] sm:$0xff]
    %v307 = vld [vmem:[#allocation2 + $0x370] sm:$0xff]
    %v308 = vld [vmem:[#allocation2 + $0x378] sm:$0xff]
    %v309 = vld [vmem:[#allocation2 + $0x380] sm:$0xff]
    %v310 = vld [vmem:[#allocation2 + $0x388] sm:$0xff]
    %v311 = vld [vmem:[#allocation2 + $0x390] sm:$0xff]
    %v312 = vld [vmem:[#allocation2 + $0x398] sm:$0xff]
    %v313 = vld [vmem:[#allocation2 + $0x3a0] sm:$0xff]
    %v314 = vld [vmem:[#allocation2 + $0x3a8] sm:$0xff]
    %v315 = vld [vmem:[#allocation2 + $0x3b0] sm:$0xff]
    %v316 = vld [vmem:[#allocation2 + $0x3b8] sm:$0xff]
    %v317 = vld [vmem:[#allocation2 + $0x3c0] sm:$0xff]
    %v318 = vld [vmem:[#allocation2 + $0x3c8] sm:$0xff]
    %v319 = vld [vmem:[#allocation2 + $0x3d0] sm:$0xff]
    %v320 = vld [vmem:[#allocation2 + $0x3d8] sm:$0xff]
    %v321 = vld [vmem:[#allocation2 + $0x3e0] sm:$0xff]
    %v322 = vld [vmem:[#allocation2 + $0x3e8] sm:$0xff]
    %v323 = vld [vmem:[#allocation2 + $0x3f0] sm:$0xff]
    %v324 = vld [vmem:[#allocation2 + $0x3f8] sm:$0xff]
    %v325 = vld [vmem:[#allocation2 + $0x400] sm:$0xff]
    %v326 = vld [vmem:[#allocation2 + $0x408] sm:$0xff]
    %v327 = vld [vmem:[#allocation2 + $0x410] sm:$0xff]
    %v328 = vld [vmem:[#allocation2 + $0x418] sm:$0xff]
    %v329 = vld [vmem:[#allocation2 + $0x420] sm:$0xff]
    %v330 = vld [vmem:[#allocation2 + $0x428] sm:$0xff]
    %v331 = vld [vmem:[#allocation2 + $0x430] sm:$0xff]
    %v332 = vld [vmem:[#allocation2 + $0x438] sm:$0xff]
    %v333 = vld [vmem:[#allocation2 + $0x440] sm:$0xff]
    %v334 = vld [vmem:[#allocation2 + $0x448] sm:$0xff]
    %v335 = vld [vmem:[#allocation2 + $0x450] sm:$0xff]
    %v336 = vld [vmem:[#allocation2 + $0x458] sm:$0xff]
    %v337 = vld [vmem:[#allocation2 + $0x460] sm:$0xff]
    %v338 = vld [vmem:[#allocation2 + $0x468] sm:$0xff]
    %v339 = vld [vmem:[#allocation2 + $0x470] sm:$0xff]
    %v340 = vld [vmem:[#allocation2 + $0x478] sm:$0xff]
    %v341 = vld [vmem:[#allocation2 + $0x480] sm:$0xff]
    %v342 = vld [vmem:[#allocation2 + $0x488] sm:$0xff]
    %v343 = vld [vmem:[#allocation2 + $0x490] sm:$0xff]
    %v344 = vld [vmem:[#allocation2 + $0x498] sm:$0xff]
    %v345 = vld [vmem:[#allocation2 + $0x4a0] sm:$0xff]
    %v346 = vld [vmem:[#allocation2 + $0x4a8] sm:$0xff]
    %v347 = vld [vmem:[#allocation2 + $0x4b0] sm:$0xff]
    %v348 = vld [vmem:[#allocation2 + $0x4b8] sm:$0xff]
    %v349 = vld [vmem:[#allocation2 + $0x4c0] sm:$0xff]
    %v350 = vld [vmem:[#allocation2 + $0x4c8] sm:$0xff]
    %v351 = vld [vmem:[#allocation2 + $0x4d0] sm:$0xff]
    %v352 = vld [vmem:[#allocation2 + $0x4d8] sm:$0xff]
    %v353 = vld [vmem:[#allocation2 + $0x4e0] sm:$0xff]
    %v354 = vld [vmem:[#allocation2 + $0x4e8] sm:$0xff]
    %v355 = vld [vmem:[#allocation2 + $0x4f0] sm:$0xff]
    %v356 = vld [vmem:[#allocation2 + $0x4f8] sm:$0xff]
    %v357 = vld [vmem:[#allocation2 + $0x500] sm:$0xff]
    %v358 = vld [vmem:[#allocation2 + $0x508] sm:$0xff]
    %v359 = vld [vmem:[#allocation2 + $0x510] sm:$0xff]
    %v360 = vld [vmem:[#allocation2 + $0x518] sm:$0xff]
    %v361 = vld [vmem:[#allocation2 + $0x520] sm:$0xff]
    %v362 = vld [vmem:[#allocation2 + $0x528] sm:$0xff]
    %v363 = vld [vmem:[#allocation2 + $0x530] sm:$0xff]
    %v364 = vld [vmem:[#allocation2 + $0x538] sm:$0xff]
    %v365 = vld [vmem:[#allocation2 + $0x540] sm:$0xff]
    %v366 = vld [vmem:[#allocation2 + $0x548] sm:$0xff]
    %v367 = vld [vmem:[#allocation2 + $0x550] sm:$0xff]
    %v368 = vld [vmem:[#allocation2 + $0x558] sm:$0xff]
    %v369 = vld [vmem:[#allocation2 + $0x560] sm:$0xff]
    %v370 = vld [vmem:[#allocation2 + $0x568] sm:$0xff]
    %v371 = vld [vmem:[#allocation2 + $0x570] sm:$0xff]
    %v372 = vld [vmem:[#allocation2 + $0x578] sm:$0xff]
    %v373 = vld [vmem:[#allocation2 + $0x580] sm:$0xff]
    %v374 = vld [vmem:[#allocation2 + $0x588] sm:$0xff]
    %v375 = vld [vmem:[#allocation2 + $0x590] sm:$0xff]
    %v376 = vld [vmem:[#allocation2 + $0x598] sm:$0xff]
    %v377 = vld [vmem:[#allocation2 + $0x5a0] sm:$0xff]
    %v378 = vld [vmem:[#allocation2 + $0x5a8] sm:$0xff]
    %v379 = vld [vmem:[#allocation2 + $0x5b0] sm:$0xff]
    %v380 = vld [vmem:[#allocation2 + $0x5b8] sm:$0xff]
    %v381 = vld [vmem:[#allocation2 + $0x5c0] sm:$0xff]
    %v382 = vld [vmem:[#allocation2 + $0x5c8] sm:$0xff]
    %v383 = vld [vmem:[#allocation2 + $0x5d0] sm:$0xff]
    %v384 = vld [vmem:[#allocation2 + $0x5d8] sm:$0xff]
    %v385 = vld [vmem:[#allocation2 + $0x5e0] sm:$0xff]
    %v386 = vld [vmem:[#allocation2 + $0x5e8] sm:$0xff]
    %v387 = vld [vmem:[#allocation2 + $0x5f0] sm:$0xff]
    %v388 = vld [vmem:[#allocation2 + $0x5f8] sm:$0xff]
    %v389 = vld [vmem:[#allocation2 + $0x600] sm:$0xff]
    %v390 = vld [vmem:[#allocation2 + $0x608] sm:$0xff]
    %v391 = vld [vmem:[#allocation2 + $0x610] sm:$0xff]
    %v392 = vld [vmem:[#allocation2 + $0x618] sm:$0xff]
    %v393 = vld [vmem:[#allocation2 + $0x620] sm:$0xff]
    %v394 = vld [vmem:[#allocation2 + $0x628] sm:$0xff]
    %v395 = vld [vmem:[#allocation2 + $0x630] sm:$0xff]
    %v396 = vld [vmem:[#allocation2 + $0x638] sm:$0xff]
    %v397 = vld [vmem:[#allocation2 + $0x640] sm:$0xff]
    %v398 = vld [vmem:[#allocation2 + $0x648] sm:$0xff]
    %v399 = vld [vmem:[#allocation2 + $0x650] sm:$0xff]
    %v400 = vld [vmem:[#allocation2 + $0x658] sm:$0xff]
    %v401 = vld [vmem:[#allocation2 + $0x660] sm:$0xff]
    %v402 = vld [vmem:[#allocation2 + $0x668] sm:$0xff]
    %v403 = vld [vmem:[#allocation2 + $0x670] sm:$0xff]
    %v404 = vld [vmem:[#allocation2 + $0x678] sm:$0xff]
    %v405 = vld [vmem:[#allocation2 + $0x680] sm:$0xff]
    %v406 = vld [vmem:[#allocation2 + $0x688] sm:$0xff]
    %v407 = vld [vmem:[#allocation2 + $0x690] sm:$0xff]
    %v408 = vld [vmem:[#allocation2 + $0x698] sm:$0xff]
    %v409 = vld [vmem:[#allocation2 + $0x6a0] sm:$0xff]
    %v410 = vld [vmem:[#allocation2 + $0x6a8] sm:$0xff]
    %v411 = vld [vmem:[#allocation2 + $0x6b0] sm:$0xff]
    %v412 = vld [vmem:[#allocation2 + $0x6b8] sm:$0xff]
    %v413 = vld [vmem:[#allocation2 + $0x6c0] sm:$0xff]
    %v414 = vld [vmem:[#allocation2 + $0x6c8] sm:$0xff]
    %v415 = vld [vmem:[#allocation2 + $0x6d0] sm:$0xff]
    %v416 = vld [vmem:[#allocation2 + $0x6d8] sm:$0xff]
    %v417 = vld [vmem:[#allocation2 + $0x6e0] sm:$0xff]
    %v418 = vld [vmem:[#allocation2 + $0x6e8] sm:$0xff]
    %v419 = vld [vmem:[#allocation2 + $0x6f0] sm:$0xff]
    %v420 = vld [vmem:[#allocation2 + $0x6f8] sm:$0xff]
    %v421 = vld [vmem:[#allocation2 + $0x700] sm:$0xff]
    %v422 = vld [vmem:[#allocation2 + $0x708] sm:$0xff]
    %v423 = vld [vmem:[#allocation2 + $0x710] sm:$0xff]
    %v424 = vld [vmem:[#allocation2 + $0x718] sm:$0xff]
    %v425 = vld [vmem:[#allocation2 + $0x720] sm:$0xff]
    %v426 = vld [vmem:[#allocation2 + $0x728] sm:$0xff]
    %v427 = vld [vmem:[#allocation2 + $0x730] sm:$0xff]
    %v428 = vld [vmem:[#allocation2 + $0x738] sm:$0xff]
    %v429 = vld [vmem:[#allocation2 + $0x740] sm:$0xff]
    %v430 = vld [vmem:[#allocation2 + $0x748] sm:$0xff]
    %v431 = vld [vmem:[#allocation2 + $0x750] sm:$0xff]
    %v432 = vld [vmem:[#allocation2 + $0x758] sm:$0xff]
    %v433 = vld [vmem:[#allocation2 + $0x760] sm:$0xff]
    %v434 = vld [vmem:[#allocation2 + $0x768] sm:$0xff]
    %v435 = vld [vmem:[#allocation2 + $0x770] sm:$0xff]
    %v436 = vld [vmem:[#allocation2 + $0x778] sm:$0xff]
    %v437 = vld [vmem:[#allocation2 + $0x780] sm:$0xff]
    %v438 = vld [vmem:[#allocation2 + $0x788] sm:$0xff]
    %v439 = vld [vmem:[#allocation2 + $0x790] sm:$0xff]
    %v440 = vld [vmem:[#allocation2 + $0x798] sm:$0xff]
    %v441 = vld [vmem:[#allocation2 + $0x7a0] sm:$0xff]
    %v442 = vld [vmem:[#allocation2 + $0x7a8] sm:$0xff]
    %v443 = vld [vmem:[#allocation2 + $0x7b0] sm:$0xff]
    %v444 = vld [vmem:[#allocation2 + $0x7b8] sm:$0xff]
    %v445 = vld [vmem:[#allocation2 + $0x7c0] sm:$0xff]
    %v446 = vld [vmem:[#allocation2 + $0x7c8] sm:$0xff]
    %v447 = vld [vmem:[#allocation2 + $0x7d0] sm:$0xff]
    %v448 = vld [vmem:[#allocation2 + $0x7d8] sm:$0xff]
    %v449 = vld [vmem:[#allocation2 + $0x7e0] sm:$0xff]
    %v450 = vld [vmem:[#allocation2 + $0x7e8] sm:$0xff]
    %v451 = vld [vmem:[#allocation2 + $0x7f0] sm:$0xff]
    %v452 = vld [vmem:[#allocation2 + $0x7f8] sm:$0xff]
    %v453 = vld [vmem:[#allocation2 + $0x800] sm:$0xff]
    %v454 = vld [vmem:[#allocation2 + $0x808] sm:$0xff]
    %v455 = vld [vmem:[#allocation2 + $0x810] sm:$0xff]
    %v456 = vld [vmem:[#allocation2 + $0x818] sm:$0xff]
    %v457 = vld [vmem:[#allocation2 + $0x820] sm:$0xff]
    %v458 = vld [vmem:[#allocation2 + $0x828] sm:$0xff]
    %v459 = vld [vmem:[#allocation2 + $0x830] sm:$0xff]
    %v460 = vld [vmem:[#allocation2 + $0x838] sm:$0xff]
    %v461 = vld [vmem:[#allocation2 + $0x840] sm:$0xff]
    %v462 = vld [vmem:[#allocation2 + $0x848] sm:$0xff]
    %v463 = vld [vmem:[#allocation2 + $0x850] sm:$0xff]
    %v464 = vld [vmem:[#allocation2 + $0x858] sm:$0xff]
    %v465 = vld [vmem:[#allocation2 + $0x860] sm:$0xff]
    %v466 = vld [vmem:[#allocation2 + $0x868] sm:$0xff]
    %v467 = vld [vmem:[#allocation2 + $0x870] sm:$0xff]
    %v468 = vld [vmem:[#allocation2 + $0x878] sm:$0xff]
    %v469 = vld [vmem:[#allocation2 + $0x880] sm:$0xff]
    %v470 = vld [vmem:[#allocation2 + $0x888] sm:$0xff]
    %v471 = vld [vmem:[#allocation2 + $0x890] sm:$0xff]
    %v472 = vld [vmem:[#allocation2 + $0x898] sm:$0xff]
    %v473 = vld [vmem:[#allocation2 + $0x8a0] sm:$0xff]
    %v474 = vld [vmem:[#allocation2 + $0x8a8] sm:$0xff]
    %v475 = vld [vmem:[#allocation2 + $0x8b0] sm:$0xff]
    %v476 = vld [vmem:[#allocation2 + $0x8b8] sm:$0xff]
    %v477 = vld [vmem:[#allocation2 + $0x8c0] sm:$0xff]
    %v478 = vld [vmem:[#allocation2 + $0x8c8] sm:$0xff]
    %v479 = vld [vmem:[#allocation2 + $0x8d0] sm:$0xff]
    %v480 = vld [vmem:[#allocation2 + $0x8d8] sm:$0xff]
    %v481 = vld [vmem:[#allocation2 + $0x8e0] sm:$0xff]
    %v482 = vld [vmem:[#allocation2 + $0x8e8] sm:$0xff]
    %v483 = vld [vmem:[#allocation2 + $0x8f0] sm:$0xff]
    %v484 = vld [vmem:[#allocation2 + $0x8f8] sm:$0xff]
    %v485 = vld [vmem:[#allocation2 + $0x900] sm:$0xff]
    %v486 = vld [vmem:[#allocation2 + $0x908] sm:$0xff]
    %v487 = vld [vmem:[#allocation2 + $0x910] sm:$0xff]
    %v488 = vld [vmem:[#allocation2 + $0x918] sm:$0xff]
    %v489 = vld [vmem:[#allocation2 + $0x920] sm:$0xff]
    %v490 = vld [vmem:[#allocation2 + $0x928] sm:$0xff]
    %v491 = vld [vmem:[#allocation2 + $0x930] sm:$0xff]
    %v492 = vld [vmem:[#allocation2 + $0x938] sm:$0xff]
    %v493 = vld [vmem:[#allocation2 + $0x940] sm:$0xff]
    %v494 = vld [vmem:[#allocation2 + $0x948] sm:$0xff]
    %v495 = vld [vmem:[#allocation2 + $0x950] sm:$0xff]
    %v496 = vld [vmem:[#allocation2 + $0x958] sm:$0xff]
    %v497 = vld [vmem:[#allocation2 + $0x960] sm:$0xff]
    %v498 = vld [vmem:[#allocation2 + $0x968] sm:$0xff]
    %v499 = vld [vmem:[#allocation2 + $0x970] sm:$0xff]
    %v500 = vld [vmem:[#allocation2 + $0x978] sm:$0xff]
    %v501 = vld [vmem:[#allocation2 + $0x980] sm:$0xff]
    %v502 = vld [vmem:[#allocation2 + $0x988] sm:$0xff]
    %v503 = vld [vmem:[#allocation2 + $0x990] sm:$0xff]
    %v504 = vld [vmem:[#allocation2 + $0x998] sm:$0xff]
    %v505 = vld [vmem:[#allocation2 + $0x9a0] sm:$0xff]
    %v506 = vld [vmem:[#allocation2 + $0x9a8] sm:$0xff]
    %v507 = vld [vmem:[#allocation2 + $0x9b0] sm:$0xff]
    %v508 = vld [vmem:[#allocation2 + $0x9b8] sm:$0xff]
    %v509 = vld [vmem:[#allocation2 + $0x9c0] sm:$0xff]
    %v510 = vld [vmem:[#allocation2 + $0x9c8] sm:$0xff]
    %v511 = vld [vmem:[#allocation2 + $0x9d0] sm:$0xff]
    %v512 = vld [vmem:[#allocation2 + $0x9d8] sm:$0xff]
    %v513 = vld [vmem:[#allocation2 + $0x9e0] sm:$0xff]
    %v514 = vld [vmem:[#allocation2 + $0x9e8] sm:$0xff]
    %v515 = vld [vmem:[#allocation2 + $0x9f0] sm:$0xff]
    %v516 = vld [vmem:[#allocation2 + $0x9f8] sm:$0xff]
    %v517 = vld [vmem:[#allocation2 + $0xa00] sm:$0xff]
    %v518 = vld [vmem:[#allocation2 + $0xa08] sm:$0xff]
    %v519 = vld [vmem:[#allocation2 + $0xa10] sm:$0xff]
    %v520 = vld [vmem:[#allocation2 + $0xa18] sm:$0xff]
    %v521 = vld [vmem:[#allocation2 + $0xa20] sm:$0xff]
    %v522 = vld [vmem:[#allocation2 + $0xa28] sm:$0xff]
    %v523 = vld [vmem:[#allocation2 + $0xa30] sm:$0xff]
    %v524 = vld [vmem:[#allocation2 + $0xa38] sm:$0xff]
    %v525 = vld [vmem:[#allocation2 + $0xa40] sm:$0xff]
    %v526 = vld [vmem:[#allocation2 + $0xa48] sm:$0xff]
    %v527 = vld [vmem:[#allocation2 + $0xa50] sm:$0xff]
    %v528 = vld [vmem:[#allocation2 + $0xa58] sm:$0xff]
    %v529 = vld [vmem:[#allocation2 + $0xa60] sm:$0xff]
    %v530 = vld [vmem:[#allocation2 + $0xa68] sm:$0xff]
    %v531 = vld [vmem:[#allocation2 + $0xa70] sm:$0xff]
    %v532 = vld [vmem:[#allocation2 + $0xa78] sm:$0xff]
    %v533 = vld [vmem:[#allocation2 + $0xa80] sm:$0xff]
    %v534 = vld [vmem:[#allocation2 + $0xa88] sm:$0xff]
    %v535 = vld [vmem:[#allocation2 + $0xa90] sm:$0xff]
    %v536 = vld [vmem:[#allocation2 + $0xa98] sm:$0xff]
    %v537 = vld [vmem:[#allocation2 + $0xaa0] sm:$0xff]
    %v538 = vld [vmem:[#allocation2 + $0xaa8] sm:$0xff]
    %v539 = vld [vmem:[#allocation2 + $0xab0] sm:$0xff]
    %v540 = vld [vmem:[#allocation2 + $0xab8] sm:$0xff]
    %v541 = vld [vmem:[#allocation2 + $0xac0] sm:$0xff]
    %v542 = vld [vmem:[#allocation2 + $0xac8] sm:$0xff]
    %v543 = vld [vmem:[#allocation2 + $0xad0] sm:$0xff]
    %v544 = vld [vmem:[#allocation2 + $0xad8] sm:$0xff]
    %v545 = vld [vmem:[#allocation2 + $0xae0] sm:$0xff]
    %v546 = vld [vmem:[#allocation2 + $0xae8] sm:$0xff]
    %v547 = vld [vmem:[#allocation2 + $0xaf0] sm:$0xff]
    %v548 = vld [vmem:[#allocation2 + $0xaf8] sm:$0xff]
    %v549 = vld [vmem:[#allocation2 + $0xb00] sm:$0xff]
    %v550 = vld [vmem:[#allocation2 + $0xb08] sm:$0xff]
    %v551 = vld [vmem:[#allocation2 + $0xb10] sm:$0xff]
    %v552 = vld [vmem:[#allocation2 + $0xb18] sm:$0xff]
    %v553 = vld [vmem:[#allocation2 + $0xb20] sm:$0xff]
    %v554 = vld [vmem:[#allocation2 + $0xb28] sm:$0xff]
    %v555 = vld [vmem:[#allocation2 + $0xb30] sm:$0xff]
    %v556 = vld [vmem:[#allocation2 + $0xb38] sm:$0xff]
    %v557 = vld [vmem:[#allocation2 + $0xb40] sm:$0xff]
    %v558 = vld [vmem:[#allocation2 + $0xb48] sm:$0xff]
    %v559 = vld [vmem:[#allocation2 + $0xb50] sm:$0xff]
    %v560 = vld [vmem:[#allocation2 + $0xb58] sm:$0xff]
    %v561 = vld [vmem:[#allocation2 + $0xb60] sm:$0xff]
    %v562 = vld [vmem:[#allocation2 + $0xb68] sm:$0xff]
    %v563 = vld [vmem:[#allocation2 + $0xb70] sm:$0xff]
    %v564 = vld [vmem:[#allocation2 + $0xb78] sm:$0xff]
    %v565 = vld [vmem:[#allocation2 + $0xb80] sm:$0xff]
    %v566 = vld [vmem:[#allocation2 + $0xb88] sm:$0xff]
    %v567 = vld [vmem:[#allocation2 + $0xb90] sm:$0xff]
    %v568 = vld [vmem:[#allocation2 + $0xb98] sm:$0xff]
    %v569 = vld [vmem:[#allocation2 + $0xba0] sm:$0xff]
    %v570 = vld [vmem:[#allocation2 + $0xba8] sm:$0xff]
    %v571 = vld [vmem:[#allocation2 + $0xbb0] sm:$0xff]
    %v572 = vld [vmem:[#allocation2 + $0xbb8] sm:$0xff]
    %v573 = vld [vmem:[#allocation2 + $0xbc0] sm:$0xff]
    %v574 = vld [vmem:[#allocation2 + $0xbc8] sm:$0xff]
    %v575 = vld [vmem:[#allocation2 + $0xbd0] sm:$0xff]
    %v576 = vld [vmem:[#allocation2 + $0xbd8] sm:$0xff]
    %v577 = vld [vmem:[#allocation2 + $0xbe0] sm:$0xff]
    %v578 = vld [vmem:[#allocation2 + $0xbe8] sm:$0xff]
    %v579 = vld [vmem:[#allocation2 + $0xbf0] sm:$0xff]
    %v580 = vld [vmem:[#allocation2 + $0xbf8] sm:$0xff]
    %v581 = vld [vmem:[#allocation2 + $0xc00] sm:$0xff]
    %v582 = vld [vmem:[#allocation2 + $0xc08] sm:$0xff]
    %v583 = vld [vmem:[#allocation2 + $0xc10] sm:$0xff]
    %v584 = vld [vmem:[#allocation2 + $0xc18] sm:$0xff]
    %v585 = vld [vmem:[#allocation2 + $0xc20] sm:$0xff]
    %v586 = vld [vmem:[#allocation2 + $0xc28] sm:$0xff]
    %v587 = vld [vmem:[#allocation2 + $0xc30] sm:$0xff]
    %v588 = vld [vmem:[#allocation2 + $0xc38] sm:$0xff]
    %v589 = vld [vmem:[#allocation2 + $0xc40] sm:$0xff]
    %v590 = vld [vmem:[#allocation2 + $0xc48] sm:$0xff]
    %v591 = vld [vmem:[#allocation2 + $0xc50] sm:$0xff]
    %v592 = vld [vmem:[#allocation2 + $0xc58] sm:$0xff]
    %v593 = vld [vmem:[#allocation2 + $0xc60] sm:$0xff]
    %v594 = vld [vmem:[#allocation2 + $0xc68] sm:$0xff]
    %v595 = vld [vmem:[#allocation2 + $0xc70] sm:$0xff]
    %v596 = vld [vmem:[#allocation2 + $0xc78] sm:$0xff]
    %v597 = vld [vmem:[#allocation2 + $0xc80] sm:$0xff]
    %v598 = vld [vmem:[#allocation2 + $0xc88] sm:$0xff]
    %v599 = vld [vmem:[#allocation2 + $0xc90] sm:$0xff]
    %v600 = vld [vmem:[#allocation2 + $0xc98] sm:$0xff]
    %v601 = vld [vmem:[#allocation2 + $0xca0] sm:$0xff]
    %v602 = vld [vmem:[#allocation2 + $0xca8] sm:$0xff]
    %v603 = vld [vmem:[#allocation2 + $0xcb0] sm:$0xff]
    %v604 = vld [vmem:[#allocation2 + $0xcb8] sm:$0xff]
    %v605 = vld [vmem:[#allocation2 + $0xcc0] sm:$0xff]
    %v606 = vld [vmem:[#allocation2 + $0xcc8] sm:$0xff]
    %v607 = vld [vmem:[#allocation2 + $0xcd0] sm:$0xff]
    %v608 = vld [vmem:[#allocation2 + $0xcd8] sm:$0xff]
    %v609 = vld [vmem:[#allocation2 + $0xce0] sm:$0xff]
    %v610 = vld [vmem:[#allocation2 + $0xce8] sm:$0xff]
    %v611 = vld [vmem:[#allocation2 + $0xcf0] sm:$0xff]
    %v612 = vld [vmem:[#allocation2 + $0xcf8] sm:$0xff]
    %v613 = vld [vmem:[#allocation2 + $0xd00] sm:$0xff]
    %v614 = vld [vmem:[#allocation2 + $0xd08] sm:$0xff]
    %v615 = vld [vmem:[#allocation2 + $0xd10] sm:$0xff]
    %v616 = vld [vmem:[#allocation2 + $0xd18] sm:$0xff]
    %v617 = vld [vmem:[#allocation2 + $0xd20] sm:$0xff]
    %v618 = vld [vmem:[#allocation2 + $0xd28] sm:$0xff]
    %v619 = vld [vmem:[#allocation2 + $0xd30] sm:$0xff]
    %v620 = vld [vmem:[#allocation2 + $0xd38] sm:$0xff]
    %v621 = vld [vmem:[#allocation2 + $0xd40] sm:$0xff]
    %v622 = vld [vmem:[#allocation2 + $0xd48] sm:$0xff]
    %v623 = vld [vmem:[#allocation2 + $0xd50] sm:$0xff]
    %v624 = vld [vmem:[#allocation2 + $0xd58] sm:$0xff]
    %v625 = vld [vmem:[#allocation2 + $0xd60] sm:$0xff]
    %v626 = vld [vmem:[#allocation2 + $0xd68] sm:$0xff]
    %v627 = vld [vmem:[#allocation2 + $0xd70] sm:$0xff]
    %v628 = vld [vmem:[#allocation2 + $0xd78] sm:$0xff]
    %v629 = vld [vmem:[#allocation2 + $0xd80] sm:$0xff]
    %v630 = vld [vmem:[#allocation2 + $0xd88] sm:$0xff]
    %v631 = vld [vmem:[#allocation2 + $0xd90] sm:$0xff]
    %v632 = vld [vmem:[#allocation2 + $0xd98] sm:$0xff]
    %v633 = vld [vmem:[#allocation2 + $0xda0] sm:$0xff]
    %v634 = vld [vmem:[#allocation2 + $0xda8] sm:$0xff]
    %v635 = vld [vmem:[#allocation2 + $0xdb0] sm:$0xff]
    %v636 = vld [vmem:[#allocation2 + $0xdb8] sm:$0xff]
    %v637 = vld [vmem:[#allocation2 + $0xdc0] sm:$0xff]
    %v638 = vld [vmem:[#allocation2 + $0xdc8] sm:$0xff]
    %v639 = vld [vmem:[#allocation2 + $0xdd0] sm:$0xff]
    %v640 = vld [vmem:[#allocation2 + $0xdd8] sm:$0xff]
    %v641 = vld [vmem:[#allocation2 + $0xde0] sm:$0xff]
    %v642 = vld [vmem:[#allocation2 + $0xde8] sm:$0xff]
    %v643 = vld [vmem:[#allocation2 + $0xdf0] sm:$0xff]
    %v644 = vld [vmem:[#allocation2 + $0xdf8] sm:$0xff]
    %v645 = vld [vmem:[#allocation2 + $0xe00] sm:$0xff]
    %v646 = vld [vmem:[#allocation2 + $0xe08] sm:$0xff]
    %v647 = vld [vmem:[#allocation2 + $0xe10] sm:$0xff]
    %v648 = vld [vmem:[#allocation2 + $0xe18] sm:$0xff]
    %v649 = vld [vmem:[#allocation2 + $0xe20] sm:$0xff]
    %v650 = vld [vmem:[#allocation2 + $0xe28] sm:$0xff]
    %v651 = vld [vmem:[#allocation2 + $0xe30] sm:$0xff]
    %v652 = vld [vmem:[#allocation2 + $0xe38] sm:$0xff]
    %v653 = vld [vmem:[#allocation2 + $0xe40] sm:$0xff]
    %v654 = vld [vmem:[#allocation2 + $0xe48] sm:$0xff]
    %v655 = vld [vmem:[#allocation2 + $0xe50] sm:$0xff]
    %v656 = vld [vmem:[#allocation2 + $0xe58] sm:$0xff]
    %v657 = vld [vmem:[#allocation2 + $0xe60] sm:$0xff]
    %v658 = vld [vmem:[#allocation2 + $0xe68] sm:$0xff]
    %v659 = vld [vmem:[#allocation2 + $0xe70] sm:$0xff]
    %v660 = vld [vmem:[#allocation2 + $0xe78] sm:$0xff]
    %v661 = vld [vmem:[#allocation2 + $0xe80] sm:$0xff]
    %v662 = vld [vmem:[#allocation2 + $0xe88] sm:$0xff]
    %v663 = vld [vmem:[#allocation2 + $0xe90] sm:$0xff]
    %v664 = vld [vmem:[#allocation2 + $0xe98] sm:$0xff]
    %v665 = vld [vmem:[#allocation2 + $0xea0] sm:$0xff]
    %v666 = vld [vmem:[#allocation2 + $0xea8] sm:$0xff]
    %v667 = vld [vmem:[#allocation2 + $0xeb0] sm:$0xff]
    %v668 = vld [vmem:[#allocation2 + $0xeb8] sm:$0xff]
    %v669 = vld [vmem:[#allocation2 + $0xec0] sm:$0xff]
    %v670 = vld [vmem:[#allocation2 + $0xec8] sm:$0xff]
    %v671 = vld [vmem:[#allocation2 + $0xed0] sm:$0xff]
    %v672 = vld [vmem:[#allocation2 + $0xed8] sm:$0xff]
    %v673 = vld [vmem:[#allocation2 + $0xee0] sm:$0xff]
    %v674 = vld [vmem:[#allocation2 + $0xee8] sm:$0xff]
    %v675 = vld [vmem:[#allocation2 + $0xef0] sm:$0xff]
    %v676 = vld [vmem:[#allocation2 + $0xef8] sm:$0xff]
    %v677 = vld [vmem:[#allocation2 + $0xf00] sm:$0xff]
    %v678 = vld [vmem:[#allocation2 + $0xf08] sm:$0xff]
    %v679 = vld [vmem:[#allocation2 + $0xf10] sm:$0xff]
    %v680 = vld [vmem:[#allocation2 + $0xf18] sm:$0xff]
    %v681 = vld [vmem:[#allocation2 + $0xf20] sm:$0xff]
    %v682 = vld [vmem:[#allocation2 + $0xf28] sm:$0xff]
    %v683 = vld [vmem:[#allocation2 + $0xf30] sm:$0xff]
    %v684 = vld [vmem:[#allocation2 + $0xf38] sm:$0xff]
    %v685 = vld [vmem:[#allocation2 + $0xf40] sm:$0xff]
    %v686 = vld [vmem:[#allocation2 + $0xf48] sm:$0xff]
    %v687 = vld [vmem:[#allocation2 + $0xf50] sm:$0xff]
    %v688 = vld [vmem:[#allocation2 + $0xf58] sm:$0xff]
    %v689 = vld [vmem:[#allocation2 + $0xf60] sm:$0xff]
    %v690 = vld [vmem:[#allocation2 + $0xf68] sm:$0xff]
    %v691 = vld [vmem:[#allocation2 + $0xf70] sm:$0xff]
    %v692 = vld [vmem:[#allocation2 + $0xf78] sm:$0xff]
    %v693 = vld [vmem:[#allocation2 + $0xf80] sm:$0xff]
    %v694 = vld [vmem:[#allocation2 + $0xf88] sm:$0xff]
    %v695 = vld [vmem:[#allocation2 + $0xf90] sm:$0xff]
    %v696 = vld [vmem:[#allocation2 + $0xf98] sm:$0xff]
    %v697 = vld [vmem:[#allocation2 + $0xfa0] sm:$0xff]
    %v698 = vld [vmem:[#allocation2 + $0xfa8] sm:$0xff]
    %v699 = vld [vmem:[#allocation2 + $0xfb0] sm:$0xff]
    %v700 = vld [vmem:[#allocation2 + $0xfb8] sm:$0xff]
    %v701 = vld [vmem:[#allocation2 + $0xfc0] sm:$0xff]
    %v702 = vld [vmem:[#allocation2 + $0xfc8] sm:$0xff]
    %v703 = vld [vmem:[#allocation2 + $0xfd0] sm:$0xff]
    %v704 = vld [vmem:[#allocation2 + $0xfd8] sm:$0xff]
    %v705 = vld [vmem:[#allocation2 + $0xfe0] sm:$0xff]
    %v706 = vld [vmem:[#allocation2 + $0xfe8] sm:$0xff]
    %v707 = vld [vmem:[#allocation2 + $0xff0] sm:$0xff]
    %v708 = vld [vmem:[#allocation2 + $0xff8] sm:$0xff]
    %v709 = vld [vmem:[#allocation4] sm:$0xff]
    %v711 = vperm.slane %v709, 0
    %v712 = vperm.slane %v709, 1
    %v713 = vperm.slane %v709, 2
    %v714 = vperm.slane %v709, 3
    %v715 = vperm.slane %v709, 4
    %v716 = vperm.slane %v709, 5
    %v717 = vperm.slane %v709, 6
    %v718 = vperm.slane %v709, 7
    %v1239 = vunpack.c.l.b16 %v197
    %v1240 = vunpack.c.h.b16 %v197
    %v1241 = vunpack.c.l.b16 %v198
    %v1242 = vunpack.c.h.b16 %v198
    %v1243 = vunpack.c.l.b16 %v199
    %v1244 = vunpack.c.h.b16 %v199
    %v1245 = vunpack.c.l.b16 %v200
    %v1246 = vunpack.c.h.b16 %v200
    %v1247 = vunpack.c.l.b16 %v201
    %v1248 = vunpack.c.h.b16 %v201
    %v1249 = vunpack.c.l.b16 %v202
    %v1250 = vunpack.c.h.b16 %v202
    %v1251 = vunpack.c.l.b16 %v203
    %v1252 = vunpack.c.h.b16 %v203
    %v1253 = vunpack.c.l.b16 %v204
    %v1254 = vunpack.c.h.b16 %v204
    %v1255 = vunpack.c.l.b16 %v205
    %v1256 = vunpack.c.h.b16 %v205
    %v1257 = vunpack.c.l.b16 %v206
    %v1258 = vunpack.c.h.b16 %v206
    %v1259 = vunpack.c.l.b16 %v207
    %v1260 = vunpack.c.h.b16 %v207
    %v1261 = vunpack.c.l.b16 %v208
    %v1262 = vunpack.c.h.b16 %v208
    %v1263 = vunpack.c.l.b16 %v209
    %v1264 = vunpack.c.h.b16 %v209
    %v1265 = vunpack.c.l.b16 %v210
    %v1266 = vunpack.c.h.b16 %v210
    %v1267 = vunpack.c.l.b16 %v211
    %v1268 = vunpack.c.h.b16 %v211
    %v1269 = vunpack.c.l.b16 %v212
    %v1270 = vunpack.c.h.b16 %v212
    %v1271 = vunpack.c.l.b16 %v213
    %v1272 = vunpack.c.h.b16 %v213
    %v1273 = vunpack.c.l.b16 %v214
    %v1274 = vunpack.c.h.b16 %v214
    %v1275 = vunpack.c.l.b16 %v215
    %v1276 = vunpack.c.h.b16 %v215
    %v1277 = vunpack.c.l.b16 %v216
    %v1278 = vunpack.c.h.b16 %v216
    %v1279 = vunpack.c.l.b16 %v217
    %v1280 = vunpack.c.h.b16 %v217
    %v1281 = vunpack.c.l.b16 %v218
    %v1282 = vunpack.c.h.b16 %v218
    %v1283 = vunpack.c.l.b16 %v219
    %v1284 = vunpack.c.h.b16 %v219
    %v1285 = vunpack.c.l.b16 %v220
    %v1286 = vunpack.c.h.b16 %v220
    %v1287 = vunpack.c.l.b16 %v221
    %v1288 = vunpack.c.h.b16 %v221
    %v1289 = vunpack.c.l.b16 %v222
    %v1290 = vunpack.c.h.b16 %v222
    %v1291 = vunpack.c.l.b16 %v223
    %v1292 = vunpack.c.h.b16 %v223
    %v1293 = vunpack.c.l.b16 %v224
    %v1294 = vunpack.c.h.b16 %v224
    %v1295 = vunpack.c.l.b16 %v225
    %v1296 = vunpack.c.h.b16 %v225
    %v1297 = vunpack.c.l.b16 %v226
    %v1298 = vunpack.c.h.b16 %v226
    %v1299 = vunpack.c.l.b16 %v227
    %v1300 = vunpack.c.h.b16 %v227
    %v1301 = vunpack.c.l.b16 %v228
    %v1302 = vunpack.c.h.b16 %v228
    %v1303 = vunpack.c.l.b16 %v229
    %v1304 = vunpack.c.h.b16 %v229
    %v1305 = vunpack.c.l.b16 %v230
    %v1306 = vunpack.c.h.b16 %v230
    %v1307 = vunpack.c.l.b16 %v231
    %v1308 = vunpack.c.h.b16 %v231
    %v1309 = vunpack.c.l.b16 %v232
    %v1310 = vunpack.c.h.b16 %v232
    %v1311 = vunpack.c.l.b16 %v233
    %v1312 = vunpack.c.h.b16 %v233
    %v1313 = vunpack.c.l.b16 %v234
    %v1314 = vunpack.c.h.b16 %v234
    %v1315 = vunpack.c.l.b16 %v235
    %v1316 = vunpack.c.h.b16 %v235
    %v1317 = vunpack.c.l.b16 %v236
    %v1318 = vunpack.c.h.b16 %v236
    %v1319 = vunpack.c.l.b16 %v237
    %v1320 = vunpack.c.h.b16 %v237
    %v1321 = vunpack.c.l.b16 %v238
    %v1322 = vunpack.c.h.b16 %v238
    %v1323 = vunpack.c.l.b16 %v239
    %v1324 = vunpack.c.h.b16 %v239
    %v1325 = vunpack.c.l.b16 %v240
    %v1326 = vunpack.c.h.b16 %v240
    %v1327 = vunpack.c.l.b16 %v241
    %v1328 = vunpack.c.h.b16 %v241
    %v1329 = vunpack.c.l.b16 %v242
    %v1330 = vunpack.c.h.b16 %v242
    %v1331 = vunpack.c.l.b16 %v243
    %v1332 = vunpack.c.h.b16 %v243
    %v1333 = vunpack.c.l.b16 %v244
    %v1334 = vunpack.c.h.b16 %v244
    %v1335 = vunpack.c.l.b16 %v245
    %v1336 = vunpack.c.h.b16 %v245
    %v1337 = vunpack.c.l.b16 %v246
    %v1338 = vunpack.c.h.b16 %v246
    %v1339 = vunpack.c.l.b16 %v247
    %v1340 = vunpack.c.h.b16 %v247
    %v1341 = vunpack.c.l.b16 %v248
    %v1342 = vunpack.c.h.b16 %v248
    %v1343 = vunpack.c.l.b16 %v249
    %v1344 = vunpack.c.h.b16 %v249
    %v1345 = vunpack.c.l.b16 %v250
    %v1346 = vunpack.c.h.b16 %v250
    %v1347 = vunpack.c.l.b16 %v251
    %v1348 = vunpack.c.h.b16 %v251
    %v1349 = vunpack.c.l.b16 %v252
    %v1350 = vunpack.c.h.b16 %v252
    %v1351 = vunpack.c.l.b16 %v253
    %v1352 = vunpack.c.h.b16 %v253
    %v1353 = vunpack.c.l.b16 %v254
    %v1354 = vunpack.c.h.b16 %v254
    %v1355 = vunpack.c.l.b16 %v255
    %v1356 = vunpack.c.h.b16 %v255
    %v1357 = vunpack.c.l.b16 %v256
    %v1358 = vunpack.c.h.b16 %v256
    %v1359 = vunpack.c.l.b16 %v257
    %v1360 = vunpack.c.h.b16 %v257
    %v1361 = vunpack.c.l.b16 %v258
    %v1362 = vunpack.c.h.b16 %v258
    %v1363 = vunpack.c.l.b16 %v259
    %v1364 = vunpack.c.h.b16 %v259
    %v1365 = vunpack.c.l.b16 %v260
    %v1366 = vunpack.c.h.b16 %v260
    %v1367 = vunpack.c.l.b16 %v261
    %v1368 = vunpack.c.h.b16 %v261
    %v1369 = vunpack.c.l.b16 %v262
    %v1370 = vunpack.c.h.b16 %v262
    %v1371 = vunpack.c.l.b16 %v263
    %v1372 = vunpack.c.h.b16 %v263
    %v1373 = vunpack.c.l.b16 %v264
    %v1374 = vunpack.c.h.b16 %v264
    %v1375 = vunpack.c.l.b16 %v265
    %v1376 = vunpack.c.h.b16 %v265
    %v1377 = vunpack.c.l.b16 %v266
    %v1378 = vunpack.c.h.b16 %v266
    %v1379 = vunpack.c.l.b16 %v267
    %v1380 = vunpack.c.h.b16 %v267
    %v1381 = vunpack.c.l.b16 %v268
    %v1382 = vunpack.c.h.b16 %v268
    %v1383 = vunpack.c.l.b16 %v269
    %v1384 = vunpack.c.h.b16 %v269
    %v1385 = vunpack.c.l.b16 %v270
    %v1386 = vunpack.c.h.b16 %v270
    %v1387 = vunpack.c.l.b16 %v271
    %v1388 = vunpack.c.h.b16 %v271
    %v1389 = vunpack.c.l.b16 %v272
    %v1390 = vunpack.c.h.b16 %v272
    %v1391 = vunpack.c.l.b16 %v273
    %v1392 = vunpack.c.h.b16 %v273
    %v1393 = vunpack.c.l.b16 %v274
    %v1394 = vunpack.c.h.b16 %v274
    %v1395 = vunpack.c.l.b16 %v275
    %v1396 = vunpack.c.h.b16 %v275
    %v1397 = vunpack.c.l.b16 %v276
    %v1398 = vunpack.c.h.b16 %v276
    %v1399 = vunpack.c.l.b16 %v277
    %v1400 = vunpack.c.h.b16 %v277
    %v1401 = vunpack.c.l.b16 %v278
    %v1402 = vunpack.c.h.b16 %v278
    %v1403 = vunpack.c.l.b16 %v279
    %v1404 = vunpack.c.h.b16 %v279
    %v1405 = vunpack.c.l.b16 %v280
    %v1406 = vunpack.c.h.b16 %v280
    %v1407 = vunpack.c.l.b16 %v281
    %v1408 = vunpack.c.h.b16 %v281
    %v1409 = vunpack.c.l.b16 %v282
    %v1410 = vunpack.c.h.b16 %v282
    %v1411 = vunpack.c.l.b16 %v283
    %v1412 = vunpack.c.h.b16 %v283
    %v1413 = vunpack.c.l.b16 %v284
    %v1414 = vunpack.c.h.b16 %v284
    %v1415 = vunpack.c.l.b16 %v285
    %v1416 = vunpack.c.h.b16 %v285
    %v1417 = vunpack.c.l.b16 %v286
    %v1418 = vunpack.c.h.b16 %v286
    %v1419 = vunpack.c.l.b16 %v287
    %v1420 = vunpack.c.h.b16 %v287
    %v1421 = vunpack.c.l.b16 %v288
    %v1422 = vunpack.c.h.b16 %v288
    %v1423 = vunpack.c.l.b16 %v289
    %v1424 = vunpack.c.h.b16 %v289
    %v1425 = vunpack.c.l.b16 %v290
    %v1426 = vunpack.c.h.b16 %v290
    %v1427 = vunpack.c.l.b16 %v291
    %v1428 = vunpack.c.h.b16 %v291
    %v1429 = vunpack.c.l.b16 %v292
    %v1430 = vunpack.c.h.b16 %v292
    %v1431 = vunpack.c.l.b16 %v293
    %v1432 = vunpack.c.h.b16 %v293
    %v1433 = vunpack.c.l.b16 %v294
    %v1434 = vunpack.c.h.b16 %v294
    %v1435 = vunpack.c.l.b16 %v295
    %v1436 = vunpack.c.h.b16 %v295
    %v1437 = vunpack.c.l.b16 %v296
    %v1438 = vunpack.c.h.b16 %v296
    %v1439 = vunpack.c.l.b16 %v297
    %v1440 = vunpack.c.h.b16 %v297
    %v1441 = vunpack.c.l.b16 %v298
    %v1442 = vunpack.c.h.b16 %v298
    %v1443 = vunpack.c.l.b16 %v299
    %v1444 = vunpack.c.h.b16 %v299
    %v1445 = vunpack.c.l.b16 %v300
    %v1446 = vunpack.c.h.b16 %v300
    %v1447 = vunpack.c.l.b16 %v301
    %v1448 = vunpack.c.h.b16 %v301
    %v1449 = vunpack.c.l.b16 %v302
    %v1450 = vunpack.c.h.b16 %v302
    %v1451 = vunpack.c.l.b16 %v303
    %v1452 = vunpack.c.h.b16 %v303
    %v1453 = vunpack.c.l.b16 %v304
    %v1454 = vunpack.c.h.b16 %v304
    %v1455 = vunpack.c.l.b16 %v305
    %v1456 = vunpack.c.h.b16 %v305
    %v1457 = vunpack.c.l.b16 %v306
    %v1458 = vunpack.c.h.b16 %v306
    %v1459 = vunpack.c.l.b16 %v307
    %v1460 = vunpack.c.h.b16 %v307
    %v1461 = vunpack.c.l.b16 %v308
    %v1462 = vunpack.c.h.b16 %v308
    %v1463 = vunpack.c.l.b16 %v309
    %v1464 = vunpack.c.h.b16 %v309
    %v1465 = vunpack.c.l.b16 %v310
    %v1466 = vunpack.c.h.b16 %v310
    %v1467 = vunpack.c.l.b16 %v311
    %v1468 = vunpack.c.h.b16 %v311
    %v1469 = vunpack.c.l.b16 %v312
    %v1470 = vunpack.c.h.b16 %v312
    %v1471 = vunpack.c.l.b16 %v313
    %v1472 = vunpack.c.h.b16 %v313
    %v1473 = vunpack.c.l.b16 %v314
    %v1474 = vunpack.c.h.b16 %v314
    %v1475 = vunpack.c.l.b16 %v315
    %v1476 = vunpack.c.h.b16 %v315
    %v1477 = vunpack.c.l.b16 %v316
    %v1478 = vunpack.c.h.b16 %v316
    %v1479 = vunpack.c.l.b16 %v317
    %v1480 = vunpack.c.h.b16 %v317
    %v1481 = vunpack.c.l.b16 %v318
    %v1482 = vunpack.c.h.b16 %v318
    %v1483 = vunpack.c.l.b16 %v319
    %v1484 = vunpack.c.h.b16 %v319
    %v1485 = vunpack.c.l.b16 %v320
    %v1486 = vunpack.c.h.b16 %v320
    %v1487 = vunpack.c.l.b16 %v321
    %v1488 = vunpack.c.h.b16 %v321
    %v1489 = vunpack.c.l.b16 %v322
    %v1490 = vunpack.c.h.b16 %v322
    %v1491 = vunpack.c.l.b16 %v323
    %v1492 = vunpack.c.h.b16 %v323
    %v1493 = vunpack.c.l.b16 %v324
    %v1494 = vunpack.c.h.b16 %v324
    %v1495 = vunpack.c.l.b16 %v325
    %v1496 = vunpack.c.h.b16 %v325
    %v1497 = vunpack.c.l.b16 %v326
    %v1498 = vunpack.c.h.b16 %v326
    %v1499 = vunpack.c.l.b16 %v327
    %v1500 = vunpack.c.h.b16 %v327
    %v1501 = vunpack.c.l.b16 %v328
    %v1502 = vunpack.c.h.b16 %v328
    %v1503 = vunpack.c.l.b16 %v329
    %v1504 = vunpack.c.h.b16 %v329
    %v1505 = vunpack.c.l.b16 %v330
    %v1506 = vunpack.c.h.b16 %v330
    %v1507 = vunpack.c.l.b16 %v331
    %v1508 = vunpack.c.h.b16 %v331
    %v1509 = vunpack.c.l.b16 %v332
    %v1510 = vunpack.c.h.b16 %v332
    %v1511 = vunpack.c.l.b16 %v333
    %v1512 = vunpack.c.h.b16 %v333
    %v1513 = vunpack.c.l.b16 %v334
    %v1514 = vunpack.c.h.b16 %v334
    %v1515 = vunpack.c.l.b16 %v335
    %v1516 = vunpack.c.h.b16 %v335
    %v1517 = vunpack.c.l.b16 %v336
    %v1518 = vunpack.c.h.b16 %v336
    %v1519 = vunpack.c.l.b16 %v337
    %v1520 = vunpack.c.h.b16 %v337
    %v1521 = vunpack.c.l.b16 %v338
    %v1522 = vunpack.c.h.b16 %v338
    %v1523 = vunpack.c.l.b16 %v339
    %v1524 = vunpack.c.h.b16 %v339
    %v1525 = vunpack.c.l.b16 %v340
    %v1526 = vunpack.c.h.b16 %v340
    %v1527 = vunpack.c.l.b16 %v341
    %v1528 = vunpack.c.h.b16 %v341
    %v1529 = vunpack.c.l.b16 %v342
    %v1530 = vunpack.c.h.b16 %v342
    %v1531 = vunpack.c.l.b16 %v343
    %v1532 = vunpack.c.h.b16 %v343
    %v1533 = vunpack.c.l.b16 %v344
    %v1534 = vunpack.c.h.b16 %v344
    %v1535 = vunpack.c.l.b16 %v345
    %v1536 = vunpack.c.h.b16 %v345
    %v1537 = vunpack.c.l.b16 %v346
    %v1538 = vunpack.c.h.b16 %v346
    %v1539 = vunpack.c.l.b16 %v347
    %v1540 = vunpack.c.h.b16 %v347
    %v1541 = vunpack.c.l.b16 %v348
    %v1542 = vunpack.c.h.b16 %v348
    %v1543 = vunpack.c.l.b16 %v349
    %v1544 = vunpack.c.h.b16 %v349
    %v1545 = vunpack.c.l.b16 %v350
    %v1546 = vunpack.c.h.b16 %v350
    %v1547 = vunpack.c.l.b16 %v351
    %v1548 = vunpack.c.h.b16 %v351
    %v1549 = vunpack.c.l.b16 %v352
    %v1550 = vunpack.c.h.b16 %v352
    %v1551 = vunpack.c.l.b16 %v353
    %v1552 = vunpack.c.h.b16 %v353
    %v1553 = vunpack.c.l.b16 %v354
    %v1554 = vunpack.c.h.b16 %v354
    %v1555 = vunpack.c.l.b16 %v355
    %v1556 = vunpack.c.h.b16 %v355
    %v1557 = vunpack.c.l.b16 %v356
    %v1558 = vunpack.c.h.b16 %v356
    %v1559 = vunpack.c.l.b16 %v357
    %v1560 = vunpack.c.h.b16 %v357
    %v1561 = vunpack.c.l.b16 %v358
    %v1562 = vunpack.c.h.b16 %v358
    %v1563 = vunpack.c.l.b16 %v359
    %v1564 = vunpack.c.h.b16 %v359
    %v1565 = vunpack.c.l.b16 %v360
    %v1566 = vunpack.c.h.b16 %v360
    %v1567 = vunpack.c.l.b16 %v361
    %v1568 = vunpack.c.h.b16 %v361
    %v1569 = vunpack.c.l.b16 %v362
    %v1570 = vunpack.c.h.b16 %v362
    %v1571 = vunpack.c.l.b16 %v363
    %v1572 = vunpack.c.h.b16 %v363
    %v1573 = vunpack.c.l.b16 %v364
    %v1574 = vunpack.c.h.b16 %v364
    %v1575 = vunpack.c.l.b16 %v365
    %v1576 = vunpack.c.h.b16 %v365
    %v1577 = vunpack.c.l.b16 %v366
    %v1578 = vunpack.c.h.b16 %v366
    %v1579 = vunpack.c.l.b16 %v367
    %v1580 = vunpack.c.h.b16 %v367
    %v1581 = vunpack.c.l.b16 %v368
    %v1582 = vunpack.c.h.b16 %v368
    %v1583 = vunpack.c.l.b16 %v369
    %v1584 = vunpack.c.h.b16 %v369
    %v1585 = vunpack.c.l.b16 %v370
    %v1586 = vunpack.c.h.b16 %v370
    %v1587 = vunpack.c.l.b16 %v371
    %v1588 = vunpack.c.h.b16 %v371
    %v1589 = vunpack.c.l.b16 %v372
    %v1590 = vunpack.c.h.b16 %v372
    %v1591 = vunpack.c.l.b16 %v373
    %v1592 = vunpack.c.h.b16 %v373
    %v1593 = vunpack.c.l.b16 %v374
    %v1594 = vunpack.c.h.b16 %v374
    %v1595 = vunpack.c.l.b16 %v375
    %v1596 = vunpack.c.h.b16 %v375
    %v1597 = vunpack.c.l.b16 %v376
    %v1598 = vunpack.c.h.b16 %v376
    %v1599 = vunpack.c.l.b16 %v377
    %v1600 = vunpack.c.h.b16 %v377
    %v1601 = vunpack.c.l.b16 %v378
    %v1602 = vunpack.c.h.b16 %v378
    %v1603 = vunpack.c.l.b16 %v379
    %v1604 = vunpack.c.h.b16 %v379
    %v1605 = vunpack.c.l.b16 %v380
    %v1606 = vunpack.c.h.b16 %v380
    %v1607 = vunpack.c.l.b16 %v381
    %v1608 = vunpack.c.h.b16 %v381
    %v1609 = vunpack.c.l.b16 %v382
    %v1610 = vunpack.c.h.b16 %v382
    %v1611 = vunpack.c.l.b16 %v383
    %v1612 = vunpack.c.h.b16 %v383
    %v1613 = vunpack.c.l.b16 %v384
    %v1614 = vunpack.c.h.b16 %v384
    %v1615 = vunpack.c.l.b16 %v385
    %v1616 = vunpack.c.h.b16 %v385
    %v1617 = vunpack.c.l.b16 %v386
    %v1618 = vunpack.c.h.b16 %v386
    %v1619 = vunpack.c.l.b16 %v387
    %v1620 = vunpack.c.h.b16 %v387
    %v1621 = vunpack.c.l.b16 %v388
    %v1622 = vunpack.c.h.b16 %v388
    %v1623 = vunpack.c.l.b16 %v389
    %v1624 = vunpack.c.h.b16 %v389
    %v1625 = vunpack.c.l.b16 %v390
    %v1626 = vunpack.c.h.b16 %v390
    %v1627 = vunpack.c.l.b16 %v391
    %v1628 = vunpack.c.h.b16 %v391
    %v1629 = vunpack.c.l.b16 %v392
    %v1630 = vunpack.c.h.b16 %v392
    %v1631 = vunpack.c.l.b16 %v393
    %v1632 = vunpack.c.h.b16 %v393
    %v1633 = vunpack.c.l.b16 %v394
    %v1634 = vunpack.c.h.b16 %v394
    %v1635 = vunpack.c.l.b16 %v395
    %v1636 = vunpack.c.h.b16 %v395
    %v1637 = vunpack.c.l.b16 %v396
    %v1638 = vunpack.c.h.b16 %v396
    %v1639 = vunpack.c.l.b16 %v397
    %v1640 = vunpack.c.h.b16 %v397
    %v1641 = vunpack.c.l.b16 %v398
    %v1642 = vunpack.c.h.b16 %v398
    %v1643 = vunpack.c.l.b16 %v399
    %v1644 = vunpack.c.h.b16 %v399
    %v1645 = vunpack.c.l.b16 %v400
    %v1646 = vunpack.c.h.b16 %v400
    %v1647 = vunpack.c.l.b16 %v401
    %v1648 = vunpack.c.h.b16 %v401
    %v1649 = vunpack.c.l.b16 %v402
    %v1650 = vunpack.c.h.b16 %v402
    %v1651 = vunpack.c.l.b16 %v403
    %v1652 = vunpack.c.h.b16 %v403
    %v1653 = vunpack.c.l.b16 %v404
    %v1654 = vunpack.c.h.b16 %v404
    %v1655 = vunpack.c.l.b16 %v405
    %v1656 = vunpack.c.h.b16 %v405
    %v1657 = vunpack.c.l.b16 %v406
    %v1658 = vunpack.c.h.b16 %v406
    %v1659 = vunpack.c.l.b16 %v407
    %v1660 = vunpack.c.h.b16 %v407
    %v1661 = vunpack.c.l.b16 %v408
    %v1662 = vunpack.c.h.b16 %v408
    %v1663 = vunpack.c.l.b16 %v409
    %v1664 = vunpack.c.h.b16 %v409
    %v1665 = vunpack.c.l.b16 %v410
    %v1666 = vunpack.c.h.b16 %v410
    %v1667 = vunpack.c.l.b16 %v411
    %v1668 = vunpack.c.h.b16 %v411
    %v1669 = vunpack.c.l.b16 %v412
    %v1670 = vunpack.c.h.b16 %v412
    %v1671 = vunpack.c.l.b16 %v413
    %v1672 = vunpack.c.h.b16 %v413
    %v1673 = vunpack.c.l.b16 %v414
    %v1674 = vunpack.c.h.b16 %v414
    %v1675 = vunpack.c.l.b16 %v415
    %v1676 = vunpack.c.h.b16 %v415
    %v1677 = vunpack.c.l.b16 %v416
    %v1678 = vunpack.c.h.b16 %v416
    %v1679 = vunpack.c.l.b16 %v417
    %v1680 = vunpack.c.h.b16 %v417
    %v1681 = vunpack.c.l.b16 %v418
    %v1682 = vunpack.c.h.b16 %v418
    %v1683 = vunpack.c.l.b16 %v419
    %v1684 = vunpack.c.h.b16 %v419
    %v1685 = vunpack.c.l.b16 %v420
    %v1686 = vunpack.c.h.b16 %v420
    %v1687 = vunpack.c.l.b16 %v421
    %v1688 = vunpack.c.h.b16 %v421
    %v1689 = vunpack.c.l.b16 %v422
    %v1690 = vunpack.c.h.b16 %v422
    %v1691 = vunpack.c.l.b16 %v423
    %v1692 = vunpack.c.h.b16 %v423
    %v1693 = vunpack.c.l.b16 %v424
    %v1694 = vunpack.c.h.b16 %v424
    %v1695 = vunpack.c.l.b16 %v425
    %v1696 = vunpack.c.h.b16 %v425
    %v1697 = vunpack.c.l.b16 %v426
    %v1698 = vunpack.c.h.b16 %v426
    %v1699 = vunpack.c.l.b16 %v427
    %v1700 = vunpack.c.h.b16 %v427
    %v1701 = vunpack.c.l.b16 %v428
    %v1702 = vunpack.c.h.b16 %v428
    %v1703 = vunpack.c.l.b16 %v429
    %v1704 = vunpack.c.h.b16 %v429
    %v1705 = vunpack.c.l.b16 %v430
    %v1706 = vunpack.c.h.b16 %v430
    %v1707 = vunpack.c.l.b16 %v431
    %v1708 = vunpack.c.h.b16 %v431
    %v1709 = vunpack.c.l.b16 %v432
    %v1710 = vunpack.c.h.b16 %v432
    %v1711 = vunpack.c.l.b16 %v433
    %v1712 = vunpack.c.h.b16 %v433
    %v1713 = vunpack.c.l.b16 %v434
    %v1714 = vunpack.c.h.b16 %v434
    %v1715 = vunpack.c.l.b16 %v435
    %v1716 = vunpack.c.h.b16 %v435
    %v1717 = vunpack.c.l.b16 %v436
    %v1718 = vunpack.c.h.b16 %v436
    %v1719 = vunpack.c.l.b16 %v437
    %v1720 = vunpack.c.h.b16 %v437
    %v1721 = vunpack.c.l.b16 %v438
    %v1722 = vunpack.c.h.b16 %v438
    %v1723 = vunpack.c.l.b16 %v439
    %v1724 = vunpack.c.h.b16 %v439
    %v1725 = vunpack.c.l.b16 %v440
    %v1726 = vunpack.c.h.b16 %v440
    %v1727 = vunpack.c.l.b16 %v441
    %v1728 = vunpack.c.h.b16 %v441
    %v1729 = vunpack.c.l.b16 %v442
    %v1730 = vunpack.c.h.b16 %v442
    %v1731 = vunpack.c.l.b16 %v443
    %v1732 = vunpack.c.h.b16 %v443
    %v1733 = vunpack.c.l.b16 %v444
    %v1734 = vunpack.c.h.b16 %v444
    %v1735 = vunpack.c.l.b16 %v445
    %v1736 = vunpack.c.h.b16 %v445
    %v1737 = vunpack.c.l.b16 %v446
    %v1738 = vunpack.c.h.b16 %v446
    %v1739 = vunpack.c.l.b16 %v447
    %v1740 = vunpack.c.h.b16 %v447
    %v1741 = vunpack.c.l.b16 %v448
    %v1742 = vunpack.c.h.b16 %v448
    %v1743 = vunpack.c.l.b16 %v449
    %v1744 = vunpack.c.h.b16 %v449
    %v1745 = vunpack.c.l.b16 %v450
    %v1746 = vunpack.c.h.b16 %v450
    %v1747 = vunpack.c.l.b16 %v451
    %v1748 = vunpack.c.h.b16 %v451
    %v1749 = vunpack.c.l.b16 %v452
    %v1750 = vunpack.c.h.b16 %v452
    %v1751 = vunpack.c.l.b16 %v453
    %v1752 = vunpack.c.h.b16 %v453
    %v1753 = vunpack.c.l.b16 %v454
    %v1754 = vunpack.c.h.b16 %v454
    %v1755 = vunpack.c.l.b16 %v455
    %v1756 = vunpack.c.h.b16 %v455
    %v1757 = vunpack.c.l.b16 %v456
    %v1758 = vunpack.c.h.b16 %v456
    %v1759 = vunpack.c.l.b16 %v457
    %v1760 = vunpack.c.h.b16 %v457
    %v1761 = vunpack.c.l.b16 %v458
    %v1762 = vunpack.c.h.b16 %v458
    %v1763 = vunpack.c.l.b16 %v459
    %v1764 = vunpack.c.h.b16 %v459
    %v1765 = vunpack.c.l.b16 %v460
    %v1766 = vunpack.c.h.b16 %v460
    %v1767 = vunpack.c.l.b16 %v461
    %v1768 = vunpack.c.h.b16 %v461
    %v1769 = vunpack.c.l.b16 %v462
    %v1770 = vunpack.c.h.b16 %v462
    %v1771 = vunpack.c.l.b16 %v463
    %v1772 = vunpack.c.h.b16 %v463
    %v1773 = vunpack.c.l.b16 %v464
    %v1774 = vunpack.c.h.b16 %v464
    %v1775 = vunpack.c.l.b16 %v465
    %v1776 = vunpack.c.h.b16 %v465
    %v1777 = vunpack.c.l.b16 %v466
    %v1778 = vunpack.c.h.b16 %v466
    %v1779 = vunpack.c.l.b16 %v467
    %v1780 = vunpack.c.h.b16 %v467
    %v1781 = vunpack.c.l.b16 %v468
    %v1782 = vunpack.c.h.b16 %v468
    %v1783 = vunpack.c.l.b16 %v469
    %v1784 = vunpack.c.h.b16 %v469
    %v1785 = vunpack.c.l.b16 %v470
    %v1786 = vunpack.c.h.b16 %v470
    %v1787 = vunpack.c.l.b16 %v471
    %v1788 = vunpack.c.h.b16 %v471
    %v1789 = vunpack.c.l.b16 %v472
    %v1790 = vunpack.c.h.b16 %v472
    %v1791 = vunpack.c.l.b16 %v473
    %v1792 = vunpack.c.h.b16 %v473
    %v1793 = vunpack.c.l.b16 %v474
    %v1794 = vunpack.c.h.b16 %v474
    %v1795 = vunpack.c.l.b16 %v475
    %v1796 = vunpack.c.h.b16 %v475
    %v1797 = vunpack.c.l.b16 %v476
    %v1798 = vunpack.c.h.b16 %v476
    %v1799 = vunpack.c.l.b16 %v477
    %v1800 = vunpack.c.h.b16 %v477
    %v1801 = vunpack.c.l.b16 %v478
    %v1802 = vunpack.c.h.b16 %v478
    %v1803 = vunpack.c.l.b16 %v479
    %v1804 = vunpack.c.h.b16 %v479
    %v1805 = vunpack.c.l.b16 %v480
    %v1806 = vunpack.c.h.b16 %v480
    %v1807 = vunpack.c.l.b16 %v481
    %v1808 = vunpack.c.h.b16 %v481
    %v1809 = vunpack.c.l.b16 %v482
    %v1810 = vunpack.c.h.b16 %v482
    %v1811 = vunpack.c.l.b16 %v483
    %v1812 = vunpack.c.h.b16 %v483
    %v1813 = vunpack.c.l.b16 %v484
    %v1814 = vunpack.c.h.b16 %v484
    %v1815 = vunpack.c.l.b16 %v485
    %v1816 = vunpack.c.h.b16 %v485
    %v1817 = vunpack.c.l.b16 %v486
    %v1818 = vunpack.c.h.b16 %v486
    %v1819 = vunpack.c.l.b16 %v487
    %v1820 = vunpack.c.h.b16 %v487
    %v1821 = vunpack.c.l.b16 %v488
    %v1822 = vunpack.c.h.b16 %v488
    %v1823 = vunpack.c.l.b16 %v489
    %v1824 = vunpack.c.h.b16 %v489
    %v1825 = vunpack.c.l.b16 %v490
    %v1826 = vunpack.c.h.b16 %v490
    %v1827 = vunpack.c.l.b16 %v491
    %v1828 = vunpack.c.h.b16 %v491
    %v1829 = vunpack.c.l.b16 %v492
    %v1830 = vunpack.c.h.b16 %v492
    %v1831 = vunpack.c.l.b16 %v493
    %v1832 = vunpack.c.h.b16 %v493
    %v1833 = vunpack.c.l.b16 %v494
    %v1834 = vunpack.c.h.b16 %v494
    %v1835 = vunpack.c.l.b16 %v495
    %v1836 = vunpack.c.h.b16 %v495
    %v1837 = vunpack.c.l.b16 %v496
    %v1838 = vunpack.c.h.b16 %v496
    %v1839 = vunpack.c.l.b16 %v497
    %v1840 = vunpack.c.h.b16 %v497
    %v1841 = vunpack.c.l.b16 %v498
    %v1842 = vunpack.c.h.b16 %v498
    %v1843 = vunpack.c.l.b16 %v499
    %v1844 = vunpack.c.h.b16 %v499
    %v1845 = vunpack.c.l.b16 %v500
    %v1846 = vunpack.c.h.b16 %v500
    %v1847 = vunpack.c.l.b16 %v501
    %v1848 = vunpack.c.h.b16 %v501
    %v1849 = vunpack.c.l.b16 %v502
    %v1850 = vunpack.c.h.b16 %v502
    %v1851 = vunpack.c.l.b16 %v503
    %v1852 = vunpack.c.h.b16 %v503
    %v1853 = vunpack.c.l.b16 %v504
    %v1854 = vunpack.c.h.b16 %v504
    %v1855 = vunpack.c.l.b16 %v505
    %v1856 = vunpack.c.h.b16 %v505
    %v1857 = vunpack.c.l.b16 %v506
    %v1858 = vunpack.c.h.b16 %v506
    %v1859 = vunpack.c.l.b16 %v507
    %v1860 = vunpack.c.h.b16 %v507
    %v1861 = vunpack.c.l.b16 %v508
    %v1862 = vunpack.c.h.b16 %v508
    %v1863 = vunpack.c.l.b16 %v509
    %v1864 = vunpack.c.h.b16 %v509
    %v1865 = vunpack.c.l.b16 %v510
    %v1866 = vunpack.c.h.b16 %v510
    %v1867 = vunpack.c.l.b16 %v511
    %v1868 = vunpack.c.h.b16 %v511
    %v1869 = vunpack.c.l.b16 %v512
    %v1870 = vunpack.c.h.b16 %v512
    %v1871 = vunpack.c.l.b16 %v513
    %v1872 = vunpack.c.h.b16 %v513
    %v1873 = vunpack.c.l.b16 %v514
    %v1874 = vunpack.c.h.b16 %v514
    %v1875 = vunpack.c.l.b16 %v515
    %v1876 = vunpack.c.h.b16 %v515
    %v1877 = vunpack.c.l.b16 %v516
    %v1878 = vunpack.c.h.b16 %v516
    %v1879 = vunpack.c.l.b16 %v517
    %v1880 = vunpack.c.h.b16 %v517
    %v1881 = vunpack.c.l.b16 %v518
    %v1882 = vunpack.c.h.b16 %v518
    %v1883 = vunpack.c.l.b16 %v519
    %v1884 = vunpack.c.h.b16 %v519
    %v1885 = vunpack.c.l.b16 %v520
    %v1886 = vunpack.c.h.b16 %v520
    %v1887 = vunpack.c.l.b16 %v521
    %v1888 = vunpack.c.h.b16 %v521
    %v1889 = vunpack.c.l.b16 %v522
    %v1890 = vunpack.c.h.b16 %v522
    %v1891 = vunpack.c.l.b16 %v523
    %v1892 = vunpack.c.h.b16 %v523
    %v1893 = vunpack.c.l.b16 %v524
    %v1894 = vunpack.c.h.b16 %v524
    %v1895 = vunpack.c.l.b16 %v525
    %v1896 = vunpack.c.h.b16 %v525
    %v1897 = vunpack.c.l.b16 %v526
    %v1898 = vunpack.c.h.b16 %v526
    %v1899 = vunpack.c.l.b16 %v527
    %v1900 = vunpack.c.h.b16 %v527
    %v1901 = vunpack.c.l.b16 %v528
    %v1902 = vunpack.c.h.b16 %v528
    %v1903 = vunpack.c.l.b16 %v529
    %v1904 = vunpack.c.h.b16 %v529
    %v1905 = vunpack.c.l.b16 %v530
    %v1906 = vunpack.c.h.b16 %v530
    %v1907 = vunpack.c.l.b16 %v531
    %v1908 = vunpack.c.h.b16 %v531
    %v1909 = vunpack.c.l.b16 %v532
    %v1910 = vunpack.c.h.b16 %v532
    %v1911 = vunpack.c.l.b16 %v533
    %v1912 = vunpack.c.h.b16 %v533
    %v1913 = vunpack.c.l.b16 %v534
    %v1914 = vunpack.c.h.b16 %v534
    %v1915 = vunpack.c.l.b16 %v535
    %v1916 = vunpack.c.h.b16 %v535
    %v1917 = vunpack.c.l.b16 %v536
    %v1918 = vunpack.c.h.b16 %v536
    %v1919 = vunpack.c.l.b16 %v537
    %v1920 = vunpack.c.h.b16 %v537
    %v1921 = vunpack.c.l.b16 %v538
    %v1922 = vunpack.c.h.b16 %v538
    %v1923 = vunpack.c.l.b16 %v539
    %v1924 = vunpack.c.h.b16 %v539
    %v1925 = vunpack.c.l.b16 %v540
    %v1926 = vunpack.c.h.b16 %v540
    %v1927 = vunpack.c.l.b16 %v541
    %v1928 = vunpack.c.h.b16 %v541
    %v1929 = vunpack.c.l.b16 %v542
    %v1930 = vunpack.c.h.b16 %v542
    %v1931 = vunpack.c.l.b16 %v543
    %v1932 = vunpack.c.h.b16 %v543
    %v1933 = vunpack.c.l.b16 %v544
    %v1934 = vunpack.c.h.b16 %v544
    %v1935 = vunpack.c.l.b16 %v545
    %v1936 = vunpack.c.h.b16 %v545
    %v1937 = vunpack.c.l.b16 %v546
    %v1938 = vunpack.c.h.b16 %v546
    %v1939 = vunpack.c.l.b16 %v547
    %v1940 = vunpack.c.h.b16 %v547
    %v1941 = vunpack.c.l.b16 %v548
    %v1942 = vunpack.c.h.b16 %v548
    %v1943 = vunpack.c.l.b16 %v549
    %v1944 = vunpack.c.h.b16 %v549
    %v1945 = vunpack.c.l.b16 %v550
    %v1946 = vunpack.c.h.b16 %v550
    %v1947 = vunpack.c.l.b16 %v551
    %v1948 = vunpack.c.h.b16 %v551
    %v1949 = vunpack.c.l.b16 %v552
    %v1950 = vunpack.c.h.b16 %v552
    %v1951 = vunpack.c.l.b16 %v553
    %v1952 = vunpack.c.h.b16 %v553
    %v1953 = vunpack.c.l.b16 %v554
    %v1954 = vunpack.c.h.b16 %v554
    %v1955 = vunpack.c.l.b16 %v555
    %v1956 = vunpack.c.h.b16 %v555
    %v1957 = vunpack.c.l.b16 %v556
    %v1958 = vunpack.c.h.b16 %v556
    %v1959 = vunpack.c.l.b16 %v557
    %v1960 = vunpack.c.h.b16 %v557
    %v1961 = vunpack.c.l.b16 %v558
    %v1962 = vunpack.c.h.b16 %v558
    %v1963 = vunpack.c.l.b16 %v559
    %v1964 = vunpack.c.h.b16 %v559
    %v1965 = vunpack.c.l.b16 %v560
    %v1966 = vunpack.c.h.b16 %v560
    %v1967 = vunpack.c.l.b16 %v561
    %v1968 = vunpack.c.h.b16 %v561
    %v1969 = vunpack.c.l.b16 %v562
    %v1970 = vunpack.c.h.b16 %v562
    %v1971 = vunpack.c.l.b16 %v563
    %v1972 = vunpack.c.h.b16 %v563
    %v1973 = vunpack.c.l.b16 %v564
    %v1974 = vunpack.c.h.b16 %v564
    %v1975 = vunpack.c.l.b16 %v565
    %v1976 = vunpack.c.h.b16 %v565
    %v1977 = vunpack.c.l.b16 %v566
    %v1978 = vunpack.c.h.b16 %v566
    %v1979 = vunpack.c.l.b16 %v567
    %v1980 = vunpack.c.h.b16 %v567
    %v1981 = vunpack.c.l.b16 %v568
    %v1982 = vunpack.c.h.b16 %v568
    %v1983 = vunpack.c.l.b16 %v569
    %v1984 = vunpack.c.h.b16 %v569
    %v1985 = vunpack.c.l.b16 %v570
    %v1986 = vunpack.c.h.b16 %v570
    %v1987 = vunpack.c.l.b16 %v571
    %v1988 = vunpack.c.h.b16 %v571
    %v1989 = vunpack.c.l.b16 %v572
    %v1990 = vunpack.c.h.b16 %v572
    %v1991 = vunpack.c.l.b16 %v573
    %v1992 = vunpack.c.h.b16 %v573
    %v1993 = vunpack.c.l.b16 %v574
    %v1994 = vunpack.c.h.b16 %v574
    %v1995 = vunpack.c.l.b16 %v575
    %v1996 = vunpack.c.h.b16 %v575
    %v1997 = vunpack.c.l.b16 %v576
    %v1998 = vunpack.c.h.b16 %v576
    %v1999 = vunpack.c.l.b16 %v577
    %v2000 = vunpack.c.h.b16 %v577
    %v2001 = vunpack.c.l.b16 %v578
    %v2002 = vunpack.c.h.b16 %v578
    %v2003 = vunpack.c.l.b16 %v579
    %v2004 = vunpack.c.h.b16 %v579
    %v2005 = vunpack.c.l.b16 %v580
    %v2006 = vunpack.c.h.b16 %v580
    %v2007 = vunpack.c.l.b16 %v581
    %v2008 = vunpack.c.h.b16 %v581
    %v2009 = vunpack.c.l.b16 %v582
    %v2010 = vunpack.c.h.b16 %v582
    %v2011 = vunpack.c.l.b16 %v583
    %v2012 = vunpack.c.h.b16 %v583
    %v2013 = vunpack.c.l.b16 %v584
    %v2014 = vunpack.c.h.b16 %v584
    %v2015 = vunpack.c.l.b16 %v585
    %v2016 = vunpack.c.h.b16 %v585
    %v2017 = vunpack.c.l.b16 %v586
    %v2018 = vunpack.c.h.b16 %v586
    %v2019 = vunpack.c.l.b16 %v587
    %v2020 = vunpack.c.h.b16 %v587
    %v2021 = vunpack.c.l.b16 %v588
    %v2022 = vunpack.c.h.b16 %v588
    %v2023 = vunpack.c.l.b16 %v589
    %v2024 = vunpack.c.h.b16 %v589
    %v2025 = vunpack.c.l.b16 %v590
    %v2026 = vunpack.c.h.b16 %v590
    %v2027 = vunpack.c.l.b16 %v591
    %v2028 = vunpack.c.h.b16 %v591
    %v2029 = vunpack.c.l.b16 %v592
    %v2030 = vunpack.c.h.b16 %v592
    %v2031 = vunpack.c.l.b16 %v593
    %v2032 = vunpack.c.h.b16 %v593
    %v2033 = vunpack.c.l.b16 %v594
    %v2034 = vunpack.c.h.b16 %v594
    %v2035 = vunpack.c.l.b16 %v595
    %v2036 = vunpack.c.h.b16 %v595
    %v2037 = vunpack.c.l.b16 %v596
    %v2038 = vunpack.c.h.b16 %v596
    %v2039 = vunpack.c.l.b16 %v597
    %v2040 = vunpack.c.h.b16 %v597
    %v2041 = vunpack.c.l.b16 %v598
    %v2042 = vunpack.c.h.b16 %v598
    %v2043 = vunpack.c.l.b16 %v599
    %v2044 = vunpack.c.h.b16 %v599
    %v2045 = vunpack.c.l.b16 %v600
    %v2046 = vunpack.c.h.b16 %v600
    %v2047 = vunpack.c.l.b16 %v601
    %v2048 = vunpack.c.h.b16 %v601
    %v2049 = vunpack.c.l.b16 %v602
    %v2050 = vunpack.c.h.b16 %v602
    %v2051 = vunpack.c.l.b16 %v603
    %v2052 = vunpack.c.h.b16 %v603
    %v2053 = vunpack.c.l.b16 %v604
    %v2054 = vunpack.c.h.b16 %v604
    %v2055 = vunpack.c.l.b16 %v605
    %v2056 = vunpack.c.h.b16 %v605
    %v2057 = vunpack.c.l.b16 %v606
    %v2058 = vunpack.c.h.b16 %v606
    %v2059 = vunpack.c.l.b16 %v607
    %v2060 = vunpack.c.h.b16 %v607
    %v2061 = vunpack.c.l.b16 %v608
    %v2062 = vunpack.c.h.b16 %v608
    %v2063 = vunpack.c.l.b16 %v609
    %v2064 = vunpack.c.h.b16 %v609
    %v2065 = vunpack.c.l.b16 %v610
    %v2066 = vunpack.c.h.b16 %v610
    %v2067 = vunpack.c.l.b16 %v611
    %v2068 = vunpack.c.h.b16 %v611
    %v2069 = vunpack.c.l.b16 %v612
    %v2070 = vunpack.c.h.b16 %v612
    %v2071 = vunpack.c.l.b16 %v613
    %v2072 = vunpack.c.h.b16 %v613
    %v2073 = vunpack.c.l.b16 %v614
    %v2074 = vunpack.c.h.b16 %v614
    %v2075 = vunpack.c.l.b16 %v615
    %v2076 = vunpack.c.h.b16 %v615
    %v2077 = vunpack.c.l.b16 %v616
    %v2078 = vunpack.c.h.b16 %v616
    %v2079 = vunpack.c.l.b16 %v617
    %v2080 = vunpack.c.h.b16 %v617
    %v2081 = vunpack.c.l.b16 %v618
    %v2082 = vunpack.c.h.b16 %v618
    %v2083 = vunpack.c.l.b16 %v619
    %v2084 = vunpack.c.h.b16 %v619
    %v2085 = vunpack.c.l.b16 %v620
    %v2086 = vunpack.c.h.b16 %v620
    %v2087 = vunpack.c.l.b16 %v621
    %v2088 = vunpack.c.h.b16 %v621
    %v2089 = vunpack.c.l.b16 %v622
    %v2090 = vunpack.c.h.b16 %v622
    %v2091 = vunpack.c.l.b16 %v623
    %v2092 = vunpack.c.h.b16 %v623
    %v2093 = vunpack.c.l.b16 %v624
    %v2094 = vunpack.c.h.b16 %v624
    %v2095 = vunpack.c.l.b16 %v625
    %v2096 = vunpack.c.h.b16 %v625
    %v2097 = vunpack.c.l.b16 %v626
    %v2098 = vunpack.c.h.b16 %v626
    %v2099 = vunpack.c.l.b16 %v627
    %v2100 = vunpack.c.h.b16 %v627
    %v2101 = vunpack.c.l.b16 %v628
    %v2102 = vunpack.c.h.b16 %v628
    %v2103 = vunpack.c.l.b16 %v629
    %v2104 = vunpack.c.h.b16 %v629
    %v2105 = vunpack.c.l.b16 %v630
    %v2106 = vunpack.c.h.b16 %v630
    %v2107 = vunpack.c.l.b16 %v631
    %v2108 = vunpack.c.h.b16 %v631
    %v2109 = vunpack.c.l.b16 %v632
    %v2110 = vunpack.c.h.b16 %v632
    %v2111 = vunpack.c.l.b16 %v633
    %v2112 = vunpack.c.h.b16 %v633
    %v2113 = vunpack.c.l.b16 %v634
    %v2114 = vunpack.c.h.b16 %v634
    %v2115 = vunpack.c.l.b16 %v635
    %v2116 = vunpack.c.h.b16 %v635
    %v2117 = vunpack.c.l.b16 %v636
    %v2118 = vunpack.c.h.b16 %v636
    %v2119 = vunpack.c.l.b16 %v637
    %v2120 = vunpack.c.h.b16 %v637
    %v2121 = vunpack.c.l.b16 %v638
    %v2122 = vunpack.c.h.b16 %v638
    %v2123 = vunpack.c.l.b16 %v639
    %v2124 = vunpack.c.h.b16 %v639
    %v2125 = vunpack.c.l.b16 %v640
    %v2126 = vunpack.c.h.b16 %v640
    %v2127 = vunpack.c.l.b16 %v641
    %v2128 = vunpack.c.h.b16 %v641
    %v2129 = vunpack.c.l.b16 %v642
    %v2130 = vunpack.c.h.b16 %v642
    %v2131 = vunpack.c.l.b16 %v643
    %v2132 = vunpack.c.h.b16 %v643
    %v2133 = vunpack.c.l.b16 %v644
    %v2134 = vunpack.c.h.b16 %v644
    %v2135 = vunpack.c.l.b16 %v645
    %v2136 = vunpack.c.h.b16 %v645
    %v2137 = vunpack.c.l.b16 %v646
    %v2138 = vunpack.c.h.b16 %v646
    %v2139 = vunpack.c.l.b16 %v647
    %v2140 = vunpack.c.h.b16 %v647
    %v2141 = vunpack.c.l.b16 %v648
    %v2142 = vunpack.c.h.b16 %v648
    %v2143 = vunpack.c.l.b16 %v649
    %v2144 = vunpack.c.h.b16 %v649
    %v2145 = vunpack.c.l.b16 %v650
    %v2146 = vunpack.c.h.b16 %v650
    %v2147 = vunpack.c.l.b16 %v651
    %v2148 = vunpack.c.h.b16 %v651
    %v2149 = vunpack.c.l.b16 %v652
    %v2150 = vunpack.c.h.b16 %v652
    %v2151 = vunpack.c.l.b16 %v653
    %v2152 = vunpack.c.h.b16 %v653
    %v2153 = vunpack.c.l.b16 %v654
    %v2154 = vunpack.c.h.b16 %v654
    %v2155 = vunpack.c.l.b16 %v655
    %v2156 = vunpack.c.h.b16 %v655
    %v2157 = vunpack.c.l.b16 %v656
    %v2158 = vunpack.c.h.b16 %v656
    %v2159 = vunpack.c.l.b16 %v657
    %v2160 = vunpack.c.h.b16 %v657
    %v2161 = vunpack.c.l.b16 %v658
    %v2162 = vunpack.c.h.b16 %v658
    %v2163 = vunpack.c.l.b16 %v659
    %v2164 = vunpack.c.h.b16 %v659
    %v2165 = vunpack.c.l.b16 %v660
    %v2166 = vunpack.c.h.b16 %v660
    %v2167 = vunpack.c.l.b16 %v661
    %v2168 = vunpack.c.h.b16 %v661
    %v2169 = vunpack.c.l.b16 %v662
    %v2170 = vunpack.c.h.b16 %v662
    %v2171 = vunpack.c.l.b16 %v663
    %v2172 = vunpack.c.h.b16 %v663
    %v2173 = vunpack.c.l.b16 %v664
    %v2174 = vunpack.c.h.b16 %v664
    %v2175 = vunpack.c.l.b16 %v665
    %v2176 = vunpack.c.h.b16 %v665
    %v2177 = vunpack.c.l.b16 %v666
    %v2178 = vunpack.c.h.b16 %v666
    %v2179 = vunpack.c.l.b16 %v667
    %v2180 = vunpack.c.h.b16 %v667
    %v2181 = vunpack.c.l.b16 %v668
    %v2182 = vunpack.c.h.b16 %v668
    %v2183 = vunpack.c.l.b16 %v669
    %v2184 = vunpack.c.h.b16 %v669
    %v2185 = vunpack.c.l.b16 %v670
    %v2186 = vunpack.c.h.b16 %v670
    %v2187 = vunpack.c.l.b16 %v671
    %v2188 = vunpack.c.h.b16 %v671
    %v2189 = vunpack.c.l.b16 %v672
    %v2190 = vunpack.c.h.b16 %v672
    %v2191 = vunpack.c.l.b16 %v673
    %v2192 = vunpack.c.h.b16 %v673
    %v2193 = vunpack.c.l.b16 %v674
    %v2194 = vunpack.c.h.b16 %v674
    %v2195 = vunpack.c.l.b16 %v675
    %v2196 = vunpack.c.h.b16 %v675
    %v2197 = vunpack.c.l.b16 %v676
    %v2198 = vunpack.c.h.b16 %v676
    %v2199 = vunpack.c.l.b16 %v677
    %v2200 = vunpack.c.h.b16 %v677
    %v2201 = vunpack.c.l.b16 %v678
    %v2202 = vunpack.c.h.b16 %v678
    %v2203 = vunpack.c.l.b16 %v679
    %v2204 = vunpack.c.h.b16 %v679
    %v2205 = vunpack.c.l.b16 %v680
    %v2206 = vunpack.c.h.b16 %v680
    %v2207 = vunpack.c.l.b16 %v681
    %v2208 = vunpack.c.h.b16 %v681
    %v2209 = vunpack.c.l.b16 %v682
    %v2210 = vunpack.c.h.b16 %v682
    %v2211 = vunpack.c.l.b16 %v683
    %v2212 = vunpack.c.h.b16 %v683
    %v2213 = vunpack.c.l.b16 %v684
    %v2214 = vunpack.c.h.b16 %v684
    %v2215 = vunpack.c.l.b16 %v685
    %v2216 = vunpack.c.h.b16 %v685
    %v2217 = vunpack.c.l.b16 %v686
    %v2218 = vunpack.c.h.b16 %v686
    %v2219 = vunpack.c.l.b16 %v687
    %v2220 = vunpack.c.h.b16 %v687
    %v2221 = vunpack.c.l.b16 %v688
    %v2222 = vunpack.c.h.b16 %v688
    %v2223 = vunpack.c.l.b16 %v689
    %v2224 = vunpack.c.h.b16 %v689
    %v2225 = vunpack.c.l.b16 %v690
    %v2226 = vunpack.c.h.b16 %v690
    %v2227 = vunpack.c.l.b16 %v691
    %v2228 = vunpack.c.h.b16 %v691
    %v2229 = vunpack.c.l.b16 %v692
    %v2230 = vunpack.c.h.b16 %v692
    %v2231 = vunpack.c.l.b16 %v693
    %v2232 = vunpack.c.h.b16 %v693
    %v2233 = vunpack.c.l.b16 %v694
    %v2234 = vunpack.c.h.b16 %v694
    %v2235 = vunpack.c.l.b16 %v695
    %v2236 = vunpack.c.h.b16 %v695
    %v2237 = vunpack.c.l.b16 %v696
    %v2238 = vunpack.c.h.b16 %v696
    %v2239 = vunpack.c.l.b16 %v697
    %v2240 = vunpack.c.h.b16 %v697
    %v2241 = vunpack.c.l.b16 %v698
    %v2242 = vunpack.c.h.b16 %v698
    %v2243 = vunpack.c.l.b16 %v699
    %v2244 = vunpack.c.h.b16 %v699
    %v2245 = vunpack.c.l.b16 %v700
    %v2246 = vunpack.c.h.b16 %v700
    %v2247 = vunpack.c.l.b16 %v701
    %v2248 = vunpack.c.h.b16 %v701
    %v2249 = vunpack.c.l.b16 %v702
    %v2250 = vunpack.c.h.b16 %v702
    %v2251 = vunpack.c.l.b16 %v703
    %v2252 = vunpack.c.h.b16 %v703
    %v2253 = vunpack.c.l.b16 %v704
    %v2254 = vunpack.c.h.b16 %v704
    %v2255 = vunpack.c.l.b16 %v705
    %v2256 = vunpack.c.h.b16 %v705
    %v2257 = vunpack.c.l.b16 %v706
    %v2258 = vunpack.c.h.b16 %v706
    %v2259 = vunpack.c.l.b16 %v707
    %v2260 = vunpack.c.h.b16 %v707
    %v2261 = vunpack.c.l.b16 %v708
    %v2262 = vunpack.c.h.b16 %v708
    %v2263 = vpack.c.b16 %v1247, %v1239
    %v2264 = vpack.c.b16 %v1248, %v1240
    %v2265 = vpack.c.b16 %v1249, %v1241
    %v2266 = vpack.c.b16 %v1250, %v1242
    %v2267 = vpack.c.b16 %v1251, %v1243
    %v2268 = vpack.c.b16 %v1252, %v1244
    %v2269 = vpack.c.b16 %v1253, %v1245
    %v2270 = vpack.c.b16 %v1254, %v1246
    %v2271 = vpack.c.b16 %v1263, %v1255
    %v2272 = vpack.c.b16 %v1264, %v1256
    %v2273 = vpack.c.b16 %v1265, %v1257
    %v2274 = vpack.c.b16 %v1266, %v1258
    %v2275 = vpack.c.b16 %v1267, %v1259
    %v2276 = vpack.c.b16 %v1268, %v1260
    %v2277 = vpack.c.b16 %v1269, %v1261
    %v2278 = vpack.c.b16 %v1270, %v1262
    %v2279 = vpack.c.b16 %v1279, %v1271
    %v2280 = vpack.c.b16 %v1280, %v1272
    %v2281 = vpack.c.b16 %v1281, %v1273
    %v2282 = vpack.c.b16 %v1282, %v1274
    %v2283 = vpack.c.b16 %v1283, %v1275
    %v2284 = vpack.c.b16 %v1284, %v1276
    %v2285 = vpack.c.b16 %v1285, %v1277
    %v2286 = vpack.c.b16 %v1286, %v1278
    %v2287 = vpack.c.b16 %v1295, %v1287
    %v2288 = vpack.c.b16 %v1296, %v1288
    %v2289 = vpack.c.b16 %v1297, %v1289
    %v2290 = vpack.c.b16 %v1298, %v1290
    %v2291 = vpack.c.b16 %v1299, %v1291
    %v2292 = vpack.c.b16 %v1300, %v1292
    %v2293 = vpack.c.b16 %v1301, %v1293
    %v2294 = vpack.c.b16 %v1302, %v1294
    %v2295 = vpack.c.b16 %v1311, %v1303
    %v2296 = vpack.c.b16 %v1312, %v1304
    %v2297 = vpack.c.b16 %v1313, %v1305
    %v2298 = vpack.c.b16 %v1314, %v1306
    %v2299 = vpack.c.b16 %v1315, %v1307
    %v2300 = vpack.c.b16 %v1316, %v1308
    %v2301 = vpack.c.b16 %v1317, %v1309
    %v2302 = vpack.c.b16 %v1318, %v1310
    %v2303 = vpack.c.b16 %v1327, %v1319
    %v2304 = vpack.c.b16 %v1328, %v1320
    %v2305 = vpack.c.b16 %v1329, %v1321
    %v2306 = vpack.c.b16 %v1330, %v1322
    %v2307 = vpack.c.b16 %v1331, %v1323
    %v2308 = vpack.c.b16 %v1332, %v1324
    %v2309 = vpack.c.b16 %v1333, %v1325
    %v2310 = vpack.c.b16 %v1334, %v1326
    %v2311 = vpack.c.b16 %v1343, %v1335
    %v2312 = vpack.c.b16 %v1344, %v1336
    %v2313 = vpack.c.b16 %v1345, %v1337
    %v2314 = vpack.c.b16 %v1346, %v1338
    %v2315 = vpack.c.b16 %v1347, %v1339
    %v2316 = vpack.c.b16 %v1348, %v1340
    %v2317 = vpack.c.b16 %v1349, %v1341
    %v2318 = vpack.c.b16 %v1350, %v1342
    %v2319 = vpack.c.b16 %v1359, %v1351
    %v2320 = vpack.c.b16 %v1360, %v1352
    %v2321 = vpack.c.b16 %v1361, %v1353
    %v2322 = vpack.c.b16 %v1362, %v1354
    %v2323 = vpack.c.b16 %v1363, %v1355
    %v2324 = vpack.c.b16 %v1364, %v1356
    %v2325 = vpack.c.b16 %v1365, %v1357
    %v2326 = vpack.c.b16 %v1366, %v1358
    %v2327 = vpack.c.b16 %v1375, %v1367
    %v2328 = vpack.c.b16 %v1376, %v1368
    %v2329 = vpack.c.b16 %v1377, %v1369
    %v2330 = vpack.c.b16 %v1378, %v1370
    %v2331 = vpack.c.b16 %v1379, %v1371
    %v2332 = vpack.c.b16 %v1380, %v1372
    %v2333 = vpack.c.b16 %v1381, %v1373
    %v2334 = vpack.c.b16 %v1382, %v1374
    %v2335 = vpack.c.b16 %v1391, %v1383
    %v2336 = vpack.c.b16 %v1392, %v1384
    %v2337 = vpack.c.b16 %v1393, %v1385
    %v2338 = vpack.c.b16 %v1394, %v1386
    %v2339 = vpack.c.b16 %v1395, %v1387
    %v2340 = vpack.c.b16 %v1396, %v1388
    %v2341 = vpack.c.b16 %v1397, %v1389
    %v2342 = vpack.c.b16 %v1398, %v1390
    %v2343 = vpack.c.b16 %v1407, %v1399
    %v2344 = vpack.c.b16 %v1408, %v1400
    %v2345 = vpack.c.b16 %v1409, %v1401
    %v2346 = vpack.c.b16 %v1410, %v1402
    %v2347 = vpack.c.b16 %v1411, %v1403
    %v2348 = vpack.c.b16 %v1412, %v1404
    %v2349 = vpack.c.b16 %v1413, %v1405
    %v2350 = vpack.c.b16 %v1414, %v1406
    %v2351 = vpack.c.b16 %v1423, %v1415
    %v2352 = vpack.c.b16 %v1424, %v1416
    %v2353 = vpack.c.b16 %v1425, %v1417
    %v2354 = vpack.c.b16 %v1426, %v1418
    %v2355 = vpack.c.b16 %v1427, %v1419
    %v2356 = vpack.c.b16 %v1428, %v1420
    %v2357 = vpack.c.b16 %v1429, %v1421
    %v2358 = vpack.c.b16 %v1430, %v1422
    %v2359 = vpack.c.b16 %v1439, %v1431
    %v2360 = vpack.c.b16 %v1440, %v1432
    %v2361 = vpack.c.b16 %v1441, %v1433
    %v2362 = vpack.c.b16 %v1442, %v1434
    %v2363 = vpack.c.b16 %v1443, %v1435
    %v2364 = vpack.c.b16 %v1444, %v1436
    %v2365 = vpack.c.b16 %v1445, %v1437
    %v2366 = vpack.c.b16 %v1446, %v1438
    %v2367 = vpack.c.b16 %v1455, %v1447
    %v2368 = vpack.c.b16 %v1456, %v1448
    %v2369 = vpack.c.b16 %v1457, %v1449
    %v2370 = vpack.c.b16 %v1458, %v1450
    %v2371 = vpack.c.b16 %v1459, %v1451
    %v2372 = vpack.c.b16 %v1460, %v1452
    %v2373 = vpack.c.b16 %v1461, %v1453
    %v2374 = vpack.c.b16 %v1462, %v1454
    %v2375 = vpack.c.b16 %v1471, %v1463
    %v2376 = vpack.c.b16 %v1472, %v1464
    %v2377 = vpack.c.b16 %v1473, %v1465
    %v2378 = vpack.c.b16 %v1474, %v1466
    %v2379 = vpack.c.b16 %v1475, %v1467
    %v2380 = vpack.c.b16 %v1476, %v1468
    %v2381 = vpack.c.b16 %v1477, %v1469
    %v2382 = vpack.c.b16 %v1478, %v1470
    %v2383 = vpack.c.b16 %v1487, %v1479
    %v2384 = vpack.c.b16 %v1488, %v1480
    %v2385 = vpack.c.b16 %v1489, %v1481
    %v2386 = vpack.c.b16 %v1490, %v1482
    %v2387 = vpack.c.b16 %v1491, %v1483
    %v2388 = vpack.c.b16 %v1492, %v1484
    %v2389 = vpack.c.b16 %v1493, %v1485
    %v2390 = vpack.c.b16 %v1494, %v1486
    %v2391 = vpack.c.b16 %v1503, %v1495
    %v2392 = vpack.c.b16 %v1504, %v1496
    %v2393 = vpack.c.b16 %v1505, %v1497
    %v2394 = vpack.c.b16 %v1506, %v1498
    %v2395 = vpack.c.b16 %v1507, %v1499
    %v2396 = vpack.c.b16 %v1508, %v1500
    %v2397 = vpack.c.b16 %v1509, %v1501
    %v2398 = vpack.c.b16 %v1510, %v1502
    %v2399 = vpack.c.b16 %v1519, %v1511
    %v2400 = vpack.c.b16 %v1520, %v1512
    %v2401 = vpack.c.b16 %v1521, %v1513
    %v2402 = vpack.c.b16 %v1522, %v1514
    %v2403 = vpack.c.b16 %v1523, %v1515
    %v2404 = vpack.c.b16 %v1524, %v1516
    %v2405 = vpack.c.b16 %v1525, %v1517
    %v2406 = vpack.c.b16 %v1526, %v1518
    %v2407 = vpack.c.b16 %v1535, %v1527
    %v2408 = vpack.c.b16 %v1536, %v1528
    %v2409 = vpack.c.b16 %v1537, %v1529
    %v2410 = vpack.c.b16 %v1538, %v1530
    %v2411 = vpack.c.b16 %v1539, %v1531
    %v2412 = vpack.c.b16 %v1540, %v1532
    %v2413 = vpack.c.b16 %v1541, %v1533
    %v2414 = vpack.c.b16 %v1542, %v1534
    %v2415 = vpack.c.b16 %v1551, %v1543
    %v2416 = vpack.c.b16 %v1552, %v1544
    %v2417 = vpack.c.b16 %v1553, %v1545
    %v2418 = vpack.c.b16 %v1554, %v1546
    %v2419 = vpack.c.b16 %v1555, %v1547
    %v2420 = vpack.c.b16 %v1556, %v1548
    %v2421 = vpack.c.b16 %v1557, %v1549
    %v2422 = vpack.c.b16 %v1558, %v1550
    %v2423 = vpack.c.b16 %v1567, %v1559
    %v2424 = vpack.c.b16 %v1568, %v1560
    %v2425 = vpack.c.b16 %v1569, %v1561
    %v2426 = vpack.c.b16 %v1570, %v1562
    %v2427 = vpack.c.b16 %v1571, %v1563
    %v2428 = vpack.c.b16 %v1572, %v1564
    %v2429 = vpack.c.b16 %v1573, %v1565
    %v2430 = vpack.c.b16 %v1574, %v1566
    %v2431 = vpack.c.b16 %v1583, %v1575
    %v2432 = vpack.c.b16 %v1584, %v1576
    %v2433 = vpack.c.b16 %v1585, %v1577
    %v2434 = vpack.c.b16 %v1586, %v1578
    %v2435 = vpack.c.b16 %v1587, %v1579
    %v2436 = vpack.c.b16 %v1588, %v1580
    %v2437 = vpack.c.b16 %v1589, %v1581
    %v2438 = vpack.c.b16 %v1590, %v1582
    %v2439 = vpack.c.b16 %v1599, %v1591
    %v2440 = vpack.c.b16 %v1600, %v1592
    %v2441 = vpack.c.b16 %v1601, %v1593
    %v2442 = vpack.c.b16 %v1602, %v1594
    %v2443 = vpack.c.b16 %v1603, %v1595
    %v2444 = vpack.c.b16 %v1604, %v1596
    %v2445 = vpack.c.b16 %v1605, %v1597
    %v2446 = vpack.c.b16 %v1606, %v1598
    %v2447 = vpack.c.b16 %v1615, %v1607
    %v2448 = vpack.c.b16 %v1616, %v1608
    %v2449 = vpack.c.b16 %v1617, %v1609
    %v2450 = vpack.c.b16 %v1618, %v1610
    %v2451 = vpack.c.b16 %v1619, %v1611
    %v2452 = vpack.c.b16 %v1620, %v1612
    %v2453 = vpack.c.b16 %v1621, %v1613
    %v2454 = vpack.c.b16 %v1622, %v1614
    %v2455 = vpack.c.b16 %v1631, %v1623
    %v2456 = vpack.c.b16 %v1632, %v1624
    %v2457 = vpack.c.b16 %v1633, %v1625
    %v2458 = vpack.c.b16 %v1634, %v1626
    %v2459 = vpack.c.b16 %v1635, %v1627
    %v2460 = vpack.c.b16 %v1636, %v1628
    %v2461 = vpack.c.b16 %v1637, %v1629
    %v2462 = vpack.c.b16 %v1638, %v1630
    %v2463 = vpack.c.b16 %v1647, %v1639
    %v2464 = vpack.c.b16 %v1648, %v1640
    %v2465 = vpack.c.b16 %v1649, %v1641
    %v2466 = vpack.c.b16 %v1650, %v1642
    %v2467 = vpack.c.b16 %v1651, %v1643
    %v2468 = vpack.c.b16 %v1652, %v1644
    %v2469 = vpack.c.b16 %v1653, %v1645
    %v2470 = vpack.c.b16 %v1654, %v1646
    %v2471 = vpack.c.b16 %v1663, %v1655
    %v2472 = vpack.c.b16 %v1664, %v1656
    %v2473 = vpack.c.b16 %v1665, %v1657
    %v2474 = vpack.c.b16 %v1666, %v1658
    %v2475 = vpack.c.b16 %v1667, %v1659
    %v2476 = vpack.c.b16 %v1668, %v1660
    %v2477 = vpack.c.b16 %v1669, %v1661
    %v2478 = vpack.c.b16 %v1670, %v1662
    %v2479 = vpack.c.b16 %v1679, %v1671
    %v2480 = vpack.c.b16 %v1680, %v1672
    %v2481 = vpack.c.b16 %v1681, %v1673
    %v2482 = vpack.c.b16 %v1682, %v1674
    %v2483 = vpack.c.b16 %v1683, %v1675
    %v2484 = vpack.c.b16 %v1684, %v1676
    %v2485 = vpack.c.b16 %v1685, %v1677
    %v2486 = vpack.c.b16 %v1686, %v1678
    %v2487 = vpack.c.b16 %v1695, %v1687
    %v2488 = vpack.c.b16 %v1696, %v1688
    %v2489 = vpack.c.b16 %v1697, %v1689
    %v2490 = vpack.c.b16 %v1698, %v1690
    %v2491 = vpack.c.b16 %v1699, %v1691
    %v2492 = vpack.c.b16 %v1700, %v1692
    %v2493 = vpack.c.b16 %v1701, %v1693
    %v2494 = vpack.c.b16 %v1702, %v1694
    %v2495 = vpack.c.b16 %v1711, %v1703
    %v2496 = vpack.c.b16 %v1712, %v1704
    %v2497 = vpack.c.b16 %v1713, %v1705
    %v2498 = vpack.c.b16 %v1714, %v1706
    %v2499 = vpack.c.b16 %v1715, %v1707
    %v2500 = vpack.c.b16 %v1716, %v1708
    %v2501 = vpack.c.b16 %v1717, %v1709
    %v2502 = vpack.c.b16 %v1718, %v1710
    %v2503 = vpack.c.b16 %v1727, %v1719
    %v2504 = vpack.c.b16 %v1728, %v1720
    %v2505 = vpack.c.b16 %v1729, %v1721
    %v2506 = vpack.c.b16 %v1730, %v1722
    %v2507 = vpack.c.b16 %v1731, %v1723
    %v2508 = vpack.c.b16 %v1732, %v1724
    %v2509 = vpack.c.b16 %v1733, %v1725
    %v2510 = vpack.c.b16 %v1734, %v1726
    %v2511 = vpack.c.b16 %v1743, %v1735
    %v2512 = vpack.c.b16 %v1744, %v1736
    %v2513 = vpack.c.b16 %v1745, %v1737
    %v2514 = vpack.c.b16 %v1746, %v1738
    %v2515 = vpack.c.b16 %v1747, %v1739
    %v2516 = vpack.c.b16 %v1748, %v1740
    %v2517 = vpack.c.b16 %v1749, %v1741
    %v2518 = vpack.c.b16 %v1750, %v1742
    %v2519 = vpack.c.b16 %v1759, %v1751
    %v2520 = vpack.c.b16 %v1760, %v1752
    %v2521 = vpack.c.b16 %v1761, %v1753
    %v2522 = vpack.c.b16 %v1762, %v1754
    %v2523 = vpack.c.b16 %v1763, %v1755
    %v2524 = vpack.c.b16 %v1764, %v1756
    %v2525 = vpack.c.b16 %v1765, %v1757
    %v2526 = vpack.c.b16 %v1766, %v1758
    %v2527 = vpack.c.b16 %v1775, %v1767
    %v2528 = vpack.c.b16 %v1776, %v1768
    %v2529 = vpack.c.b16 %v1777, %v1769
    %v2530 = vpack.c.b16 %v1778, %v1770
    %v2531 = vpack.c.b16 %v1779, %v1771
    %v2532 = vpack.c.b16 %v1780, %v1772
    %v2533 = vpack.c.b16 %v1781, %v1773
    %v2534 = vpack.c.b16 %v1782, %v1774
    %v2535 = vpack.c.b16 %v1791, %v1783
    %v2536 = vpack.c.b16 %v1792, %v1784
    %v2537 = vpack.c.b16 %v1793, %v1785
    %v2538 = vpack.c.b16 %v1794, %v1786
    %v2539 = vpack.c.b16 %v1795, %v1787
    %v2540 = vpack.c.b16 %v1796, %v1788
    %v2541 = vpack.c.b16 %v1797, %v1789
    %v2542 = vpack.c.b16 %v1798, %v1790
    %v2543 = vpack.c.b16 %v1807, %v1799
    %v2544 = vpack.c.b16 %v1808, %v1800
    %v2545 = vpack.c.b16 %v1809, %v1801
    %v2546 = vpack.c.b16 %v1810, %v1802
    %v2547 = vpack.c.b16 %v1811, %v1803
    %v2548 = vpack.c.b16 %v1812, %v1804
    %v2549 = vpack.c.b16 %v1813, %v1805
    %v2550 = vpack.c.b16 %v1814, %v1806
    %v2551 = vpack.c.b16 %v1823, %v1815
    %v2552 = vpack.c.b16 %v1824, %v1816
    %v2553 = vpack.c.b16 %v1825, %v1817
    %v2554 = vpack.c.b16 %v1826, %v1818
    %v2555 = vpack.c.b16 %v1827, %v1819
    %v2556 = vpack.c.b16 %v1828, %v1820
    %v2557 = vpack.c.b16 %v1829, %v1821
    %v2558 = vpack.c.b16 %v1830, %v1822
    %v2559 = vpack.c.b16 %v1839, %v1831
    %v2560 = vpack.c.b16 %v1840, %v1832
    %v2561 = vpack.c.b16 %v1841, %v1833
    %v2562 = vpack.c.b16 %v1842, %v1834
    %v2563 = vpack.c.b16 %v1843, %v1835
    %v2564 = vpack.c.b16 %v1844, %v1836
    %v2565 = vpack.c.b16 %v1845, %v1837
    %v2566 = vpack.c.b16 %v1846, %v1838
    %v2567 = vpack.c.b16 %v1855, %v1847
    %v2568 = vpack.c.b16 %v1856, %v1848
    %v2569 = vpack.c.b16 %v1857, %v1849
    %v2570 = vpack.c.b16 %v1858, %v1850
    %v2571 = vpack.c.b16 %v1859, %v1851
    %v2572 = vpack.c.b16 %v1860, %v1852
    %v2573 = vpack.c.b16 %v1861, %v1853
    %v2574 = vpack.c.b16 %v1862, %v1854
    %v2575 = vpack.c.b16 %v1871, %v1863
    %v2576 = vpack.c.b16 %v1872, %v1864
    %v2577 = vpack.c.b16 %v1873, %v1865
    %v2578 = vpack.c.b16 %v1874, %v1866
    %v2579 = vpack.c.b16 %v1875, %v1867
    %v2580 = vpack.c.b16 %v1876, %v1868
    %v2581 = vpack.c.b16 %v1877, %v1869
    %v2582 = vpack.c.b16 %v1878, %v1870
    %v2583 = vpack.c.b16 %v1887, %v1879
    %v2584 = vpack.c.b16 %v1888, %v1880
    %v2585 = vpack.c.b16 %v1889, %v1881
    %v2586 = vpack.c.b16 %v1890, %v1882
    %v2587 = vpack.c.b16 %v1891, %v1883
    %v2588 = vpack.c.b16 %v1892, %v1884
    %v2589 = vpack.c.b16 %v1893, %v1885
    %v2590 = vpack.c.b16 %v1894, %v1886
    %v2591 = vpack.c.b16 %v1903, %v1895
    %v2592 = vpack.c.b16 %v1904, %v1896
    %v2593 = vpack.c.b16 %v1905, %v1897
    %v2594 = vpack.c.b16 %v1906, %v1898
    %v2595 = vpack.c.b16 %v1907, %v1899
    %v2596 = vpack.c.b16 %v1908, %v1900
    %v2597 = vpack.c.b16 %v1909, %v1901
    %v2598 = vpack.c.b16 %v1910, %v1902
    %v2599 = vpack.c.b16 %v1919, %v1911
    %v2600 = vpack.c.b16 %v1920, %v1912
    %v2601 = vpack.c.b16 %v1921, %v1913
    %v2602 = vpack.c.b16 %v1922, %v1914
    %v2603 = vpack.c.b16 %v1923, %v1915
    %v2604 = vpack.c.b16 %v1924, %v1916
    %v2605 = vpack.c.b16 %v1925, %v1917
    %v2606 = vpack.c.b16 %v1926, %v1918
    %v2607 = vpack.c.b16 %v1935, %v1927
    %v2608 = vpack.c.b16 %v1936, %v1928
    %v2609 = vpack.c.b16 %v1937, %v1929
    %v2610 = vpack.c.b16 %v1938, %v1930
    %v2611 = vpack.c.b16 %v1939, %v1931
    %v2612 = vpack.c.b16 %v1940, %v1932
    %v2613 = vpack.c.b16 %v1941, %v1933
    %v2614 = vpack.c.b16 %v1942, %v1934
    %v2615 = vpack.c.b16 %v1951, %v1943
    %v2616 = vpack.c.b16 %v1952, %v1944
    %v2617 = vpack.c.b16 %v1953, %v1945
    %v2618 = vpack.c.b16 %v1954, %v1946
    %v2619 = vpack.c.b16 %v1955, %v1947
    %v2620 = vpack.c.b16 %v1956, %v1948
    %v2621 = vpack.c.b16 %v1957, %v1949
    %v2622 = vpack.c.b16 %v1958, %v1950
    %v2623 = vpack.c.b16 %v1967, %v1959
    %v2624 = vpack.c.b16 %v1968, %v1960
    %v2625 = vpack.c.b16 %v1969, %v1961
    %v2626 = vpack.c.b16 %v1970, %v1962
    %v2627 = vpack.c.b16 %v1971, %v1963
    %v2628 = vpack.c.b16 %v1972, %v1964
    %v2629 = vpack.c.b16 %v1973, %v1965
    %v2630 = vpack.c.b16 %v1974, %v1966
    %v2631 = vpack.c.b16 %v1983, %v1975
    %v2632 = vpack.c.b16 %v1984, %v1976
    %v2633 = vpack.c.b16 %v1985, %v1977
    %v2634 = vpack.c.b16 %v1986, %v1978
    %v2635 = vpack.c.b16 %v1987, %v1979
    %v2636 = vpack.c.b16 %v1988, %v1980
    %v2637 = vpack.c.b16 %v1989, %v1981
    %v2638 = vpack.c.b16 %v1990, %v1982
    %v2639 = vpack.c.b16 %v1999, %v1991
    %v2640 = vpack.c.b16 %v2000, %v1992
    %v2641 = vpack.c.b16 %v2001, %v1993
    %v2642 = vpack.c.b16 %v2002, %v1994
    %v2643 = vpack.c.b16 %v2003, %v1995
    %v2644 = vpack.c.b16 %v2004, %v1996
    %v2645 = vpack.c.b16 %v2005, %v1997
    %v2646 = vpack.c.b16 %v2006, %v1998
    %v2647 = vpack.c.b16 %v2015, %v2007
    %v2648 = vpack.c.b16 %v2016, %v2008
    %v2649 = vpack.c.b16 %v2017, %v2009
    %v2650 = vpack.c.b16 %v2018, %v2010
    %v2651 = vpack.c.b16 %v2019, %v2011
    %v2652 = vpack.c.b16 %v2020, %v2012
    %v2653 = vpack.c.b16 %v2021, %v2013
    %v2654 = vpack.c.b16 %v2022, %v2014
    %v2655 = vpack.c.b16 %v2031, %v2023
    %v2656 = vpack.c.b16 %v2032, %v2024
    %v2657 = vpack.c.b16 %v2033, %v2025
    %v2658 = vpack.c.b16 %v2034, %v2026
    %v2659 = vpack.c.b16 %v2035, %v2027
    %v2660 = vpack.c.b16 %v2036, %v2028
    %v2661 = vpack.c.b16 %v2037, %v2029
    %v2662 = vpack.c.b16 %v2038, %v2030
    %v2663 = vpack.c.b16 %v2047, %v2039
    %v2664 = vpack.c.b16 %v2048, %v2040
    %v2665 = vpack.c.b16 %v2049, %v2041
    %v2666 = vpack.c.b16 %v2050, %v2042
    %v2667 = vpack.c.b16 %v2051, %v2043
    %v2668 = vpack.c.b16 %v2052, %v2044
    %v2669 = vpack.c.b16 %v2053, %v2045
    %v2670 = vpack.c.b16 %v2054, %v2046
    %v2671 = vpack.c.b16 %v2063, %v2055
    %v2672 = vpack.c.b16 %v2064, %v2056
    %v2673 = vpack.c.b16 %v2065, %v2057
    %v2674 = vpack.c.b16 %v2066, %v2058
    %v2675 = vpack.c.b16 %v2067, %v2059
    %v2676 = vpack.c.b16 %v2068, %v2060
    %v2677 = vpack.c.b16 %v2069, %v2061
    %v2678 = vpack.c.b16 %v2070, %v2062
    %v2679 = vpack.c.b16 %v2079, %v2071
    %v2680 = vpack.c.b16 %v2080, %v2072
    %v2681 = vpack.c.b16 %v2081, %v2073
    %v2682 = vpack.c.b16 %v2082, %v2074
    %v2683 = vpack.c.b16 %v2083, %v2075
    %v2684 = vpack.c.b16 %v2084, %v2076
    %v2685 = vpack.c.b16 %v2085, %v2077
    %v2686 = vpack.c.b16 %v2086, %v2078
    %v2687 = vpack.c.b16 %v2095, %v2087
    %v2688 = vpack.c.b16 %v2096, %v2088
    %v2689 = vpack.c.b16 %v2097, %v2089
    %v2690 = vpack.c.b16 %v2098, %v2090
    %v2691 = vpack.c.b16 %v2099, %v2091
    %v2692 = vpack.c.b16 %v2100, %v2092
    %v2693 = vpack.c.b16 %v2101, %v2093
    %v2694 = vpack.c.b16 %v2102, %v2094
    %v2695 = vpack.c.b16 %v2111, %v2103
    %v2696 = vpack.c.b16 %v2112, %v2104
    %v2697 = vpack.c.b16 %v2113, %v2105
    %v2698 = vpack.c.b16 %v2114, %v2106
    %v2699 = vpack.c.b16 %v2115, %v2107
    %v2700 = vpack.c.b16 %v2116, %v2108
    %v2701 = vpack.c.b16 %v2117, %v2109
    %v2702 = vpack.c.b16 %v2118, %v2110
    %v2703 = vpack.c.b16 %v2127, %v2119
    %v2704 = vpack.c.b16 %v2128, %v2120
    %v2705 = vpack.c.b16 %v2129, %v2121
    %v2706 = vpack.c.b16 %v2130, %v2122
    %v2707 = vpack.c.b16 %v2131, %v2123
    %v2708 = vpack.c.b16 %v2132, %v2124
    %v2709 = vpack.c.b16 %v2133, %v2125
    %v2710 = vpack.c.b16 %v2134, %v2126
    %v2711 = vpack.c.b16 %v2143, %v2135
    %v2712 = vpack.c.b16 %v2144, %v2136
    %v2713 = vpack.c.b16 %v2145, %v2137
    %v2714 = vpack.c.b16 %v2146, %v2138
    %v2715 = vpack.c.b16 %v2147, %v2139
    %v2716 = vpack.c.b16 %v2148, %v2140
    %v2717 = vpack.c.b16 %v2149, %v2141
    %v2718 = vpack.c.b16 %v2150, %v2142
    %v2719 = vpack.c.b16 %v2159, %v2151
    %v2720 = vpack.c.b16 %v2160, %v2152
    %v2721 = vpack.c.b16 %v2161, %v2153
    %v2722 = vpack.c.b16 %v2162, %v2154
    %v2723 = vpack.c.b16 %v2163, %v2155
    %v2724 = vpack.c.b16 %v2164, %v2156
    %v2725 = vpack.c.b16 %v2165, %v2157
    %v2726 = vpack.c.b16 %v2166, %v2158
    %v2727 = vpack.c.b16 %v2175, %v2167
    %v2728 = vpack.c.b16 %v2176, %v2168
    %v2729 = vpack.c.b16 %v2177, %v2169
    %v2730 = vpack.c.b16 %v2178, %v2170
    %v2731 = vpack.c.b16 %v2179, %v2171
    %v2732 = vpack.c.b16 %v2180, %v2172
    %v2733 = vpack.c.b16 %v2181, %v2173
    %v2734 = vpack.c.b16 %v2182, %v2174
    %v2735 = vpack.c.b16 %v2191, %v2183
    %v2736 = vpack.c.b16 %v2192, %v2184
    %v2737 = vpack.c.b16 %v2193, %v2185
    %v2738 = vpack.c.b16 %v2194, %v2186
    %v2739 = vpack.c.b16 %v2195, %v2187
    %v2740 = vpack.c.b16 %v2196, %v2188
    %v2741 = vpack.c.b16 %v2197, %v2189
    %v2742 = vpack.c.b16 %v2198, %v2190
    %v2743 = vpack.c.b16 %v2207, %v2199
    %v2744 = vpack.c.b16 %v2208, %v2200
    %v2745 = vpack.c.b16 %v2209, %v2201
    %v2746 = vpack.c.b16 %v2210, %v2202
    %v2747 = vpack.c.b16 %v2211, %v2203
    %v2748 = vpack.c.b16 %v2212, %v2204
    %v2749 = vpack.c.b16 %v2213, %v2205
    %v2750 = vpack.c.b16 %v2214, %v2206
    %v2751 = vpack.c.b16 %v2223, %v2215
    %v2752 = vpack.c.b16 %v2224, %v2216
    %v2753 = vpack.c.b16 %v2225, %v2217
    %v2754 = vpack.c.b16 %v2226, %v2218
    %v2755 = vpack.c.b16 %v2227, %v2219
    %v2756 = vpack.c.b16 %v2228, %v2220
    %v2757 = vpack.c.b16 %v2229, %v2221
    %v2758 = vpack.c.b16 %v2230, %v2222
    %v2759 = vpack.c.b16 %v2239, %v2231
    %v2760 = vpack.c.b16 %v2240, %v2232
    %v2761 = vpack.c.b16 %v2241, %v2233
    %v2762 = vpack.c.b16 %v2242, %v2234
    %v2763 = vpack.c.b16 %v2243, %v2235
    %v2764 = vpack.c.b16 %v2244, %v2236
    %v2765 = vpack.c.b16 %v2245, %v2237
    %v2766 = vpack.c.b16 %v2246, %v2238
    %v2767 = vpack.c.b16 %v2255, %v2247
    %v2768 = vpack.c.b16 %v2256, %v2248
    %v2769 = vpack.c.b16 %v2257, %v2249
    %v2770 = vpack.c.b16 %v2258, %v2250
    %v2771 = vpack.c.b16 %v2259, %v2251
    %v2772 = vpack.c.b16 %v2260, %v2252
    %v2773 = vpack.c.b16 %v2261, %v2253
    %v2774 = vpack.c.b16 %v2262, %v2254
    %3287 = vmatpush.bf16.msra.mxu0 %v2319
    %3288 = vmatpush.bf16.msra.mxu0 %v2311
    %3289 = vmatpush.bf16.msra.mxu0 %v2303
    %3290 = vmatpush.bf16.msra.mxu0 %v2295
    %3291 = vmatpush.bf16.msra.mxu0 %v2287
    %3292 = vmatpush.bf16.msra.mxu0 %v2279
    %3293 = vmatpush.bf16.msra.mxu0 %v2271
    %3294 = vmatpush.bf16.msra.mxu0 %v2263
    %3295 = vmatmul.bf16.gmra.mxu0 %v189
    %v3296 = vpop.f32.mrf.mxu0
    %v3297 = vadd.f32 %v711, %v3296
    %v3298 = vpop.f32.mrf.mxu0
    %v3299 = vadd.f32 %v711, %v3298
    %3300 = vdwg.mxu0
    %3301 = vmatpush.bf16.msra.mxu0 %v2383
    %3302 = vmatpush.bf16.msra.mxu0 %v2375
    %3303 = vmatpush.bf16.msra.mxu0 %v2367
    %3304 = vmatpush.bf16.msra.mxu0 %v2359
    %3305 = vmatpush.bf16.msra.mxu0 %v2351
    %3306 = vmatpush.bf16.msra.mxu0 %v2343
    %3307 = vmatpush.bf16.msra.mxu0 %v2335
    %3308 = vmatpush.bf16.msra.mxu0 %v2327
    %3309 = vmatmul.bf16.gmra.mxu0 %v190
    %v3310 = vpop.f32.mrf.mxu0
    %v3311 = vadd.f32 %v3297, %v3310
    %v3312 = vpop.f32.mrf.mxu0
    %v3313 = vadd.f32 %v3299, %v3312
    %3314 = vdwg.mxu0
    %3315 = vmatpush.bf16.msra.mxu0 %v2447
    %3316 = vmatpush.bf16.msra.mxu0 %v2439
    %3317 = vmatpush.bf16.msra.mxu0 %v2431
    %3318 = vmatpush.bf16.msra.mxu0 %v2423
    %3319 = vmatpush.bf16.msra.mxu0 %v2415
    %3320 = vmatpush.bf16.msra.mxu0 %v2407
    %3321 = vmatpush.bf16.msra.mxu0 %v2399
    %3322 = vmatpush.bf16.msra.mxu0 %v2391
    %3323 = vmatmul.bf16.gmra.mxu0 %v191
    %v3324 = vpop.f32.mrf.mxu0
    %v3325 = vadd.f32 %v3311, %v3324
    %v3326 = vpop.f32.mrf.mxu0
    %v3327 = vadd.f32 %v3313, %v3326
    %3328 = vdwg.mxu0
    %3329 = vmatpush.bf16.msra.mxu0 %v2511
    %3330 = vmatpush.bf16.msra.mxu0 %v2503
    %3331 = vmatpush.bf16.msra.mxu0 %v2495
    %3332 = vmatpush.bf16.msra.mxu0 %v2487
    %3333 = vmatpush.bf16.msra.mxu0 %v2479
    %3334 = vmatpush.bf16.msra.mxu0 %v2471
    %3335 = vmatpush.bf16.msra.mxu0 %v2463
    %3336 = vmatpush.bf16.msra.mxu0 %v2455
    %3337 = vmatmul.bf16.gmra.mxu0 %v192
    %v3338 = vpop.f32.mrf.mxu0
    %v3339 = vadd.f32 %v3325, %v3338
    %v3340 = vpop.f32.mrf.mxu0
    %v3341 = vadd.f32 %v3327, %v3340
    %3342 = vdwg.mxu0
    %3343 = vmatpush.bf16.msra.mxu0 %v2575
    %3344 = vmatpush.bf16.msra.mxu0 %v2567
    %3345 = vmatpush.bf16.msra.mxu0 %v2559
    %3346 = vmatpush.bf16.msra.mxu0 %v2551
    %3347 = vmatpush.bf16.msra.mxu0 %v2543
    %3348 = vmatpush.bf16.msra.mxu0 %v2535
    %3349 = vmatpush.bf16.msra.mxu0 %v2527
    %3350 = vmatpush.bf16.msra.mxu0 %v2519
    %3351 = vmatmul.bf16.gmra.mxu0 %v193
    %v3352 = vpop.f32.mrf.mxu0
    %v3353 = vadd.f32 %v3339, %v3352
    %v3354 = vpop.f32.mrf.mxu0
    %v3355 = vadd.f32 %v3341, %v3354
    %3356 = vdwg.mxu0
    %3357 = vmatpush.bf16.msra.mxu0 %v2639
    %3358 = vmatpush.bf16.msra.mxu0 %v2631
    %3359 = vmatpush.bf16.msra.mxu0 %v2623
    %3360 = vmatpush.bf16.msra.mxu0 %v2615
    %3361 = vmatpush.bf16.msra.mxu0 %v2607
    %3362 = vmatpush.bf16.msra.mxu0 %v2599
    %3363 = vmatpush.bf16.msra.mxu0 %v2591
    %3364 = vmatpush.bf16.msra.mxu0 %v2583
    %3365 = vmatmul.bf16.gmra.mxu0 %v194
    %v3366 = vpop.f32.mrf.mxu0
    %v3367 = vadd.f32 %v3353, %v3366
    %v3368 = vpop.f32.mrf.mxu0
    %v3369 = vadd.f32 %v3355, %v3368
    %3370 = vdwg.mxu0
    %3371 = vmatpush.bf16.msra.mxu0 %v2703
    %3372 = vmatpush.bf16.msra.mxu0 %v2695
    %3373 = vmatpush.bf16.msra.mxu0 %v2687
    %3374 = vmatpush.bf16.msra.mxu0 %v2679
    %3375 = vmatpush.bf16.msra.mxu0 %v2671
    %3376 = vmatpush.bf16.msra.mxu0 %v2663
    %3377 = vmatpush.bf16.msra.mxu0 %v2655
    %3378 = vmatpush.bf16.msra.mxu0 %v2647
    %3379 = vmatmul.bf16.gmra.mxu0 %v195
    %v3380 = vpop.f32.mrf.mxu0
    %v3381 = vadd.f32 %v3367, %v3380
    %v3382 = vpop.f32.mrf.mxu0
    %v3383 = vadd.f32 %v3369, %v3382
    %3384 = vdwg.mxu0
    %3385 = vmatpush.bf16.msra.mxu0 %v2767
    %3386 = vmatpush.bf16.msra.mxu0 %v2759
    %3387 = vmatpush.bf16.msra.mxu0 %v2751
    %3388 = vmatpush.bf16.msra.mxu0 %v2743
    %3389 = vmatpush.bf16.msra.mxu0 %v2735
    %3390 = vmatpush.bf16.msra.mxu0 %v2727
    %3391 = vmatpush.bf16.msra.mxu0 %v2719
    %3392 = vmatpush.bf16.msra.mxu0 %v2711
    %3393 = vmatmul.bf16.gmra.mxu0 %v196
    %v3394 = vpop.f32.mrf.mxu0
    %v3395 = vadd.f32 %v3381, %v3394
    %v3396 = vpop.f32.mrf.mxu0
    %v3397 = vadd.f32 %v3383, %v3396
    %3398 = vdwg.mxu0
    %3399 = vmatpush.bf16.msra.mxu0 %v2320
    %3400 = vmatpush.bf16.msra.mxu0 %v2312
    %3401 = vmatpush.bf16.msra.mxu0 %v2304
    %3402 = vmatpush.bf16.msra.mxu0 %v2296
    %3403 = vmatpush.bf16.msra.mxu0 %v2288
    %3404 = vmatpush.bf16.msra.mxu0 %v2280
    %3405 = vmatpush.bf16.msra.mxu0 %v2272
    %3406 = vmatpush.bf16.msra.mxu0 %v2264
    %3407 = vmatmul.bf16.gmra.mxu0 %v189
    %v3408 = vpop.f32.mrf.mxu0
    %v3409 = vadd.f32 %v712, %v3408
    %v3410 = vpop.f32.mrf.mxu0
    %v3411 = vadd.f32 %v712, %v3410
    %3412 = vdwg.mxu0
    %3413 = vmatpush.bf16.msra.mxu0 %v2384
    %3414 = vmatpush.bf16.msra.mxu0 %v2376
    %3415 = vmatpush.bf16.msra.mxu0 %v2368
    %3416 = vmatpush.bf16.msra.mxu0 %v2360
    %3417 = vmatpush.bf16.msra.mxu0 %v2352
    %3418 = vmatpush.bf16.msra.mxu0 %v2344
    %3419 = vmatpush.bf16.msra.mxu0 %v2336
    %3420 = vmatpush.bf16.msra.mxu0 %v2328
    %3421 = vmatmul.bf16.gmra.mxu0 %v190
    %v3422 = vpop.f32.mrf.mxu0
    %v3423 = vadd.f32 %v3409, %v3422
    %v3424 = vpop.f32.mrf.mxu0
    %v3425 = vadd.f32 %v3411, %v3424
    %3426 = vdwg.mxu0
    %3427 = vmatpush.bf16.msra.mxu0 %v2448
    %3428 = vmatpush.bf16.msra.mxu0 %v2440
    %3429 = vmatpush.bf16.msra.mxu0 %v2432
    %3430 = vmatpush.bf16.msra.mxu0 %v2424
    %3431 = vmatpush.bf16.msra.mxu0 %v2416
    %3432 = vmatpush.bf16.msra.mxu0 %v2408
    %3433 = vmatpush.bf16.msra.mxu0 %v2400
    %3434 = vmatpush.bf16.msra.mxu0 %v2392
    %3435 = vmatmul.bf16.gmra.mxu0 %v191
    %v3436 = vpop.f32.mrf.mxu0
    %v3437 = vadd.f32 %v3423, %v3436
    %v3438 = vpop.f32.mrf.mxu0
    %v3439 = vadd.f32 %v3425, %v3438
    %3440 = vdwg.mxu0
    %3441 = vmatpush.bf16.msra.mxu0 %v2512
    %3442 = vmatpush.bf16.msra.mxu0 %v2504
    %3443 = vmatpush.bf16.msra.mxu0 %v2496
    %3444 = vmatpush.bf16.msra.mxu0 %v2488
    %3445 = vmatpush.bf16.msra.mxu0 %v2480
    %3446 = vmatpush.bf16.msra.mxu0 %v2472
    %3447 = vmatpush.bf16.msra.mxu0 %v2464
    %3448 = vmatpush.bf16.msra.mxu0 %v2456
    %3449 = vmatmul.bf16.gmra.mxu0 %v192
    %v3450 = vpop.f32.mrf.mxu0
    %v3451 = vadd.f32 %v3437, %v3450
    %v3452 = vpop.f32.mrf.mxu0
    %v3453 = vadd.f32 %v3439, %v3452
    %3454 = vdwg.mxu0
    %3455 = vmatpush.bf16.msra.mxu0 %v2576
    %3456 = vmatpush.bf16.msra.mxu0 %v2568
    %3457 = vmatpush.bf16.msra.mxu0 %v2560
    %3458 = vmatpush.bf16.msra.mxu0 %v2552
    %3459 = vmatpush.bf16.msra.mxu0 %v2544
    %3460 = vmatpush.bf16.msra.mxu0 %v2536
    %3461 = vmatpush.bf16.msra.mxu0 %v2528
    %3462 = vmatpush.bf16.msra.mxu0 %v2520
    %3463 = vmatmul.bf16.gmra.mxu0 %v193
    %v3464 = vpop.f32.mrf.mxu0
    %v3465 = vadd.f32 %v3451, %v3464
    %v3466 = vpop.f32.mrf.mxu0
    %v3467 = vadd.f32 %v3453, %v3466
    %3468 = vdwg.mxu0
    %3469 = vmatpush.bf16.msra.mxu0 %v2640
    %3470 = vmatpush.bf16.msra.mxu0 %v2632
    %3471 = vmatpush.bf16.msra.mxu0 %v2624
    %3472 = vmatpush.bf16.msra.mxu0 %v2616
    %3473 = vmatpush.bf16.msra.mxu0 %v2608
    %3474 = vmatpush.bf16.msra.mxu0 %v2600
    %3475 = vmatpush.bf16.msra.mxu0 %v2592
    %3476 = vmatpush.bf16.msra.mxu0 %v2584
    %3477 = vmatmul.bf16.gmra.mxu0 %v194
    %v3478 = vpop.f32.mrf.mxu0
    %v3479 = vadd.f32 %v3465, %v3478
    %v3480 = vpop.f32.mrf.mxu0
    %v3481 = vadd.f32 %v3467, %v3480
    %3482 = vdwg.mxu0
    %3483 = vmatpush.bf16.msra.mxu0 %v2704
    %3484 = vmatpush.bf16.msra.mxu0 %v2696
    %3485 = vmatpush.bf16.msra.mxu0 %v2688
    %3486 = vmatpush.bf16.msra.mxu0 %v2680
    %3487 = vmatpush.bf16.msra.mxu0 %v2672
    %3488 = vmatpush.bf16.msra.mxu0 %v2664
    %3489 = vmatpush.bf16.msra.mxu0 %v2656
    %3490 = vmatpush.bf16.msra.mxu0 %v2648
    %3491 = vmatmul.bf16.gmra.mxu0 %v195
    %v3492 = vpop.f32.mrf.mxu0
    %v3493 = vadd.f32 %v3479, %v3492
    %v3494 = vpop.f32.mrf.mxu0
    %v3495 = vadd.f32 %v3481, %v3494
    %3496 = vdwg.mxu0
    %3497 = vmatpush.bf16.msra.mxu0 %v2768
    %3498 = vmatpush.bf16.msra.mxu0 %v2760
    %3499 = vmatpush.bf16.msra.mxu0 %v2752
    %3500 = vmatpush.bf16.msra.mxu0 %v2744
    %3501 = vmatpush.bf16.msra.mxu0 %v2736
    %3502 = vmatpush.bf16.msra.mxu0 %v2728
    %3503 = vmatpush.bf16.msra.mxu0 %v2720
    %3504 = vmatpush.bf16.msra.mxu0 %v2712
    %3505 = vmatmul.bf16.gmra.mxu0 %v196
    %v3506 = vpop.f32.mrf.mxu0
    %v3507 = vadd.f32 %v3493, %v3506
    %v3508 = vpop.f32.mrf.mxu0
    %v3509 = vadd.f32 %v3495, %v3508
    %3510 = vdwg.mxu0
    %3511 = vmatpush.bf16.msra.mxu0 %v2321
    %3512 = vmatpush.bf16.msra.mxu0 %v2313
    %3513 = vmatpush.bf16.msra.mxu0 %v2305
    %3514 = vmatpush.bf16.msra.mxu0 %v2297
    %3515 = vmatpush.bf16.msra.mxu0 %v2289
    %3516 = vmatpush.bf16.msra.mxu0 %v2281
    %3517 = vmatpush.bf16.msra.mxu0 %v2273
    %3518 = vmatpush.bf16.msra.mxu0 %v2265
    %3519 = vmatmul.bf16.gmra.mxu0 %v189
    %v3520 = vpop.f32.mrf.mxu0
    %v3521 = vadd.f32 %v713, %v3520
    %v3522 = vpop.f32.mrf.mxu0
    %v3523 = vadd.f32 %v713, %v3522
    %3524 = vdwg.mxu0
    %3525 = vmatpush.bf16.msra.mxu0 %v2385
    %3526 = vmatpush.bf16.msra.mxu0 %v2377
    %3527 = vmatpush.bf16.msra.mxu0 %v2369
    %3528 = vmatpush.bf16.msra.mxu0 %v2361
    %3529 = vmatpush.bf16.msra.mxu0 %v2353
    %3530 = vmatpush.bf16.msra.mxu0 %v2345
    %3531 = vmatpush.bf16.msra.mxu0 %v2337
    %3532 = vmatpush.bf16.msra.mxu0 %v2329
    %3533 = vmatmul.bf16.gmra.mxu0 %v190
    %v3534 = vpop.f32.mrf.mxu0
    %v3535 = vadd.f32 %v3521, %v3534
    %v3536 = vpop.f32.mrf.mxu0
    %v3537 = vadd.f32 %v3523, %v3536
    %3538 = vdwg.mxu0
    %3539 = vmatpush.bf16.msra.mxu0 %v2449
    %3540 = vmatpush.bf16.msra.mxu0 %v2441
    %3541 = vmatpush.bf16.msra.mxu0 %v2433
    %3542 = vmatpush.bf16.msra.mxu0 %v2425
    %3543 = vmatpush.bf16.msra.mxu0 %v2417
    %3544 = vmatpush.bf16.msra.mxu0 %v2409
    %3545 = vmatpush.bf16.msra.mxu0 %v2401
    %3546 = vmatpush.bf16.msra.mxu0 %v2393
    %3547 = vmatmul.bf16.gmra.mxu0 %v191
    %v3548 = vpop.f32.mrf.mxu0
    %v3549 = vadd.f32 %v3535, %v3548
    %v3550 = vpop.f32.mrf.mxu0
    %v3551 = vadd.f32 %v3537, %v3550
    %3552 = vdwg.mxu0
    %3553 = vmatpush.bf16.msra.mxu0 %v2513
    %3554 = vmatpush.bf16.msra.mxu0 %v2505
    %3555 = vmatpush.bf16.msra.mxu0 %v2497
    %3556 = vmatpush.bf16.msra.mxu0 %v2489
    %3557 = vmatpush.bf16.msra.mxu0 %v2481
    %3558 = vmatpush.bf16.msra.mxu0 %v2473
    %3559 = vmatpush.bf16.msra.mxu0 %v2465
    %3560 = vmatpush.bf16.msra.mxu0 %v2457
    %3561 = vmatmul.bf16.gmra.mxu0 %v192
    %v3562 = vpop.f32.mrf.mxu0
    %v3563 = vadd.f32 %v3549, %v3562
    %v3564 = vpop.f32.mrf.mxu0
    %v3565 = vadd.f32 %v3551, %v3564
    %3566 = vdwg.mxu0
    %3567 = vmatpush.bf16.msra.mxu0 %v2577
    %3568 = vmatpush.bf16.msra.mxu0 %v2569
    %3569 = vmatpush.bf16.msra.mxu0 %v2561
    %3570 = vmatpush.bf16.msra.mxu0 %v2553
    %3571 = vmatpush.bf16.msra.mxu0 %v2545
    %3572 = vmatpush.bf16.msra.mxu0 %v2537
    %3573 = vmatpush.bf16.msra.mxu0 %v2529
    %3574 = vmatpush.bf16.msra.mxu0 %v2521
    %3575 = vmatmul.bf16.gmra.mxu0 %v193
    %v3576 = vpop.f32.mrf.mxu0
    %v3577 = vadd.f32 %v3563, %v3576
    %v3578 = vpop.f32.mrf.mxu0
    %v3579 = vadd.f32 %v3565, %v3578
    %3580 = vdwg.mxu0
    %3581 = vmatpush.bf16.msra.mxu0 %v2641
    %3582 = vmatpush.bf16.msra.mxu0 %v2633
    %3583 = vmatpush.bf16.msra.mxu0 %v2625
    %3584 = vmatpush.bf16.msra.mxu0 %v2617
    %3585 = vmatpush.bf16.msra.mxu0 %v2609
    %3586 = vmatpush.bf16.msra.mxu0 %v2601
    %3587 = vmatpush.bf16.msra.mxu0 %v2593
    %3588 = vmatpush.bf16.msra.mxu0 %v2585
    %3589 = vmatmul.bf16.gmra.mxu0 %v194
    %v3590 = vpop.f32.mrf.mxu0
    %v3591 = vadd.f32 %v3577, %v3590
    %v3592 = vpop.f32.mrf.mxu0
    %v3593 = vadd.f32 %v3579, %v3592
    %3594 = vdwg.mxu0
    %3595 = vmatpush.bf16.msra.mxu0 %v2705
    %3596 = vmatpush.bf16.msra.mxu0 %v2697
    %3597 = vmatpush.bf16.msra.mxu0 %v2689
    %3598 = vmatpush.bf16.msra.mxu0 %v2681
    %3599 = vmatpush.bf16.msra.mxu0 %v2673
    %3600 = vmatpush.bf16.msra.mxu0 %v2665
    %3601 = vmatpush.bf16.msra.mxu0 %v2657
    %3602 = vmatpush.bf16.msra.mxu0 %v2649
    %3603 = vmatmul.bf16.gmra.mxu0 %v195
    %v3604 = vpop.f32.mrf.mxu0
    %v3605 = vadd.f32 %v3591, %v3604
    %v3606 = vpop.f32.mrf.mxu0
    %v3607 = vadd.f32 %v3593, %v3606
    %3608 = vdwg.mxu0
    %3609 = vmatpush.bf16.msra.mxu0 %v2769
    %3610 = vmatpush.bf16.msra.mxu0 %v2761
    %3611 = vmatpush.bf16.msra.mxu0 %v2753
    %3612 = vmatpush.bf16.msra.mxu0 %v2745
    %3613 = vmatpush.bf16.msra.mxu0 %v2737
    %3614 = vmatpush.bf16.msra.mxu0 %v2729
    %3615 = vmatpush.bf16.msra.mxu0 %v2721
    %3616 = vmatpush.bf16.msra.mxu0 %v2713
    %3617 = vmatmul.bf16.gmra.mxu0 %v196
    %v3618 = vpop.f32.mrf.mxu0
    %v3619 = vadd.f32 %v3605, %v3618
    %v3620 = vpop.f32.mrf.mxu0
    %v3621 = vadd.f32 %v3607, %v3620
    %3622 = vdwg.mxu0
    %3623 = vmatpush.bf16.msra.mxu0 %v2322
    %3624 = vmatpush.bf16.msra.mxu0 %v2314
    %3625 = vmatpush.bf16.msra.mxu0 %v2306
    %3626 = vmatpush.bf16.msra.mxu0 %v2298
    %3627 = vmatpush.bf16.msra.mxu0 %v2290
    %3628 = vmatpush.bf16.msra.mxu0 %v2282
    %3629 = vmatpush.bf16.msra.mxu0 %v2274
    %3630 = vmatpush.bf16.msra.mxu0 %v2266
    %3631 = vmatmul.bf16.gmra.mxu0 %v189
    %v3632 = vpop.f32.mrf.mxu0
    %v3633 = vadd.f32 %v714, %v3632
    %v3634 = vpop.f32.mrf.mxu0
    %v3635 = vadd.f32 %v714, %v3634
    %3636 = vdwg.mxu0
    %3637 = vmatpush.bf16.msra.mxu0 %v2386
    %3638 = vmatpush.bf16.msra.mxu0 %v2378
    %3639 = vmatpush.bf16.msra.mxu0 %v2370
    %3640 = vmatpush.bf16.msra.mxu0 %v2362
    %3641 = vmatpush.bf16.msra.mxu0 %v2354
    %3642 = vmatpush.bf16.msra.mxu0 %v2346
    %3643 = vmatpush.bf16.msra.mxu0 %v2338
    %3644 = vmatpush.bf16.msra.mxu0 %v2330
    %3645 = vmatmul.bf16.gmra.mxu0 %v190
    %v3646 = vpop.f32.mrf.mxu0
    %v3647 = vadd.f32 %v3633, %v3646
    %v3648 = vpop.f32.mrf.mxu0
    %v3649 = vadd.f32 %v3635, %v3648
    %3650 = vdwg.mxu0
    %3651 = vmatpush.bf16.msra.mxu0 %v2450
    %3652 = vmatpush.bf16.msra.mxu0 %v2442
    %3653 = vmatpush.bf16.msra.mxu0 %v2434
    %3654 = vmatpush.bf16.msra.mxu0 %v2426
    %3655 = vmatpush.bf16.msra.mxu0 %v2418
    %3656 = vmatpush.bf16.msra.mxu0 %v2410
    %3657 = vmatpush.bf16.msra.mxu0 %v2402
    %3658 = vmatpush.bf16.msra.mxu0 %v2394
    %3659 = vmatmul.bf16.gmra.mxu0 %v191
    %v3660 = vpop.f32.mrf.mxu0
    %v3661 = vadd.f32 %v3647, %v3660
    %v3662 = vpop.f32.mrf.mxu0
    %v3663 = vadd.f32 %v3649, %v3662
    %3664 = vdwg.mxu0
    %3665 = vmatpush.bf16.msra.mxu0 %v2514
    %3666 = vmatpush.bf16.msra.mxu0 %v2506
    %3667 = vmatpush.bf16.msra.mxu0 %v2498
    %3668 = vmatpush.bf16.msra.mxu0 %v2490
    %3669 = vmatpush.bf16.msra.mxu0 %v2482
    %3670 = vmatpush.bf16.msra.mxu0 %v2474
    %3671 = vmatpush.bf16.msra.mxu0 %v2466
    %3672 = vmatpush.bf16.msra.mxu0 %v2458
    %3673 = vmatmul.bf16.gmra.mxu0 %v192
    %v3674 = vpop.f32.mrf.mxu0
    %v3675 = vadd.f32 %v3661, %v3674
    %v3676 = vpop.f32.mrf.mxu0
    %v3677 = vadd.f32 %v3663, %v3676
    %3678 = vdwg.mxu0
    %3679 = vmatpush.bf16.msra.mxu0 %v2578
    %3680 = vmatpush.bf16.msra.mxu0 %v2570
    %3681 = vmatpush.bf16.msra.mxu0 %v2562
    %3682 = vmatpush.bf16.msra.mxu0 %v2554
    %3683 = vmatpush.bf16.msra.mxu0 %v2546
    %3684 = vmatpush.bf16.msra.mxu0 %v2538
    %3685 = vmatpush.bf16.msra.mxu0 %v2530
    %3686 = vmatpush.bf16.msra.mxu0 %v2522
    %3687 = vmatmul.bf16.gmra.mxu0 %v193
    %v3688 = vpop.f32.mrf.mxu0
    %v3689 = vadd.f32 %v3675, %v3688
    %v3690 = vpop.f32.mrf.mxu0
    %v3691 = vadd.f32 %v3677, %v3690
    %3692 = vdwg.mxu0
    %3693 = vmatpush.bf16.msra.mxu0 %v2642
    %3694 = vmatpush.bf16.msra.mxu0 %v2634
    %3695 = vmatpush.bf16.msra.mxu0 %v2626
    %3696 = vmatpush.bf16.msra.mxu0 %v2618
    %3697 = vmatpush.bf16.msra.mxu0 %v2610
    %3698 = vmatpush.bf16.msra.mxu0 %v2602
    %3699 = vmatpush.bf16.msra.mxu0 %v2594
    %3700 = vmatpush.bf16.msra.mxu0 %v2586
    %3701 = vmatmul.bf16.gmra.mxu0 %v194
    %v3702 = vpop.f32.mrf.mxu0
    %v3703 = vadd.f32 %v3689, %v3702
    %v3704 = vpop.f32.mrf.mxu0
    %v3705 = vadd.f32 %v3691, %v3704
    %3706 = vdwg.mxu0
    %3707 = vmatpush.bf16.msra.mxu0 %v2706
    %3708 = vmatpush.bf16.msra.mxu0 %v2698
    %3709 = vmatpush.bf16.msra.mxu0 %v2690
    %3710 = vmatpush.bf16.msra.mxu0 %v2682
    %3711 = vmatpush.bf16.msra.mxu0 %v2674
    %3712 = vmatpush.bf16.msra.mxu0 %v2666
    %3713 = vmatpush.bf16.msra.mxu0 %v2658
    %3714 = vmatpush.bf16.msra.mxu0 %v2650
    %3715 = vmatmul.bf16.gmra.mxu0 %v195
    %v3716 = vpop.f32.mrf.mxu0
    %v3717 = vadd.f32 %v3703, %v3716
    %v3718 = vpop.f32.mrf.mxu0
    %v3719 = vadd.f32 %v3705, %v3718
    %3720 = vdwg.mxu0
    %3721 = vmatpush.bf16.msra.mxu0 %v2770
    %3722 = vmatpush.bf16.msra.mxu0 %v2762
    %3723 = vmatpush.bf16.msra.mxu0 %v2754
    %3724 = vmatpush.bf16.msra.mxu0 %v2746
    %3725 = vmatpush.bf16.msra.mxu0 %v2738
    %3726 = vmatpush.bf16.msra.mxu0 %v2730
    %3727 = vmatpush.bf16.msra.mxu0 %v2722
    %3728 = vmatpush.bf16.msra.mxu0 %v2714
    %3729 = vmatmul.bf16.gmra.mxu0 %v196
    %v3730 = vpop.f32.mrf.mxu0
    %v3731 = vadd.f32 %v3717, %v3730
    %v3732 = vpop.f32.mrf.mxu0
    %v3733 = vadd.f32 %v3719, %v3732
    %3734 = vdwg.mxu0
    %3735 = vmatpush.bf16.msra.mxu0 %v2323
    %3736 = vmatpush.bf16.msra.mxu0 %v2315
    %3737 = vmatpush.bf16.msra.mxu0 %v2307
    %3738 = vmatpush.bf16.msra.mxu0 %v2299
    %3739 = vmatpush.bf16.msra.mxu0 %v2291
    %3740 = vmatpush.bf16.msra.mxu0 %v2283
    %3741 = vmatpush.bf16.msra.mxu0 %v2275
    %3742 = vmatpush.bf16.msra.mxu0 %v2267
    %3743 = vmatmul.bf16.gmra.mxu0 %v189
    %v3744 = vpop.f32.mrf.mxu0
    %v3745 = vadd.f32 %v715, %v3744
    %v3746 = vpop.f32.mrf.mxu0
    %v3747 = vadd.f32 %v715, %v3746
    %3748 = vdwg.mxu0
    %3749 = vmatpush.bf16.msra.mxu0 %v2387
    %3750 = vmatpush.bf16.msra.mxu0 %v2379
    %3751 = vmatpush.bf16.msra.mxu0 %v2371
    %3752 = vmatpush.bf16.msra.mxu0 %v2363
    %3753 = vmatpush.bf16.msra.mxu0 %v2355
    %3754 = vmatpush.bf16.msra.mxu0 %v2347
    %3755 = vmatpush.bf16.msra.mxu0 %v2339
    %3756 = vmatpush.bf16.msra.mxu0 %v2331
    %3757 = vmatmul.bf16.gmra.mxu0 %v190
    %v3758 = vpop.f32.mrf.mxu0
    %v3759 = vadd.f32 %v3745, %v3758
    %v3760 = vpop.f32.mrf.mxu0
    %v3761 = vadd.f32 %v3747, %v3760
    %3762 = vdwg.mxu0
    %3763 = vmatpush.bf16.msra.mxu0 %v2451
    %3764 = vmatpush.bf16.msra.mxu0 %v2443
    %3765 = vmatpush.bf16.msra.mxu0 %v2435
    %3766 = vmatpush.bf16.msra.mxu0 %v2427
    %3767 = vmatpush.bf16.msra.mxu0 %v2419
    %3768 = vmatpush.bf16.msra.mxu0 %v2411
    %3769 = vmatpush.bf16.msra.mxu0 %v2403
    %3770 = vmatpush.bf16.msra.mxu0 %v2395
    %3771 = vmatmul.bf16.gmra.mxu0 %v191
    %v3772 = vpop.f32.mrf.mxu0
    %v3773 = vadd.f32 %v3759, %v3772
    %v3774 = vpop.f32.mrf.mxu0
    %v3775 = vadd.f32 %v3761, %v3774
    %3776 = vdwg.mxu0
    %3777 = vmatpush.bf16.msra.mxu0 %v2515
    %3778 = vmatpush.bf16.msra.mxu0 %v2507
    %3779 = vmatpush.bf16.msra.mxu0 %v2499
    %3780 = vmatpush.bf16.msra.mxu0 %v2491
    %3781 = vmatpush.bf16.msra.mxu0 %v2483
    %3782 = vmatpush.bf16.msra.mxu0 %v2475
    %3783 = vmatpush.bf16.msra.mxu0 %v2467
    %3784 = vmatpush.bf16.msra.mxu0 %v2459
    %3785 = vmatmul.bf16.gmra.mxu0 %v192
    %v3786 = vpop.f32.mrf.mxu0
    %v3787 = vadd.f32 %v3773, %v3786
    %v3788 = vpop.f32.mrf.mxu0
    %v3789 = vadd.f32 %v3775, %v3788
    %3790 = vdwg.mxu0
    %3791 = vmatpush.bf16.msra.mxu0 %v2579
    %3792 = vmatpush.bf16.msra.mxu0 %v2571
    %3793 = vmatpush.bf16.msra.mxu0 %v2563
    %3794 = vmatpush.bf16.msra.mxu0 %v2555
    %3795 = vmatpush.bf16.msra.mxu0 %v2547
    %3796 = vmatpush.bf16.msra.mxu0 %v2539
    %3797 = vmatpush.bf16.msra.mxu0 %v2531
    %3798 = vmatpush.bf16.msra.mxu0 %v2523
    %3799 = vmatmul.bf16.gmra.mxu0 %v193
    %v3800 = vpop.f32.mrf.mxu0
    %v3801 = vadd.f32 %v3787, %v3800
    %v3802 = vpop.f32.mrf.mxu0
    %v3803 = vadd.f32 %v3789, %v3802
    %3804 = vdwg.mxu0
    %3805 = vmatpush.bf16.msra.mxu0 %v2643
    %3806 = vmatpush.bf16.msra.mxu0 %v2635
    %3807 = vmatpush.bf16.msra.mxu0 %v2627
    %3808 = vmatpush.bf16.msra.mxu0 %v2619
    %3809 = vmatpush.bf16.msra.mxu0 %v2611
    %3810 = vmatpush.bf16.msra.mxu0 %v2603
    %3811 = vmatpush.bf16.msra.mxu0 %v2595
    %3812 = vmatpush.bf16.msra.mxu0 %v2587
    %3813 = vmatmul.bf16.gmra.mxu0 %v194
    %v3814 = vpop.f32.mrf.mxu0
    %v3815 = vadd.f32 %v3801, %v3814
    %v3816 = vpop.f32.mrf.mxu0
    %v3817 = vadd.f32 %v3803, %v3816
    %3818 = vdwg.mxu0
    %3819 = vmatpush.bf16.msra.mxu0 %v2707
    %3820 = vmatpush.bf16.msra.mxu0 %v2699
    %3821 = vmatpush.bf16.msra.mxu0 %v2691
    %3822 = vmatpush.bf16.msra.mxu0 %v2683
    %3823 = vmatpush.bf16.msra.mxu0 %v2675
    %3824 = vmatpush.bf16.msra.mxu0 %v2667
    %3825 = vmatpush.bf16.msra.mxu0 %v2659
    %3826 = vmatpush.bf16.msra.mxu0 %v2651
    %3827 = vmatmul.bf16.gmra.mxu0 %v195
    %v3828 = vpop.f32.mrf.mxu0
    %v3829 = vadd.f32 %v3815, %v3828
    %v3830 = vpop.f32.mrf.mxu0
    %v3831 = vadd.f32 %v3817, %v3830
    %3832 = vdwg.mxu0
    %3833 = vmatpush.bf16.msra.mxu0 %v2771
    %3834 = vmatpush.bf16.msra.mxu0 %v2763
    %3835 = vmatpush.bf16.msra.mxu0 %v2755
    %3836 = vmatpush.bf16.msra.mxu0 %v2747
    %3837 = vmatpush.bf16.msra.mxu0 %v2739
    %3838 = vmatpush.bf16.msra.mxu0 %v2731
    %3839 = vmatpush.bf16.msra.mxu0 %v2723
    %3840 = vmatpush.bf16.msra.mxu0 %v2715
    %3841 = vmatmul.bf16.gmra.mxu0 %v196
    %v3842 = vpop.f32.mrf.mxu0
    %v3843 = vadd.f32 %v3829, %v3842
    %v3844 = vpop.f32.mrf.mxu0
    %v3845 = vadd.f32 %v3831, %v3844
    %3846 = vdwg.mxu0
    %3847 = vmatpush.bf16.msra.mxu0 %v2324
    %3848 = vmatpush.bf16.msra.mxu0 %v2316
    %3849 = vmatpush.bf16.msra.mxu0 %v2308
    %3850 = vmatpush.bf16.msra.mxu0 %v2300
    %3851 = vmatpush.bf16.msra.mxu0 %v2292
    %3852 = vmatpush.bf16.msra.mxu0 %v2284
    %3853 = vmatpush.bf16.msra.mxu0 %v2276
    %3854 = vmatpush.bf16.msra.mxu0 %v2268
    %3855 = vmatmul.bf16.gmra.mxu0 %v189
    %v3856 = vpop.f32.mrf.mxu0
    %v3857 = vadd.f32 %v716, %v3856
    %v3858 = vpop.f32.mrf.mxu0
    %v3859 = vadd.f32 %v716, %v3858
    %3860 = vdwg.mxu0
    %3861 = vmatpush.bf16.msra.mxu0 %v2388
    %3862 = vmatpush.bf16.msra.mxu0 %v2380
    %3863 = vmatpush.bf16.msra.mxu0 %v2372
    %3864 = vmatpush.bf16.msra.mxu0 %v2364
    %3865 = vmatpush.bf16.msra.mxu0 %v2356
    %3866 = vmatpush.bf16.msra.mxu0 %v2348
    %3867 = vmatpush.bf16.msra.mxu0 %v2340
    %3868 = vmatpush.bf16.msra.mxu0 %v2332
    %3869 = vmatmul.bf16.gmra.mxu0 %v190
    %v3870 = vpop.f32.mrf.mxu0
    %v3871 = vadd.f32 %v3857, %v3870
    %v3872 = vpop.f32.mrf.mxu0
    %v3873 = vadd.f32 %v3859, %v3872
    %3874 = vdwg.mxu0
    %3875 = vmatpush.bf16.msra.mxu0 %v2452
    %3876 = vmatpush.bf16.msra.mxu0 %v2444
    %3877 = vmatpush.bf16.msra.mxu0 %v2436
    %3878 = vmatpush.bf16.msra.mxu0 %v2428
    %3879 = vmatpush.bf16.msra.mxu0 %v2420
    %3880 = vmatpush.bf16.msra.mxu0 %v2412
    %3881 = vmatpush.bf16.msra.mxu0 %v2404
    %3882 = vmatpush.bf16.msra.mxu0 %v2396
    %3883 = vmatmul.bf16.gmra.mxu0 %v191
    %v3884 = vpop.f32.mrf.mxu0
    %v3885 = vadd.f32 %v3871, %v3884
    %v3886 = vpop.f32.mrf.mxu0
    %v3887 = vadd.f32 %v3873, %v3886
    %3888 = vdwg.mxu0
    %3889 = vmatpush.bf16.msra.mxu0 %v2516
    %3890 = vmatpush.bf16.msra.mxu0 %v2508
    %3891 = vmatpush.bf16.msra.mxu0 %v2500
    %3892 = vmatpush.bf16.msra.mxu0 %v2492
    %3893 = vmatpush.bf16.msra.mxu0 %v2484
    %3894 = vmatpush.bf16.msra.mxu0 %v2476
    %3895 = vmatpush.bf16.msra.mxu0 %v2468
    %3896 = vmatpush.bf16.msra.mxu0 %v2460
    %3897 = vmatmul.bf16.gmra.mxu0 %v192
    %v3898 = vpop.f32.mrf.mxu0
    %v3899 = vadd.f32 %v3885, %v3898
    %v3900 = vpop.f32.mrf.mxu0
    %v3901 = vadd.f32 %v3887, %v3900
    %3902 = vdwg.mxu0
    %3903 = vmatpush.bf16.msra.mxu0 %v2580
    %3904 = vmatpush.bf16.msra.mxu0 %v2572
    %3905 = vmatpush.bf16.msra.mxu0 %v2564
    %3906 = vmatpush.bf16.msra.mxu0 %v2556
    %3907 = vmatpush.bf16.msra.mxu0 %v2548
    %3908 = vmatpush.bf16.msra.mxu0 %v2540
    %3909 = vmatpush.bf16.msra.mxu0 %v2532
    %3910 = vmatpush.bf16.msra.mxu0 %v2524
    %3911 = vmatmul.bf16.gmra.mxu0 %v193
    %v3912 = vpop.f32.mrf.mxu0
    %v3913 = vadd.f32 %v3899, %v3912
    %v3914 = vpop.f32.mrf.mxu0
    %v3915 = vadd.f32 %v3901, %v3914
    %3916 = vdwg.mxu0
    %3917 = vmatpush.bf16.msra.mxu0 %v2644
    %3918 = vmatpush.bf16.msra.mxu0 %v2636
    %3919 = vmatpush.bf16.msra.mxu0 %v2628
    %3920 = vmatpush.bf16.msra.mxu0 %v2620
    %3921 = vmatpush.bf16.msra.mxu0 %v2612
    %3922 = vmatpush.bf16.msra.mxu0 %v2604
    %3923 = vmatpush.bf16.msra.mxu0 %v2596
    %3924 = vmatpush.bf16.msra.mxu0 %v2588
    %3925 = vmatmul.bf16.gmra.mxu0 %v194
    %v3926 = vpop.f32.mrf.mxu0
    %v3927 = vadd.f32 %v3913, %v3926
    %v3928 = vpop.f32.mrf.mxu0
    %v3929 = vadd.f32 %v3915, %v3928
    %3930 = vdwg.mxu0
    %3931 = vmatpush.bf16.msra.mxu0 %v2708
    %3932 = vmatpush.bf16.msra.mxu0 %v2700
    %3933 = vmatpush.bf16.msra.mxu0 %v2692
    %3934 = vmatpush.bf16.msra.mxu0 %v2684
    %3935 = vmatpush.bf16.msra.mxu0 %v2676
    %3936 = vmatpush.bf16.msra.mxu0 %v2668
    %3937 = vmatpush.bf16.msra.mxu0 %v2660
    %3938 = vmatpush.bf16.msra.mxu0 %v2652
    %3939 = vmatmul.bf16.gmra.mxu0 %v195
    %v3940 = vpop.f32.mrf.mxu0
    %v3941 = vadd.f32 %v3927, %v3940
    %v3942 = vpop.f32.mrf.mxu0
    %v3943 = vadd.f32 %v3929, %v3942
    %3944 = vdwg.mxu0
    %3945 = vmatpush.bf16.msra.mxu0 %v2772
    %3946 = vmatpush.bf16.msra.mxu0 %v2764
    %3947 = vmatpush.bf16.msra.mxu0 %v2756
    %3948 = vmatpush.bf16.msra.mxu0 %v2748
    %3949 = vmatpush.bf16.msra.mxu0 %v2740
    %3950 = vmatpush.bf16.msra.mxu0 %v2732
    %3951 = vmatpush.bf16.msra.mxu0 %v2724
    %3952 = vmatpush.bf16.msra.mxu0 %v2716
    %3953 = vmatmul.bf16.gmra.mxu0 %v196
    %v3954 = vpop.f32.mrf.mxu0
    %v3955 = vadd.f32 %v3941, %v3954
    %v3956 = vpop.f32.mrf.mxu0
    %v3957 = vadd.f32 %v3943, %v3956
    %3958 = vdwg.mxu0
    %3959 = vmatpush.bf16.msra.mxu0 %v2325
    %3960 = vmatpush.bf16.msra.mxu0 %v2317
    %3961 = vmatpush.bf16.msra.mxu0 %v2309
    %3962 = vmatpush.bf16.msra.mxu0 %v2301
    %3963 = vmatpush.bf16.msra.mxu0 %v2293
    %3964 = vmatpush.bf16.msra.mxu0 %v2285
    %3965 = vmatpush.bf16.msra.mxu0 %v2277
    %3966 = vmatpush.bf16.msra.mxu0 %v2269
    %3967 = vmatmul.bf16.gmra.mxu0 %v189
    %v3968 = vpop.f32.mrf.mxu0
    %v3969 = vadd.f32 %v717, %v3968
    %v3970 = vpop.f32.mrf.mxu0
    %v3971 = vadd.f32 %v717, %v3970
    %3972 = vdwg.mxu0
    %3973 = vmatpush.bf16.msra.mxu0 %v2389
    %3974 = vmatpush.bf16.msra.mxu0 %v2381
    %3975 = vmatpush.bf16.msra.mxu0 %v2373
    %3976 = vmatpush.bf16.msra.mxu0 %v2365
    %3977 = vmatpush.bf16.msra.mxu0 %v2357
    %3978 = vmatpush.bf16.msra.mxu0 %v2349
    %3979 = vmatpush.bf16.msra.mxu0 %v2341
    %3980 = vmatpush.bf16.msra.mxu0 %v2333
    %3981 = vmatmul.bf16.gmra.mxu0 %v190
    %v3982 = vpop.f32.mrf.mxu0
    %v3983 = vadd.f32 %v3969, %v3982
    %v3984 = vpop.f32.mrf.mxu0
    %v3985 = vadd.f32 %v3971, %v3984
    %3986 = vdwg.mxu0
    %3987 = vmatpush.bf16.msra.mxu0 %v2453
    %3988 = vmatpush.bf16.msra.mxu0 %v2445
    %3989 = vmatpush.bf16.msra.mxu0 %v2437
    %3990 = vmatpush.bf16.msra.mxu0 %v2429
    %3991 = vmatpush.bf16.msra.mxu0 %v2421
    %3992 = vmatpush.bf16.msra.mxu0 %v2413
    %3993 = vmatpush.bf16.msra.mxu0 %v2405
    %3994 = vmatpush.bf16.msra.mxu0 %v2397
    %3995 = vmatmul.bf16.gmra.mxu0 %v191
    %v3996 = vpop.f32.mrf.mxu0
    %v3997 = vadd.f32 %v3983, %v3996
    %v3998 = vpop.f32.mrf.mxu0
    %v3999 = vadd.f32 %v3985, %v3998
    %4000 = vdwg.mxu0
    %4001 = vmatpush.bf16.msra.mxu0 %v2517
    %4002 = vmatpush.bf16.msra.mxu0 %v2509
    %4003 = vmatpush.bf16.msra.mxu0 %v2501
    %4004 = vmatpush.bf16.msra.mxu0 %v2493
    %4005 = vmatpush.bf16.msra.mxu0 %v2485
    %4006 = vmatpush.bf16.msra.mxu0 %v2477
    %4007 = vmatpush.bf16.msra.mxu0 %v2469
    %4008 = vmatpush.bf16.msra.mxu0 %v2461
    %4009 = vmatmul.bf16.gmra.mxu0 %v192
    %v4010 = vpop.f32.mrf.mxu0
    %v4011 = vadd.f32 %v3997, %v4010
    %v4012 = vpop.f32.mrf.mxu0
    %v4013 = vadd.f32 %v3999, %v4012
    %4014 = vdwg.mxu0
    %4015 = vmatpush.bf16.msra.mxu0 %v2581
    %4016 = vmatpush.bf16.msra.mxu0 %v2573
    %4017 = vmatpush.bf16.msra.mxu0 %v2565
    %4018 = vmatpush.bf16.msra.mxu0 %v2557
    %4019 = vmatpush.bf16.msra.mxu0 %v2549
    %4020 = vmatpush.bf16.msra.mxu0 %v2541
    %4021 = vmatpush.bf16.msra.mxu0 %v2533
    %4022 = vmatpush.bf16.msra.mxu0 %v2525
    %4023 = vmatmul.bf16.gmra.mxu0 %v193
    %v4024 = vpop.f32.mrf.mxu0
    %v4025 = vadd.f32 %v4011, %v4024
    %v4026 = vpop.f32.mrf.mxu0
    %v4027 = vadd.f32 %v4013, %v4026
    %4028 = vdwg.mxu0
    %4029 = vmatpush.bf16.msra.mxu0 %v2645
    %4030 = vmatpush.bf16.msra.mxu0 %v2637
    %4031 = vmatpush.bf16.msra.mxu0 %v2629
    %4032 = vmatpush.bf16.msra.mxu0 %v2621
    %4033 = vmatpush.bf16.msra.mxu0 %v2613
    %4034 = vmatpush.bf16.msra.mxu0 %v2605
    %4035 = vmatpush.bf16.msra.mxu0 %v2597
    %4036 = vmatpush.bf16.msra.mxu0 %v2589
    %4037 = vmatmul.bf16.gmra.mxu0 %v194
    %v4038 = vpop.f32.mrf.mxu0
    %v4039 = vadd.f32 %v4025, %v4038
    %v4040 = vpop.f32.mrf.mxu0
    %v4041 = vadd.f32 %v4027, %v4040
    %4042 = vdwg.mxu0
    %4043 = vmatpush.bf16.msra.mxu0 %v2709
    %4044 = vmatpush.bf16.msra.mxu0 %v2701
    %4045 = vmatpush.bf16.msra.mxu0 %v2693
    %4046 = vmatpush.bf16.msra.mxu0 %v2685
    %4047 = vmatpush.bf16.msra.mxu0 %v2677
    %4048 = vmatpush.bf16.msra.mxu0 %v2669
    %4049 = vmatpush.bf16.msra.mxu0 %v2661
    %4050 = vmatpush.bf16.msra.mxu0 %v2653
    %4051 = vmatmul.bf16.gmra.mxu0 %v195
    %v4052 = vpop.f32.mrf.mxu0
    %v4053 = vadd.f32 %v4039, %v4052
    %v4054 = vpop.f32.mrf.mxu0
    %v4055 = vadd.f32 %v4041, %v4054
    %4056 = vdwg.mxu0
    %4057 = vmatpush.bf16.msra.mxu0 %v2773
    %4058 = vmatpush.bf16.msra.mxu0 %v2765
    %4059 = vmatpush.bf16.msra.mxu0 %v2757
    %4060 = vmatpush.bf16.msra.mxu0 %v2749
    %4061 = vmatpush.bf16.msra.mxu0 %v2741
    %4062 = vmatpush.bf16.msra.mxu0 %v2733
    %4063 = vmatpush.bf16.msra.mxu0 %v2725
    %4064 = vmatpush.bf16.msra.mxu0 %v2717
    %4065 = vmatmul.bf16.gmra.mxu0 %v196
    %v4066 = vpop.f32.mrf.mxu0
    %v4067 = vadd.f32 %v4053, %v4066
    %v4068 = vpop.f32.mrf.mxu0
    %v4069 = vadd.f32 %v4055, %v4068
    %4070 = vdwg.mxu0
    %4071 = vmatpush.bf16.msra.mxu0 %v2326
    %4072 = vmatpush.bf16.msra.mxu0 %v2318
    %4073 = vmatpush.bf16.msra.mxu0 %v2310
    %4074 = vmatpush.bf16.msra.mxu0 %v2302
    %4075 = vmatpush.bf16.msra.mxu0 %v2294
    %4076 = vmatpush.bf16.msra.mxu0 %v2286
    %4077 = vmatpush.bf16.msra.mxu0 %v2278
    %4078 = vmatpush.bf16.msra.mxu0 %v2270
    %4079 = vmatmul.bf16.gmra.mxu0 %v189
    %v4080 = vpop.f32.mrf.mxu0
    %v4081 = vadd.f32 %v718, %v4080
    %v4082 = vpop.f32.mrf.mxu0
    %v4083 = vadd.f32 %v718, %v4082
    %4084 = vdwg.mxu0
    %4085 = vmatpush.bf16.msra.mxu0 %v2390
    %4086 = vmatpush.bf16.msra.mxu0 %v2382
    %4087 = vmatpush.bf16.msra.mxu0 %v2374
    %4088 = vmatpush.bf16.msra.mxu0 %v2366
    %4089 = vmatpush.bf16.msra.mxu0 %v2358
    %4090 = vmatpush.bf16.msra.mxu0 %v2350
    %4091 = vmatpush.bf16.msra.mxu0 %v2342
    %4092 = vmatpush.bf16.msra.mxu0 %v2334
    %4093 = vmatmul.bf16.gmra.mxu0 %v190
    %v4094 = vpop.f32.mrf.mxu0
    %v4095 = vadd.f32 %v4081, %v4094
    %v4096 = vpop.f32.mrf.mxu0
    %v4097 = vadd.f32 %v4083, %v4096
    %4098 = vdwg.mxu0
    %4099 = vmatpush.bf16.msra.mxu0 %v2454
    %4100 = vmatpush.bf16.msra.mxu0 %v2446
    %4101 = vmatpush.bf16.msra.mxu0 %v2438
    %4102 = vmatpush.bf16.msra.mxu0 %v2430
    %4103 = vmatpush.bf16.msra.mxu0 %v2422
    %4104 = vmatpush.bf16.msra.mxu0 %v2414
    %4105 = vmatpush.bf16.msra.mxu0 %v2406
    %4106 = vmatpush.bf16.msra.mxu0 %v2398
    %4107 = vmatmul.bf16.gmra.mxu0 %v191
    %v4108 = vpop.f32.mrf.mxu0
    %v4109 = vadd.f32 %v4095, %v4108
    %v4110 = vpop.f32.mrf.mxu0
    %v4111 = vadd.f32 %v4097, %v4110
    %4112 = vdwg.mxu0
    %4113 = vmatpush.bf16.msra.mxu0 %v2518
    %4114 = vmatpush.bf16.msra.mxu0 %v2510
    %4115 = vmatpush.bf16.msra.mxu0 %v2502
    %4116 = vmatpush.bf16.msra.mxu0 %v2494
    %4117 = vmatpush.bf16.msra.mxu0 %v2486
    %4118 = vmatpush.bf16.msra.mxu0 %v2478
    %4119 = vmatpush.bf16.msra.mxu0 %v2470
    %4120 = vmatpush.bf16.msra.mxu0 %v2462
    %4121 = vmatmul.bf16.gmra.mxu0 %v192
    %v4122 = vpop.f32.mrf.mxu0
    %v4123 = vadd.f32 %v4109, %v4122
    %v4124 = vpop.f32.mrf.mxu0
    %v4125 = vadd.f32 %v4111, %v4124
    %4126 = vdwg.mxu0
    %4127 = vmatpush.bf16.msra.mxu0 %v2582
    %4128 = vmatpush.bf16.msra.mxu0 %v2574
    %4129 = vmatpush.bf16.msra.mxu0 %v2566
    %4130 = vmatpush.bf16.msra.mxu0 %v2558
    %4131 = vmatpush.bf16.msra.mxu0 %v2550
    %4132 = vmatpush.bf16.msra.mxu0 %v2542
    %4133 = vmatpush.bf16.msra.mxu0 %v2534
    %4134 = vmatpush.bf16.msra.mxu0 %v2526
    %4135 = vmatmul.bf16.gmra.mxu0 %v193
    %v4136 = vpop.f32.mrf.mxu0
    %v4137 = vadd.f32 %v4123, %v4136
    %v4138 = vpop.f32.mrf.mxu0
    %v4139 = vadd.f32 %v4125, %v4138
    %4140 = vdwg.mxu0
    %4141 = vmatpush.bf16.msra.mxu0 %v2646
    %4142 = vmatpush.bf16.msra.mxu0 %v2638
    %4143 = vmatpush.bf16.msra.mxu0 %v2630
    %4144 = vmatpush.bf16.msra.mxu0 %v2622
    %4145 = vmatpush.bf16.msra.mxu0 %v2614
    %4146 = vmatpush.bf16.msra.mxu0 %v2606
    %4147 = vmatpush.bf16.msra.mxu0 %v2598
    %4148 = vmatpush.bf16.msra.mxu0 %v2590
    %4149 = vmatmul.bf16.gmra.mxu0 %v194
    %v4150 = vpop.f32.mrf.mxu0
    %v4151 = vadd.f32 %v4137, %v4150
    %v4152 = vpop.f32.mrf.mxu0
    %v4153 = vadd.f32 %v4139, %v4152
    %4154 = vdwg.mxu0
    %4155 = vmatpush.bf16.msra.mxu0 %v2710
    %4156 = vmatpush.bf16.msra.mxu0 %v2702
    %4157 = vmatpush.bf16.msra.mxu0 %v2694
    %4158 = vmatpush.bf16.msra.mxu0 %v2686
    %4159 = vmatpush.bf16.msra.mxu0 %v2678
    %4160 = vmatpush.bf16.msra.mxu0 %v2670
    %4161 = vmatpush.bf16.msra.mxu0 %v2662
    %4162 = vmatpush.bf16.msra.mxu0 %v2654
    %4163 = vmatmul.bf16.gmra.mxu0 %v195
    %v4164 = vpop.f32.mrf.mxu0
    %v4165 = vadd.f32 %v4151, %v4164
    %v4166 = vpop.f32.mrf.mxu0
    %v4167 = vadd.f32 %v4153, %v4166
    %4168 = vdwg.mxu0
    %4169 = vmatpush.bf16.msra.mxu0 %v2774
    %4170 = vmatpush.bf16.msra.mxu0 %v2766
    %4171 = vmatpush.bf16.msra.mxu0 %v2758
    %4172 = vmatpush.bf16.msra.mxu0 %v2750
    %4173 = vmatpush.bf16.msra.mxu0 %v2742
    %4174 = vmatpush.bf16.msra.mxu0 %v2734
    %4175 = vmatpush.bf16.msra.mxu0 %v2726
    %4176 = vmatpush.bf16.msra.mxu0 %v2718
    %4177 = vmatmul.bf16.gmra.mxu0 %v196
    %v4178 = vpop.f32.mrf.mxu0
    %v4179 = vadd.f32 %v4165, %v4178
    %v4180 = vpop.f32.mrf.mxu0
    %v4181 = vadd.f32 %v4167, %v4180
    %4182 = vdwg.mxu0
    %v4183 = vmax.f32 %v3395, 0.0
    %v4184 = vmax.f32 %v3507, 0.0
    %v4185 = vmax.f32 %v3619, 0.0
    %v4186 = vmax.f32 %v3731, 0.0
    %v4187 = vmax.f32 %v3843, 0.0
    %v4188 = vmax.f32 %v3955, 0.0
    %v4189 = vmax.f32 %v4067, 0.0
    %v4190 = vmax.f32 %v4179, 0.0
    %v4191 = vmax.f32 %v3397, 0.0
    %v4192 = vmax.f32 %v3509, 0.0
    %v4193 = vmax.f32 %v3621, 0.0
    %v4194 = vmax.f32 %v3733, 0.0
    %v4195 = vmax.f32 %v3845, 0.0
    %v4196 = vmax.f32 %v3957, 0.0
    %v4197 = vmax.f32 %v4069, 0.0
    %v4198 = vmax.f32 %v4181, 0.0
    %v4199 = vpack.c.bf16 %v4191, %v4183
    %v4200 = vpack.c.bf16 %v4192, %v4184
    %v4201 = vpack.c.bf16 %v4193, %v4185
    %v4202 = vpack.c.bf16 %v4194, %v4186
    %v4203 = vpack.c.bf16 %v4195, %v4187
    %v4204 = vpack.c.bf16 %v4196, %v4188
    %v4205 = vpack.c.bf16 %v4197, %v4189
    %v4206 = vpack.c.bf16 %v4198, %v4190
    %v4207 = vld [vmem:[#allocation6] sm:$0xff]
    %v4208 = vld [vmem:[#allocation6 + $0x8] sm:$0xff]
    %v4209 = vld [vmem:[#allocation6 + $0x10] sm:$0xff]
    %v4210 = vld [vmem:[#allocation6 + $0x18] sm:$0xff]
    %v4211 = vld [vmem:[#allocation6 + $0x20] sm:$0xff]
    %v4212 = vld [vmem:[#allocation6 + $0x28] sm:$0xff]
    %v4213 = vld [vmem:[#allocation6 + $0x30] sm:$0xff]
    %v4214 = vld [vmem:[#allocation6 + $0x38] sm:$0xff]
    %v4215 = vld [vmem:[#allocation6 + $0x40] sm:$0xff]
    %v4216 = vld [vmem:[#allocation6 + $0x48] sm:$0xff]
    %v4217 = vld [vmem:[#allocation6 + $0x50] sm:$0xff]
    %v4218 = vld [vmem:[#allocation6 + $0x58] sm:$0xff]
    %v4219 = vld [vmem:[#allocation6 + $0x60] sm:$0xff]
    %v4220 = vld [vmem:[#allocation6 + $0x68] sm:$0xff]
    %v4221 = vld [vmem:[#allocation6 + $0x70] sm:$0xff]
    %v4222 = vld [vmem:[#allocation6 + $0x78] sm:$0xff]
    %v4223 = vld [vmem:[#allocation6 + $0x80] sm:$0xff]
    %v4224 = vld [vmem:[#allocation6 + $0x88] sm:$0xff]
    %v4225 = vld [vmem:[#allocation6 + $0x90] sm:$0xff]
    %v4226 = vld [vmem:[#allocation6 + $0x98] sm:$0xff]
    %v4227 = vld [vmem:[#allocation6 + $0xa0] sm:$0xff]
    %v4228 = vld [vmem:[#allocation6 + $0xa8] sm:$0xff]
    %v4229 = vld [vmem:[#allocation6 + $0xb0] sm:$0xff]
    %v4230 = vld [vmem:[#allocation6 + $0xb8] sm:$0xff]
    %v4231 = vld [vmem:[#allocation6 + $0xc0] sm:$0xff]
    %v4232 = vld [vmem:[#allocation6 + $0xc8] sm:$0xff]
    %v4233 = vld [vmem:[#allocation6 + $0xd0] sm:$0xff]
    %v4234 = vld [vmem:[#allocation6 + $0xd8] sm:$0xff]
    %v4235 = vld [vmem:[#allocation6 + $0xe0] sm:$0xff]
    %v4236 = vld [vmem:[#allocation6 + $0xe8] sm:$0xff]
    %v4237 = vld [vmem:[#allocation6 + $0xf0] sm:$0xff]
    %v4238 = vld [vmem:[#allocation6 + $0xf8] sm:$0xff]
    %v4239 = vld [vmem:[#allocation6 + $0x100] sm:$0xff]
    %v4240 = vld [vmem:[#allocation6 + $0x108] sm:$0xff]
    %v4241 = vld [vmem:[#allocation6 + $0x110] sm:$0xff]
    %v4242 = vld [vmem:[#allocation6 + $0x118] sm:$0xff]
    %v4243 = vld [vmem:[#allocation6 + $0x120] sm:$0xff]
    %v4244 = vld [vmem:[#allocation6 + $0x128] sm:$0xff]
    %v4245 = vld [vmem:[#allocation6 + $0x130] sm:$0xff]
    %v4246 = vld [vmem:[#allocation6 + $0x138] sm:$0xff]
    %v4247 = vld [vmem:[#allocation6 + $0x140] sm:$0xff]
    %v4248 = vld [vmem:[#allocation6 + $0x148] sm:$0xff]
    %v4249 = vld [vmem:[#allocation6 + $0x150] sm:$0xff]
    %v4250 = vld [vmem:[#allocation6 + $0x158] sm:$0xff]
    %v4251 = vld [vmem:[#allocation6 + $0x160] sm:$0xff]
    %v4252 = vld [vmem:[#allocation6 + $0x168] sm:$0xff]
    %v4253 = vld [vmem:[#allocation6 + $0x170] sm:$0xff]
    %v4254 = vld [vmem:[#allocation6 + $0x178] sm:$0xff]
    %v4255 = vld [vmem:[#allocation6 + $0x180] sm:$0xff]
    %v4256 = vld [vmem:[#allocation6 + $0x188] sm:$0xff]
    %v4257 = vld [vmem:[#allocation6 + $0x190] sm:$0xff]
    %v4258 = vld [vmem:[#allocation6 + $0x198] sm:$0xff]
    %v4259 = vld [vmem:[#allocation6 + $0x1a0] sm:$0xff]
    %v4260 = vld [vmem:[#allocation6 + $0x1a8] sm:$0xff]
    %v4261 = vld [vmem:[#allocation6 + $0x1b0] sm:$0xff]
    %v4262 = vld [vmem:[#allocation6 + $0x1b8] sm:$0xff]
    %v4263 = vld [vmem:[#allocation6 + $0x1c0] sm:$0xff]
    %v4264 = vld [vmem:[#allocation6 + $0x1c8] sm:$0xff]
    %v4265 = vld [vmem:[#allocation6 + $0x1d0] sm:$0xff]
    %v4266 = vld [vmem:[#allocation6 + $0x1d8] sm:$0xff]
    %v4267 = vld [vmem:[#allocation6 + $0x1e0] sm:$0xff]
    %v4268 = vld [vmem:[#allocation6 + $0x1e8] sm:$0xff]
    %v4269 = vld [vmem:[#allocation6 + $0x1f0] sm:$0xff]
    %v4270 = vld [vmem:[#allocation6 + $0x1f8] sm:$0xff]
    %v4271 = vld [vmem:[#allocation6 + $0x200] sm:$0xff]
    %v4272 = vld [vmem:[#allocation6 + $0x208] sm:$0xff]
    %v4273 = vld [vmem:[#allocation6 + $0x210] sm:$0xff]
    %v4274 = vld [vmem:[#allocation6 + $0x218] sm:$0xff]
    %v4275 = vld [vmem:[#allocation6 + $0x220] sm:$0xff]
    %v4276 = vld [vmem:[#allocation6 + $0x228] sm:$0xff]
    %v4277 = vld [vmem:[#allocation6 + $0x230] sm:$0xff]
    %v4278 = vld [vmem:[#allocation6 + $0x238] sm:$0xff]
    %v4279 = vld [vmem:[#allocation6 + $0x240] sm:$0xff]
    %v4280 = vld [vmem:[#allocation6 + $0x248] sm:$0xff]
    %v4281 = vld [vmem:[#allocation6 + $0x250] sm:$0xff]
    %v4282 = vld [vmem:[#allocation6 + $0x258] sm:$0xff]
    %v4283 = vld [vmem:[#allocation6 + $0x260] sm:$0xff]
    %v4284 = vld [vmem:[#allocation6 + $0x268] sm:$0xff]
    %v4285 = vld [vmem:[#allocation6 + $0x270] sm:$0xff]
    %v4286 = vld [vmem:[#allocation6 + $0x278] sm:$0xff]
    %v4287 = vld [vmem:[#allocation6 + $0x280] sm:$0xff]
    %v4288 = vld [vmem:[#allocation6 + $0x288] sm:$0xff]
    %v4289 = vld [vmem:[#allocation6 + $0x290] sm:$0xff]
    %v4290 = vld [vmem:[#allocation6 + $0x298] sm:$0xff]
    %v4291 = vld [vmem:[#allocation6 + $0x2a0] sm:$0xff]
    %v4292 = vld [vmem:[#allocation6 + $0x2a8] sm:$0xff]
    %v4293 = vld [vmem:[#allocation6 + $0x2b0] sm:$0xff]
    %v4294 = vld [vmem:[#allocation6 + $0x2b8] sm:$0xff]
    %v4295 = vld [vmem:[#allocation6 + $0x2c0] sm:$0xff]
    %v4296 = vld [vmem:[#allocation6 + $0x2c8] sm:$0xff]
    %v4297 = vld [vmem:[#allocation6 + $0x2d0] sm:$0xff]
    %v4298 = vld [vmem:[#allocation6 + $0x2d8] sm:$0xff]
    %v4299 = vld [vmem:[#allocation6 + $0x2e0] sm:$0xff]
    %v4300 = vld [vmem:[#allocation6 + $0x2e8] sm:$0xff]
    %v4301 = vld [vmem:[#allocation6 + $0x2f0] sm:$0xff]
    %v4302 = vld [vmem:[#allocation6 + $0x2f8] sm:$0xff]
    %v4303 = vld [vmem:[#allocation6 + $0x300] sm:$0xff]
    %v4304 = vld [vmem:[#allocation6 + $0x308] sm:$0xff]
    %v4305 = vld [vmem:[#allocation6 + $0x310] sm:$0xff]
    %v4306 = vld [vmem:[#allocation6 + $0x318] sm:$0xff]
    %v4307 = vld [vmem:[#allocation6 + $0x320] sm:$0xff]
    %v4308 = vld [vmem:[#allocation6 + $0x328] sm:$0xff]
    %v4309 = vld [vmem:[#allocation6 + $0x330] sm:$0xff]
    %v4310 = vld [vmem:[#allocation6 + $0x338] sm:$0xff]
    %v4311 = vld [vmem:[#allocation6 + $0x340] sm:$0xff]
    %v4312 = vld [vmem:[#allocation6 + $0x348] sm:$0xff]
    %v4313 = vld [vmem:[#allocation6 + $0x350] sm:$0xff]
    %v4314 = vld [vmem:[#allocation6 + $0x358] sm:$0xff]
    %v4315 = vld [vmem:[#allocation6 + $0x360] sm:$0xff]
    %v4316 = vld [vmem:[#allocation6 + $0x368] sm:$0xff]
    %v4317 = vld [vmem:[#allocation6 + $0x370] sm:$0xff]
    %v4318 = vld [vmem:[#allocation6 + $0x378] sm:$0xff]
    %v4319 = vld [vmem:[#allocation6 + $0x380] sm:$0xff]
    %v4320 = vld [vmem:[#allocation6 + $0x388] sm:$0xff]
    %v4321 = vld [vmem:[#allocation6 + $0x390] sm:$0xff]
    %v4322 = vld [vmem:[#allocation6 + $0x398] sm:$0xff]
    %v4323 = vld [vmem:[#allocation6 + $0x3a0] sm:$0xff]
    %v4324 = vld [vmem:[#allocation6 + $0x3a8] sm:$0xff]
    %v4325 = vld [vmem:[#allocation6 + $0x3b0] sm:$0xff]
    %v4326 = vld [vmem:[#allocation6 + $0x3b8] sm:$0xff]
    %v4327 = vld [vmem:[#allocation6 + $0x3c0] sm:$0xff]
    %v4328 = vld [vmem:[#allocation6 + $0x3c8] sm:$0xff]
    %v4329 = vld [vmem:[#allocation6 + $0x3d0] sm:$0xff]
    %v4330 = vld [vmem:[#allocation6 + $0x3d8] sm:$0xff]
    %v4331 = vld [vmem:[#allocation6 + $0x3e0] sm:$0xff]
    %v4332 = vld [vmem:[#allocation6 + $0x3e8] sm:$0xff]
    %v4333 = vld [vmem:[#allocation6 + $0x3f0] sm:$0xff]
    %v4334 = vld [vmem:[#allocation6 + $0x3f8] sm:$0xff]
    %v4335 = vld [vmem:[#allocation7] sm:$0x3]
    %v4337 = vperm.slane %v4335, 0
    %v4338 = vperm.slane %v4335, 1
    %v4469 = vunpack.c.l.b16 %v4207
    %v4470 = vunpack.c.h.b16 %v4207
    %v4471 = vunpack.c.l.b16 %v4208
    %v4472 = vunpack.c.h.b16 %v4208
    %v4473 = vunpack.c.l.b16 %v4209
    %v4474 = vunpack.c.h.b16 %v4209
    %v4475 = vunpack.c.l.b16 %v4210
    %v4476 = vunpack.c.h.b16 %v4210
    %v4477 = vunpack.c.l.b16 %v4211
    %v4478 = vunpack.c.h.b16 %v4211
    %v4479 = vunpack.c.l.b16 %v4212
    %v4480 = vunpack.c.h.b16 %v4212
    %v4481 = vunpack.c.l.b16 %v4213
    %v4482 = vunpack.c.h.b16 %v4213
    %v4483 = vunpack.c.l.b16 %v4214
    %v4484 = vunpack.c.h.b16 %v4214
    %v4485 = vunpack.c.l.b16 %v4215
    %v4486 = vunpack.c.h.b16 %v4215
    %v4487 = vunpack.c.l.b16 %v4216
    %v4488 = vunpack.c.h.b16 %v4216
    %v4489 = vunpack.c.l.b16 %v4217
    %v4490 = vunpack.c.h.b16 %v4217
    %v4491 = vunpack.c.l.b16 %v4218
    %v4492 = vunpack.c.h.b16 %v4218
    %v4493 = vunpack.c.l.b16 %v4219
    %v4494 = vunpack.c.h.b16 %v4219
    %v4495 = vunpack.c.l.b16 %v4220
    %v4496 = vunpack.c.h.b16 %v4220
    %v4497 = vunpack.c.l.b16 %v4221
    %v4498 = vunpack.c.h.b16 %v4221
    %v4499 = vunpack.c.l.b16 %v4222
    %v4500 = vunpack.c.h.b16 %v4222
    %v4501 = vunpack.c.l.b16 %v4223
    %v4502 = vunpack.c.h.b16 %v4223
    %v4503 = vunpack.c.l.b16 %v4224
    %v4504 = vunpack.c.h.b16 %v4224
    %v4505 = vunpack.c.l.b16 %v4225
    %v4506 = vunpack.c.h.b16 %v4225
    %v4507 = vunpack.c.l.b16 %v4226
    %v4508 = vunpack.c.h.b16 %v4226
    %v4509 = vunpack.c.l.b16 %v4227
    %v4510 = vunpack.c.h.b16 %v4227
    %v4511 = vunpack.c.l.b16 %v4228
    %v4512 = vunpack.c.h.b16 %v4228
    %v4513 = vunpack.c.l.b16 %v4229
    %v4514 = vunpack.c.h.b16 %v4229
    %v4515 = vunpack.c.l.b16 %v4230
    %v4516 = vunpack.c.h.b16 %v4230
    %v4517 = vunpack.c.l.b16 %v4231
    %v4518 = vunpack.c.h.b16 %v4231
    %v4519 = vunpack.c.l.b16 %v4232
    %v4520 = vunpack.c.h.b16 %v4232
    %v4521 = vunpack.c.l.b16 %v4233
    %v4522 = vunpack.c.h.b16 %v4233
    %v4523 = vunpack.c.l.b16 %v4234
    %v4524 = vunpack.c.h.b16 %v4234
    %v4525 = vunpack.c.l.b16 %v4235
    %v4526 = vunpack.c.h.b16 %v4235
    %v4527 = vunpack.c.l.b16 %v4236
    %v4528 = vunpack.c.h.b16 %v4236
    %v4529 = vunpack.c.l.b16 %v4237
    %v4530 = vunpack.c.h.b16 %v4237
    %v4531 = vunpack.c.l.b16 %v4238
    %v4532 = vunpack.c.h.b16 %v4238
    %v4533 = vunpack.c.l.b16 %v4239
    %v4534 = vunpack.c.h.b16 %v4239
    %v4535 = vunpack.c.l.b16 %v4240
    %v4536 = vunpack.c.h.b16 %v4240
    %v4537 = vunpack.c.l.b16 %v4241
    %v4538 = vunpack.c.h.b16 %v4241
    %v4539 = vunpack.c.l.b16 %v4242
    %v4540 = vunpack.c.h.b16 %v4242
    %v4541 = vunpack.c.l.b16 %v4243
    %v4542 = vunpack.c.h.b16 %v4243
    %v4543 = vunpack.c.l.b16 %v4244
    %v4544 = vunpack.c.h.b16 %v4244
    %v4545 = vunpack.c.l.b16 %v4245
    %v4546 = vunpack.c.h.b16 %v4245
    %v4547 = vunpack.c.l.b16 %v4246
    %v4548 = vunpack.c.h.b16 %v4246
    %v4549 = vunpack.c.l.b16 %v4247
    %v4550 = vunpack.c.h.b16 %v4247
    %v4551 = vunpack.c.l.b16 %v4248
    %v4552 = vunpack.c.h.b16 %v4248
    %v4553 = vunpack.c.l.b16 %v4249
    %v4554 = vunpack.c.h.b16 %v4249
    %v4555 = vunpack.c.l.b16 %v4250
    %v4556 = vunpack.c.h.b16 %v4250
    %v4557 = vunpack.c.l.b16 %v4251
    %v4558 = vunpack.c.h.b16 %v4251
    %v4559 = vunpack.c.l.b16 %v4252
    %v4560 = vunpack.c.h.b16 %v4252
    %v4561 = vunpack.c.l.b16 %v4253
    %v4562 = vunpack.c.h.b16 %v4253
    %v4563 = vunpack.c.l.b16 %v4254
    %v4564 = vunpack.c.h.b16 %v4254
    %v4565 = vunpack.c.l.b16 %v4255
    %v4566 = vunpack.c.h.b16 %v4255
    %v4567 = vunpack.c.l.b16 %v4256
    %v4568 = vunpack.c.h.b16 %v4256
    %v4569 = vunpack.c.l.b16 %v4257
    %v4570 = vunpack.c.h.b16 %v4257
    %v4571 = vunpack.c.l.b16 %v4258
    %v4572 = vunpack.c.h.b16 %v4258
    %v4573 = vunpack.c.l.b16 %v4259
    %v4574 = vunpack.c.h.b16 %v4259
    %v4575 = vunpack.c.l.b16 %v4260
    %v4576 = vunpack.c.h.b16 %v4260
    %v4577 = vunpack.c.l.b16 %v4261
    %v4578 = vunpack.c.h.b16 %v4261
    %v4579 = vunpack.c.l.b16 %v4262
    %v4580 = vunpack.c.h.b16 %v4262
    %v4581 = vunpack.c.l.b16 %v4263
    %v4582 = vunpack.c.h.b16 %v4263
    %v4583 = vunpack.c.l.b16 %v4264
    %v4584 = vunpack.c.h.b16 %v4264
    %v4585 = vunpack.c.l.b16 %v4265
    %v4586 = vunpack.c.h.b16 %v4265
    %v4587 = vunpack.c.l.b16 %v4266
    %v4588 = vunpack.c.h.b16 %v4266
    %v4589 = vunpack.c.l.b16 %v4267
    %v4590 = vunpack.c.h.b16 %v4267
    %v4591 = vunpack.c.l.b16 %v4268
    %v4592 = vunpack.c.h.b16 %v4268
    %v4593 = vunpack.c.l.b16 %v4269
    %v4594 = vunpack.c.h.b16 %v4269
    %v4595 = vunpack.c.l.b16 %v4270
    %v4596 = vunpack.c.h.b16 %v4270
    %v4597 = vunpack.c.l.b16 %v4271
    %v4598 = vunpack.c.h.b16 %v4271
    %v4599 = vunpack.c.l.b16 %v4272
    %v4600 = vunpack.c.h.b16 %v4272
    %v4601 = vunpack.c.l.b16 %v4273
    %v4602 = vunpack.c.h.b16 %v4273
    %v4603 = vunpack.c.l.b16 %v4274
    %v4604 = vunpack.c.h.b16 %v4274
    %v4605 = vunpack.c.l.b16 %v4275
    %v4606 = vunpack.c.h.b16 %v4275
    %v4607 = vunpack.c.l.b16 %v4276
    %v4608 = vunpack.c.h.b16 %v4276
    %v4609 = vunpack.c.l.b16 %v4277
    %v4610 = vunpack.c.h.b16 %v4277
    %v4611 = vunpack.c.l.b16 %v4278
    %v4612 = vunpack.c.h.b16 %v4278
    %v4613 = vunpack.c.l.b16 %v4279
    %v4614 = vunpack.c.h.b16 %v4279
    %v4615 = vunpack.c.l.b16 %v4280
    %v4616 = vunpack.c.h.b16 %v4280
    %v4617 = vunpack.c.l.b16 %v4281
    %v4618 = vunpack.c.h.b16 %v4281
    %v4619 = vunpack.c.l.b16 %v4282
    %v4620 = vunpack.c.h.b16 %v4282
    %v4621 = vunpack.c.l.b16 %v4283
    %v4622 = vunpack.c.h.b16 %v4283
    %v4623 = vunpack.c.l.b16 %v4284
    %v4624 = vunpack.c.h.b16 %v4284
    %v4625 = vunpack.c.l.b16 %v4285
    %v4626 = vunpack.c.h.b16 %v4285
    %v4627 = vunpack.c.l.b16 %v4286
    %v4628 = vunpack.c.h.b16 %v4286
    %v4629 = vunpack.c.l.b16 %v4287
    %v4630 = vunpack.c.h.b16 %v4287
    %v4631 = vunpack.c.l.b16 %v4288
    %v4632 = vunpack.c.h.b16 %v4288
    %v4633 = vunpack.c.l.b16 %v4289
    %v4634 = vunpack.c.h.b16 %v4289
    %v4635 = vunpack.c.l.b16 %v4290
    %v4636 = vunpack.c.h.b16 %v4290
    %v4637 = vunpack.c.l.b16 %v4291
    %v4638 = vunpack.c.h.b16 %v4291
    %v4639 = vunpack.c.l.b16 %v4292
    %v4640 = vunpack.c.h.b16 %v4292
    %v4641 = vunpack.c.l.b16 %v4293
    %v4642 = vunpack.c.h.b16 %v4293
    %v4643 = vunpack.c.l.b16 %v4294
    %v4644 = vunpack.c.h.b16 %v4294
    %v4645 = vunpack.c.l.b16 %v4295
    %v4646 = vunpack.c.h.b16 %v4295
    %v4647 = vunpack.c.l.b16 %v4296
    %v4648 = vunpack.c.h.b16 %v4296
    %v4649 = vunpack.c.l.b16 %v4297
    %v4650 = vunpack.c.h.b16 %v4297
    %v4651 = vunpack.c.l.b16 %v4298
    %v4652 = vunpack.c.h.b16 %v4298
    %v4653 = vunpack.c.l.b16 %v4299
    %v4654 = vunpack.c.h.b16 %v4299
    %v4655 = vunpack.c.l.b16 %v4300
    %v4656 = vunpack.c.h.b16 %v4300
    %v4657 = vunpack.c.l.b16 %v4301
    %v4658 = vunpack.c.h.b16 %v4301
    %v4659 = vunpack.c.l.b16 %v4302
    %v4660 = vunpack.c.h.b16 %v4302
    %v4661 = vunpack.c.l.b16 %v4303
    %v4662 = vunpack.c.h.b16 %v4303
    %v4663 = vunpack.c.l.b16 %v4304
    %v4664 = vunpack.c.h.b16 %v4304
    %v4665 = vunpack.c.l.b16 %v4305
    %v4666 = vunpack.c.h.b16 %v4305
    %v4667 = vunpack.c.l.b16 %v4306
    %v4668 = vunpack.c.h.b16 %v4306
    %v4669 = vunpack.c.l.b16 %v4307
    %v4670 = vunpack.c.h.b16 %v4307
    %v4671 = vunpack.c.l.b16 %v4308
    %v4672 = vunpack.c.h.b16 %v4308
    %v4673 = vunpack.c.l.b16 %v4309
    %v4674 = vunpack.c.h.b16 %v4309
    %v4675 = vunpack.c.l.b16 %v4310
    %v4676 = vunpack.c.h.b16 %v4310
    %v4677 = vunpack.c.l.b16 %v4311
    %v4678 = vunpack.c.h.b16 %v4311
    %v4679 = vunpack.c.l.b16 %v4312
    %v4680 = vunpack.c.h.b16 %v4312
    %v4681 = vunpack.c.l.b16 %v4313
    %v4682 = vunpack.c.h.b16 %v4313
    %v4683 = vunpack.c.l.b16 %v4314
    %v4684 = vunpack.c.h.b16 %v4314
    %v4685 = vunpack.c.l.b16 %v4315
    %v4686 = vunpack.c.h.b16 %v4315
    %v4687 = vunpack.c.l.b16 %v4316
    %v4688 = vunpack.c.h.b16 %v4316
    %v4689 = vunpack.c.l.b16 %v4317
    %v4690 = vunpack.c.h.b16 %v4317
    %v4691 = vunpack.c.l.b16 %v4318
    %v4692 = vunpack.c.h.b16 %v4318
    %v4693 = vunpack.c.l.b16 %v4319
    %v4694 = vunpack.c.h.b16 %v4319
    %v4695 = vunpack.c.l.b16 %v4320
    %v4696 = vunpack.c.h.b16 %v4320
    %v4697 = vunpack.c.l.b16 %v4321
    %v4698 = vunpack.c.h.b16 %v4321
    %v4699 = vunpack.c.l.b16 %v4322
    %v4700 = vunpack.c.h.b16 %v4322
    %v4701 = vunpack.c.l.b16 %v4323
    %v4702 = vunpack.c.h.b16 %v4323
    %v4703 = vunpack.c.l.b16 %v4324
    %v4704 = vunpack.c.h.b16 %v4324
    %v4705 = vunpack.c.l.b16 %v4325
    %v4706 = vunpack.c.h.b16 %v4325
    %v4707 = vunpack.c.l.b16 %v4326
    %v4708 = vunpack.c.h.b16 %v4326
    %v4709 = vunpack.c.l.b16 %v4327
    %v4710 = vunpack.c.h.b16 %v4327
    %v4711 = vunpack.c.l.b16 %v4328
    %v4712 = vunpack.c.h.b16 %v4328
    %v4713 = vunpack.c.l.b16 %v4329
    %v4714 = vunpack.c.h.b16 %v4329
    %v4715 = vunpack.c.l.b16 %v4330
    %v4716 = vunpack.c.h.b16 %v4330
    %v4717 = vunpack.c.l.b16 %v4331
    %v4718 = vunpack.c.h.b16 %v4331
    %v4719 = vunpack.c.l.b16 %v4332
    %v4720 = vunpack.c.h.b16 %v4332
    %v4721 = vunpack.c.l.b16 %v4333
    %v4722 = vunpack.c.h.b16 %v4333
    %v4723 = vunpack.c.l.b16 %v4334
    %v4724 = vunpack.c.h.b16 %v4334
    %v4725 = vpack.c.b16 %v4471, %v4469
    %v4726 = vpack.c.b16 %v4472, %v4470
    %v4727 = vpack.c.b16 %v4475, %v4473
    %v4728 = vpack.c.b16 %v4476, %v4474
    %v4729 = vpack.c.b16 %v4479, %v4477
    %v4730 = vpack.c.b16 %v4480, %v4478
    %v4731 = vpack.c.b16 %v4483, %v4481
    %v4732 = vpack.c.b16 %v4484, %v4482
    %v4733 = vpack.c.b16 %v4487, %v4485
    %v4734 = vpack.c.b16 %v4488, %v4486
    %v4735 = vpack.c.b16 %v4491, %v4489
    %v4736 = vpack.c.b16 %v4492, %v4490
    %v4737 = vpack.c.b16 %v4495, %v4493
    %v4738 = vpack.c.b16 %v4496, %v4494
    %v4739 = vpack.c.b16 %v4499, %v4497
    %v4740 = vpack.c.b16 %v4500, %v4498
    %v4741 = vpack.c.b16 %v4503, %v4501
    %v4742 = vpack.c.b16 %v4504, %v4502
    %v4743 = vpack.c.b16 %v4507, %v4505
    %v4744 = vpack.c.b16 %v4508, %v4506
    %v4745 = vpack.c.b16 %v4511, %v4509
    %v4746 = vpack.c.b16 %v4512, %v4510
    %v4747 = vpack.c.b16 %v4515, %v4513
    %v4748 = vpack.c.b16 %v4516, %v4514
    %v4749 = vpack.c.b16 %v4519, %v4517
    %v4750 = vpack.c.b16 %v4520, %v4518
    %v4751 = vpack.c.b16 %v4523, %v4521
    %v4752 = vpack.c.b16 %v4524, %v4522
    %v4753 = vpack.c.b16 %v4527, %v4525
    %v4754 = vpack.c.b16 %v4528, %v4526
    %v4755 = vpack.c.b16 %v4531, %v4529
    %v4756 = vpack.c.b16 %v4532, %v4530
    %v4757 = vpack.c.b16 %v4535, %v4533
    %v4758 = vpack.c.b16 %v4536, %v4534
    %v4759 = vpack.c.b16 %v4539, %v4537
    %v4760 = vpack.c.b16 %v4540, %v4538
    %v4761 = vpack.c.b16 %v4543, %v4541
    %v4762 = vpack.c.b16 %v4544, %v4542
    %v4763 = vpack.c.b16 %v4547, %v4545
    %v4764 = vpack.c.b16 %v4548, %v4546
    %v4765 = vpack.c.b16 %v4551, %v4549
    %v4766 = vpack.c.b16 %v4552, %v4550
    %v4767 = vpack.c.b16 %v4555, %v4553
    %v4768 = vpack.c.b16 %v4556, %v4554
    %v4769 = vpack.c.b16 %v4559, %v4557
    %v4770 = vpack.c.b16 %v4560, %v4558
    %v4771 = vpack.c.b16 %v4563, %v4561
    %v4772 = vpack.c.b16 %v4564, %v4562
    %v4773 = vpack.c.b16 %v4567, %v4565
    %v4774 = vpack.c.b16 %v4568, %v4566
    %v4775 = vpack.c.b16 %v4571, %v4569
    %v4776 = vpack.c.b16 %v4572, %v4570
    %v4777 = vpack.c.b16 %v4575, %v4573
    %v4778 = vpack.c.b16 %v4576, %v4574
    %v4779 = vpack.c.b16 %v4579, %v4577
    %v4780 = vpack.c.b16 %v4580, %v4578
    %v4781 = vpack.c.b16 %v4583, %v4581
    %v4782 = vpack.c.b16 %v4584, %v4582
    %v4783 = vpack.c.b16 %v4587, %v4585
    %v4784 = vpack.c.b16 %v4588, %v4586
    %v4785 = vpack.c.b16 %v4591, %v4589
    %v4786 = vpack.c.b16 %v4592, %v4590
    %v4787 = vpack.c.b16 %v4595, %v4593
    %v4788 = vpack.c.b16 %v4596, %v4594
    %v4789 = vpack.c.b16 %v4599, %v4597
    %v4790 = vpack.c.b16 %v4600, %v4598
    %v4791 = vpack.c.b16 %v4603, %v4601
    %v4792 = vpack.c.b16 %v4604, %v4602
    %v4793 = vpack.c.b16 %v4607, %v4605
    %v4794 = vpack.c.b16 %v4608, %v4606
    %v4795 = vpack.c.b16 %v4611, %v4609
    %v4796 = vpack.c.b16 %v4612, %v4610
    %v4797 = vpack.c.b16 %v4615, %v4613
    %v4798 = vpack.c.b16 %v4616, %v4614
    %v4799 = vpack.c.b16 %v4619, %v4617
    %v4800 = vpack.c.b16 %v4620, %v4618
    %v4801 = vpack.c.b16 %v4623, %v4621
    %v4802 = vpack.c.b16 %v4624, %v4622
    %v4803 = vpack.c.b16 %v4627, %v4625
    %v4804 = vpack.c.b16 %v4628, %v4626
    %v4805 = vpack.c.b16 %v4631, %v4629
    %v4806 = vpack.c.b16 %v4632, %v4630
    %v4807 = vpack.c.b16 %v4635, %v4633
    %v4808 = vpack.c.b16 %v4636, %v4634
    %v4809 = vpack.c.b16 %v4639, %v4637
    %v4810 = vpack.c.b16 %v4640, %v4638
    %v4811 = vpack.c.b16 %v4643, %v4641
    %v4812 = vpack.c.b16 %v4644, %v4642
    %v4813 = vpack.c.b16 %v4647, %v4645
    %v4814 = vpack.c.b16 %v4648, %v4646
    %v4815 = vpack.c.b16 %v4651, %v4649
    %v4816 = vpack.c.b16 %v4652, %v4650
    %v4817 = vpack.c.b16 %v4655, %v4653
    %v4818 = vpack.c.b16 %v4656, %v4654
    %v4819 = vpack.c.b16 %v4659, %v4657
    %v4820 = vpack.c.b16 %v4660, %v4658
    %v4821 = vpack.c.b16 %v4663, %v4661
    %v4822 = vpack.c.b16 %v4664, %v4662
    %v4823 = vpack.c.b16 %v4667, %v4665
    %v4824 = vpack.c.b16 %v4668, %v4666
    %v4825 = vpack.c.b16 %v4671, %v4669
    %v4826 = vpack.c.b16 %v4672, %v4670
    %v4827 = vpack.c.b16 %v4675, %v4673
    %v4828 = vpack.c.b16 %v4676, %v4674
    %v4829 = vpack.c.b16 %v4679, %v4677
    %v4830 = vpack.c.b16 %v4680, %v4678
    %v4831 = vpack.c.b16 %v4683, %v4681
    %v4832 = vpack.c.b16 %v4684, %v4682
    %v4833 = vpack.c.b16 %v4687, %v4685
    %v4834 = vpack.c.b16 %v4688, %v4686
    %v4835 = vpack.c.b16 %v4691, %v4689
    %v4836 = vpack.c.b16 %v4692, %v4690
    %v4837 = vpack.c.b16 %v4695, %v4693
    %v4838 = vpack.c.b16 %v4696, %v4694
    %v4839 = vpack.c.b16 %v4699, %v4697
    %v4840 = vpack.c.b16 %v4700, %v4698
    %v4841 = vpack.c.b16 %v4703, %v4701
    %v4842 = vpack.c.b16 %v4704, %v4702
    %v4843 = vpack.c.b16 %v4707, %v4705
    %v4844 = vpack.c.b16 %v4708, %v4706
    %v4845 = vpack.c.b16 %v4711, %v4709
    %v4846 = vpack.c.b16 %v4712, %v4710
    %v4847 = vpack.c.b16 %v4715, %v4713
    %v4848 = vpack.c.b16 %v4716, %v4714
    %v4849 = vpack.c.b16 %v4719, %v4717
    %v4850 = vpack.c.b16 %v4720, %v4718
    %v4851 = vpack.c.b16 %v4723, %v4721
    %v4852 = vpack.c.b16 %v4724, %v4722
    %4981 = vmatpush.bf16.msra.mxu0 %v4739
    %4982 = vmatpush.bf16.msra.mxu0 %v4737
    %4983 = vmatpush.bf16.msra.mxu0 %v4735
    %4984 = vmatpush.bf16.msra.mxu0 %v4733
    %4985 = vmatpush.bf16.msra.mxu0 %v4731
    %4986 = vmatpush.bf16.msra.mxu0 %v4729
    %4987 = vmatpush.bf16.msra.mxu0 %v4727
    %4988 = vmatpush.bf16.msra.mxu0 %v4725
    %4989 = vmatmul.bf16.gmra.mxu0 %v4199
    %v4990 = vpop.f32.mrf.mxu0
    %v4991 = vadd.f32 %v4337, %v4990
    %v4992 = vpop.f32.mrf.mxu0
    %v4993 = vadd.f32 %v4337, %v4992
    %4994 = vdwg.mxu0
    %4995 = vmatpush.bf16.msra.mxu0 %v4755
    %4996 = vmatpush.bf16.msra.mxu0 %v4753
    %4997 = vmatpush.bf16.msra.mxu0 %v4751
    %4998 = vmatpush.bf16.msra.mxu0 %v4749
    %4999 = vmatpush.bf16.msra.mxu0 %v4747
    %5000 = vmatpush.bf16.msra.mxu0 %v4745
    %5001 = vmatpush.bf16.msra.mxu0 %v4743
    %5002 = vmatpush.bf16.msra.mxu0 %v4741
    %5003 = vmatmul.bf16.gmra.mxu0 %v4200
    %v5004 = vpop.f32.mrf.mxu0
    %v5005 = vadd.f32 %v4991, %v5004
    %v5006 = vpop.f32.mrf.mxu0
    %v5007 = vadd.f32 %v4993, %v5006
    %5008 = vdwg.mxu0
    %5009 = vmatpush.bf16.msra.mxu0 %v4771
    %5010 = vmatpush.bf16.msra.mxu0 %v4769
    %5011 = vmatpush.bf16.msra.mxu0 %v4767
    %5012 = vmatpush.bf16.msra.mxu0 %v4765
    %5013 = vmatpush.bf16.msra.mxu0 %v4763
    %5014 = vmatpush.bf16.msra.mxu0 %v4761
    %5015 = vmatpush.bf16.msra.mxu0 %v4759
    %5016 = vmatpush.bf16.msra.mxu0 %v4757
    %5017 = vmatmul.bf16.gmra.mxu0 %v4201
    %v5018 = vpop.f32.mrf.mxu0
    %v5019 = vadd.f32 %v5005, %v5018
    %v5020 = vpop.f32.mrf.mxu0
    %v5021 = vadd.f32 %v5007, %v5020
    %5022 = vdwg.mxu0
    %5023 = vmatpush.bf16.msra.mxu0 %v4787
    %5024 = vmatpush.bf16.msra.mxu0 %v4785
    %5025 = vmatpush.bf16.msra.mxu0 %v4783
    %5026 = vmatpush.bf16.msra.mxu0 %v4781
    %5027 = vmatpush.bf16.msra.mxu0 %v4779
    %5028 = vmatpush.bf16.msra.mxu0 %v4777
    %5029 = vmatpush.bf16.msra.mxu0 %v4775
    %5030 = vmatpush.bf16.msra.mxu0 %v4773
    %5031 = vmatmul.bf16.gmra.mxu0 %v4202
    %v5032 = vpop.f32.mrf.mxu0
    %v5033 = vadd.f32 %v5019, %v5032
    %v5034 = vpop.f32.mrf.mxu0
    %v5035 = vadd.f32 %v5021, %v5034
    %5036 = vdwg.mxu0
    %5037 = vmatpush.bf16.msra.mxu0 %v4803
    %5038 = vmatpush.bf16.msra.mxu0 %v4801
    %5039 = vmatpush.bf16.msra.mxu0 %v4799
    %5040 = vmatpush.bf16.msra.mxu0 %v4797
    %5041 = vmatpush.bf16.msra.mxu0 %v4795
    %5042 = vmatpush.bf16.msra.mxu0 %v4793
    %5043 = vmatpush.bf16.msra.mxu0 %v4791
    %5044 = vmatpush.bf16.msra.mxu0 %v4789
    %5045 = vmatmul.bf16.gmra.mxu0 %v4203
    %v5046 = vpop.f32.mrf.mxu0
    %v5047 = vadd.f32 %v5033, %v5046
    %v5048 = vpop.f32.mrf.mxu0
    %v5049 = vadd.f32 %v5035, %v5048
    %5050 = vdwg.mxu0
    %5051 = vmatpush.bf16.msra.mxu0 %v4819
    %5052 = vmatpush.bf16.msra.mxu0 %v4817
    %5053 = vmatpush.bf16.msra.mxu0 %v4815
    %5054 = vmatpush.bf16.msra.mxu0 %v4813
    %5055 = vmatpush.bf16.msra.mxu0 %v4811
    %5056 = vmatpush.bf16.msra.mxu0 %v4809
    %5057 = vmatpush.bf16.msra.mxu0 %v4807
    %5058 = vmatpush.bf16.msra.mxu0 %v4805
    %5059 = vmatmul.bf16.gmra.mxu0 %v4204
    %v5060 = vpop.f32.mrf.mxu0
    %v5061 = vadd.f32 %v5047, %v5060
    %v5062 = vpop.f32.mrf.mxu0
    %v5063 = vadd.f32 %v5049, %v5062
    %5064 = vdwg.mxu0
    %5065 = vmatpush.bf16.msra.mxu0 %v4835
    %5066 = vmatpush.bf16.msra.mxu0 %v4833
    %5067 = vmatpush.bf16.msra.mxu0 %v4831
    %5068 = vmatpush.bf16.msra.mxu0 %v4829
    %5069 = vmatpush.bf16.msra.mxu0 %v4827
    %5070 = vmatpush.bf16.msra.mxu0 %v4825
    %5071 = vmatpush.bf16.msra.mxu0 %v4823
    %5072 = vmatpush.bf16.msra.mxu0 %v4821
    %5073 = vmatmul.bf16.gmra.mxu0 %v4205
    %v5074 = vpop.f32.mrf.mxu0
    %v5075 = vadd.f32 %v5061, %v5074
    %v5076 = vpop.f32.mrf.mxu0
    %v5077 = vadd.f32 %v5063, %v5076
    %5078 = vdwg.mxu0
    %5079 = vmatpush.bf16.msra.mxu0 %v4851
    %5080 = vmatpush.bf16.msra.mxu0 %v4849
    %5081 = vmatpush.bf16.msra.mxu0 %v4847
    %5082 = vmatpush.bf16.msra.mxu0 %v4845
    %5083 = vmatpush.bf16.msra.mxu0 %v4843
    %5084 = vmatpush.bf16.msra.mxu0 %v4841
    %5085 = vmatpush.bf16.msra.mxu0 %v4839
    %5086 = vmatpush.bf16.msra.mxu0 %v4837
    %5087 = vmatmul.bf16.gmra.mxu0 %v4206
    %v5088 = vpop.f32.mrf.mxu0
    %v5089 = vadd.f32 %v5075, %v5088
    %v5090 = vpop.f32.mrf.mxu0
    %v5091 = vadd.f32 %v5077, %v5090
    %5092 = vdwg.mxu0
    %5093 = vmatpush.bf16.msra.mxu0 %v4740
    %5094 = vmatpush.bf16.msra.mxu0 %v4738
    %5095 = vmatpush.bf16.msra.mxu0 %v4736
    %5096 = vmatpush.bf16.msra.mxu0 %v4734
    %5097 = vmatpush.bf16.msra.mxu0 %v4732
    %5098 = vmatpush.bf16.msra.mxu0 %v4730
    %5099 = vmatpush.bf16.msra.mxu0 %v4728
    %5100 = vmatpush.bf16.msra.mxu0 %v4726
    %5101 = vmatmul.bf16.gmra.mxu0 %v4199
    %v5102 = vpop.f32.mrf.mxu0
    %v5103 = vadd.f32 %v4338, %v5102
    %v5104 = vpop.f32.mrf.mxu0
    %v5105 = vadd.f32 %v4338, %v5104
    %5106 = vdwg.mxu0
    %5107 = vmatpush.bf16.msra.mxu0 %v4756
    %5108 = vmatpush.bf16.msra.mxu0 %v4754
    %5109 = vmatpush.bf16.msra.mxu0 %v4752
    %5110 = vmatpush.bf16.msra.mxu0 %v4750
    %5111 = vmatpush.bf16.msra.mxu0 %v4748
    %5112 = vmatpush.bf16.msra.mxu0 %v4746
    %5113 = vmatpush.bf16.msra.mxu0 %v4744
    %5114 = vmatpush.bf16.msra.mxu0 %v4742
    %5115 = vmatmul.bf16.gmra.mxu0 %v4200
    %v5116 = vpop.f32.mrf.mxu0
    %v5117 = vadd.f32 %v5103, %v5116
    %v5118 = vpop.f32.mrf.mxu0
    %v5119 = vadd.f32 %v5105, %v5118
    %5120 = vdwg.mxu0
    %5121 = vmatpush.bf16.msra.mxu0 %v4772
    %5122 = vmatpush.bf16.msra.mxu0 %v4770
    %5123 = vmatpush.bf16.msra.mxu0 %v4768
    %5124 = vmatpush.bf16.msra.mxu0 %v4766
    %5125 = vmatpush.bf16.msra.mxu0 %v4764
    %5126 = vmatpush.bf16.msra.mxu0 %v4762
    %5127 = vmatpush.bf16.msra.mxu0 %v4760
    %5128 = vmatpush.bf16.msra.mxu0 %v4758
    %5129 = vmatmul.bf16.gmra.mxu0 %v4201
    %v5130 = vpop.f32.mrf.mxu0
    %v5131 = vadd.f32 %v5117, %v5130
    %v5132 = vpop.f32.mrf.mxu0
    %v5133 = vadd.f32 %v5119, %v5132
    %5134 = vdwg.mxu0
    %5135 = vmatpush.bf16.msra.mxu0 %v4788
    %5136 = vmatpush.bf16.msra.mxu0 %v4786
    %5137 = vmatpush.bf16.msra.mxu0 %v4784
    %5138 = vmatpush.bf16.msra.mxu0 %v4782
    %5139 = vmatpush.bf16.msra.mxu0 %v4780
    %5140 = vmatpush.bf16.msra.mxu0 %v4778
    %5141 = vmatpush.bf16.msra.mxu0 %v4776
    %5142 = vmatpush.bf16.msra.mxu0 %v4774
    %5143 = vmatmul.bf16.gmra.mxu0 %v4202
    %v5144 = vpop.f32.mrf.mxu0
    %v5145 = vadd.f32 %v5131, %v5144
    %v5146 = vpop.f32.mrf.mxu0
    %v5147 = vadd.f32 %v5133, %v5146
    %5148 = vdwg.mxu0
    %5149 = vmatpush.bf16.msra.mxu0 %v4804
    %5150 = vmatpush.bf16.msra.mxu0 %v4802
    %5151 = vmatpush.bf16.msra.mxu0 %v4800
    %5152 = vmatpush.bf16.msra.mxu0 %v4798
    %5153 = vmatpush.bf16.msra.mxu0 %v4796
    %5154 = vmatpush.bf16.msra.mxu0 %v4794
    %5155 = vmatpush.bf16.msra.mxu0 %v4792
    %5156 = vmatpush.bf16.msra.mxu0 %v4790
    %5157 = vmatmul.bf16.gmra.mxu0 %v4203
    %v5158 = vpop.f32.mrf.mxu0
    %v5159 = vadd.f32 %v5145, %v5158
    %v5160 = vpop.f32.mrf.mxu0
    %v5161 = vadd.f32 %v5147, %v5160
    %5162 = vdwg.mxu0
    %5163 = vmatpush.bf16.msra.mxu0 %v4820
    %5164 = vmatpush.bf16.msra.mxu0 %v4818
    %5165 = vmatpush.bf16.msra.mxu0 %v4816
    %5166 = vmatpush.bf16.msra.mxu0 %v4814
    %5167 = vmatpush.bf16.msra.mxu0 %v4812
    %5168 = vmatpush.bf16.msra.mxu0 %v4810
    %5169 = vmatpush.bf16.msra.mxu0 %v4808
    %5170 = vmatpush.bf16.msra.mxu0 %v4806
    %5171 = vmatmul.bf16.gmra.mxu0 %v4204
    %v5172 = vpop.f32.mrf.mxu0
    %v5173 = vadd.f32 %v5159, %v5172
    %v5174 = vpop.f32.mrf.mxu0
    %v5175 = vadd.f32 %v5161, %v5174
    %5176 = vdwg.mxu0
    %5177 = vmatpush.bf16.msra.mxu0 %v4836
    %5178 = vmatpush.bf16.msra.mxu0 %v4834
    %5179 = vmatpush.bf16.msra.mxu0 %v4832
    %5180 = vmatpush.bf16.msra.mxu0 %v4830
    %5181 = vmatpush.bf16.msra.mxu0 %v4828
    %5182 = vmatpush.bf16.msra.mxu0 %v4826
    %5183 = vmatpush.bf16.msra.mxu0 %v4824
    %5184 = vmatpush.bf16.msra.mxu0 %v4822
    %5185 = vmatmul.bf16.gmra.mxu0 %v4205
    %v5186 = vpop.f32.mrf.mxu0
    %v5187 = vadd.f32 %v5173, %v5186
    %v5188 = vpop.f32.mrf.mxu0
    %v5189 = vadd.f32 %v5175, %v5188
    %5190 = vdwg.mxu0
    %5191 = vmatpush.bf16.msra.mxu0 %v4852
    %5192 = vmatpush.bf16.msra.mxu0 %v4850
    %5193 = vmatpush.bf16.msra.mxu0 %v4848
    %5194 = vmatpush.bf16.msra.mxu0 %v4846
    %5195 = vmatpush.bf16.msra.mxu0 %v4844
    %5196 = vmatpush.bf16.msra.mxu0 %v4842
    %5197 = vmatpush.bf16.msra.mxu0 %v4840
    %5198 = vmatpush.bf16.msra.mxu0 %v4838
    %5199 = vmatmul.bf16.gmra.mxu0 %v4206
    %v5200 = vpop.f32.mrf.mxu0
    %v5201 = vadd.f32 %v5187, %v5200
    %v5202 = vpop.f32.mrf.mxu0
    %v5203 = vadd.f32 %v5189, %v5202
    %5204 = vdwg.mxu0
    %v5205 = vmax.f32 %v5089, 0.0
    %v5206 = vmax.f32 %v5201, 0.0
    %v5207 = vmax.f32 %v5091, 0.0
    %v5208 = vmax.f32 %v5203, 0.0
    %v5209 = vpack.c.bf16 %v5207, %v5205
    %v5210 = vpack.c.bf16 %v5208, %v5206
    %v5211 = vld [vmem:[#allocation9] sm:$0xff]
    %v5212 = vld [vmem:[#allocation9 + $0x8] sm:$0xff]
    %v5213 = vld [vmem:[#allocation9 + $0x10] sm:$0xff]
    %v5214 = vld [vmem:[#allocation9 + $0x18] sm:$0xff]
    %v5215 = vld [vmem:[#allocation9 + $0x20] sm:$0xff]
    %v5216 = vld [vmem:[#allocation9 + $0x28] sm:$0xff]
    %v5217 = vld [vmem:[#allocation9 + $0x30] sm:$0xff]
    %v5218 = vld [vmem:[#allocation9 + $0x38] sm:$0xff]
    %v5219 = vld [vmem:[#allocation9 + $0x40] sm:$0xff]
    %v5220 = vld [vmem:[#allocation9 + $0x48] sm:$0xff]
    %v5221 = vld [vmem:[#allocation9 + $0x50] sm:$0xff]
    %v5222 = vld [vmem:[#allocation9 + $0x58] sm:$0xff]
    %v5223 = vld [vmem:[#allocation9 + $0x60] sm:$0xff]
    %v5224 = vld [vmem:[#allocation9 + $0x68] sm:$0xff]
    %v5225 = vld [vmem:[#allocation9 + $0x70] sm:$0xff]
    %v5226 = vld [vmem:[#allocation9 + $0x78] sm:$0xff]
    %v5227 = vld [vmem:[#allocation9 + $0x80] sm:$0xff]
    %v5228 = vld [vmem:[#allocation9 + $0x88] sm:$0xff]
    %v5229 = vld [vmem:[#allocation9 + $0x90] sm:$0xff]
    %v5230 = vld [vmem:[#allocation9 + $0x98] sm:$0xff]
    %v5231 = vld [vmem:[#allocation9 + $0xa0] sm:$0xff]
    %v5232 = vld [vmem:[#allocation9 + $0xa8] sm:$0xff]
    %v5233 = vld [vmem:[#allocation9 + $0xb0] sm:$0xff]
    %v5234 = vld [vmem:[#allocation9 + $0xb8] sm:$0xff]
    %v5235 = vld [vmem:[#allocation9 + $0xc0] sm:$0xff]
    %v5236 = vld [vmem:[#allocation9 + $0xc8] sm:$0xff]
    %v5237 = vld [vmem:[#allocation9 + $0xd0] sm:$0xff]
    %v5238 = vld [vmem:[#allocation9 + $0xd8] sm:$0xff]
    %v5239 = vld [vmem:[#allocation9 + $0xe0] sm:$0xff]
    %v5240 = vld [vmem:[#allocation9 + $0xe8] sm:$0xff]
    %v5241 = vld [vmem:[#allocation9 + $0xf0] sm:$0xff]
    %v5242 = vld [vmem:[#allocation9 + $0xf8] sm:$0xff]
    %v5243 = vld [vmem:[#allocation10] sm:$0x3]
    %v5245 = vperm.slane %v5243, 0
    %v5246 = vperm.slane %v5243, 1
    %v5281 = vunpack.c.l.b16 %v5211
    %v5282 = vunpack.c.h.b16 %v5211
    %v5283 = vunpack.c.l.b16 %v5212
    %v5284 = vunpack.c.h.b16 %v5212
    %v5285 = vunpack.c.l.b16 %v5213
    %v5286 = vunpack.c.h.b16 %v5213
    %v5287 = vunpack.c.l.b16 %v5214
    %v5288 = vunpack.c.h.b16 %v5214
    %v5289 = vunpack.c.l.b16 %v5215
    %v5290 = vunpack.c.h.b16 %v5215
    %v5291 = vunpack.c.l.b16 %v5216
    %v5292 = vunpack.c.h.b16 %v5216
    %v5293 = vunpack.c.l.b16 %v5217
    %v5294 = vunpack.c.h.b16 %v5217
    %v5295 = vunpack.c.l.b16 %v5218
    %v5296 = vunpack.c.h.b16 %v5218
    %v5297 = vunpack.c.l.b16 %v5219
    %v5298 = vunpack.c.h.b16 %v5219
    %v5299 = vunpack.c.l.b16 %v5220
    %v5300 = vunpack.c.h.b16 %v5220
    %v5301 = vunpack.c.l.b16 %v5221
    %v5302 = vunpack.c.h.b16 %v5221
    %v5303 = vunpack.c.l.b16 %v5222
    %v5304 = vunpack.c.h.b16 %v5222
    %v5305 = vunpack.c.l.b16 %v5223
    %v5306 = vunpack.c.h.b16 %v5223
    %v5307 = vunpack.c.l.b16 %v5224
    %v5308 = vunpack.c.h.b16 %v5224
    %v5309 = vunpack.c.l.b16 %v5225
    %v5310 = vunpack.c.h.b16 %v5225
    %v5311 = vunpack.c.l.b16 %v5226
    %v5312 = vunpack.c.h.b16 %v5226
    %v5313 = vunpack.c.l.b16 %v5227
    %v5314 = vunpack.c.h.b16 %v5227
    %v5315 = vunpack.c.l.b16 %v5228
    %v5316 = vunpack.c.h.b16 %v5228
    %v5317 = vunpack.c.l.b16 %v5229
    %v5318 = vunpack.c.h.b16 %v5229
    %v5319 = vunpack.c.l.b16 %v5230
    %v5320 = vunpack.c.h.b16 %v5230
    %v5321 = vunpack.c.l.b16 %v5231
    %v5322 = vunpack.c.h.b16 %v5231
    %v5323 = vunpack.c.l.b16 %v5232
    %v5324 = vunpack.c.h.b16 %v5232
    %v5325 = vunpack.c.l.b16 %v5233
    %v5326 = vunpack.c.h.b16 %v5233
    %v5327 = vunpack.c.l.b16 %v5234
    %v5328 = vunpack.c.h.b16 %v5234
    %v5329 = vunpack.c.l.b16 %v5235
    %v5330 = vunpack.c.h.b16 %v5235
    %v5331 = vunpack.c.l.b16 %v5236
    %v5332 = vunpack.c.h.b16 %v5236
    %v5333 = vunpack.c.l.b16 %v5237
    %v5334 = vunpack.c.h.b16 %v5237
    %v5335 = vunpack.c.l.b16 %v5238
    %v5336 = vunpack.c.h.b16 %v5238
    %v5337 = vunpack.c.l.b16 %v5239
    %v5338 = vunpack.c.h.b16 %v5239
    %v5339 = vunpack.c.l.b16 %v5240
    %v5340 = vunpack.c.h.b16 %v5240
    %v5341 = vunpack.c.l.b16 %v5241
    %v5342 = vunpack.c.h.b16 %v5241
    %v5343 = vunpack.c.l.b16 %v5242
    %v5344 = vunpack.c.h.b16 %v5242
    %v5345 = vpack.c.b16 %v5283, %v5281
    %v5346 = vpack.c.b16 %v5284, %v5282
    %v5347 = vpack.c.b16 %v5287, %v5285
    %v5348 = vpack.c.b16 %v5288, %v5286
    %v5349 = vpack.c.b16 %v5291, %v5289
    %v5350 = vpack.c.b16 %v5292, %v5290
    %v5351 = vpack.c.b16 %v5295, %v5293
    %v5352 = vpack.c.b16 %v5296, %v5294
    %v5353 = vpack.c.b16 %v5299, %v5297
    %v5354 = vpack.c.b16 %v5300, %v5298
    %v5355 = vpack.c.b16 %v5303, %v5301
    %v5356 = vpack.c.b16 %v5304, %v5302
    %v5357 = vpack.c.b16 %v5307, %v5305
    %v5358 = vpack.c.b16 %v5308, %v5306
    %v5359 = vpack.c.b16 %v5311, %v5309
    %v5360 = vpack.c.b16 %v5312, %v5310
    %v5361 = vpack.c.b16 %v5315, %v5313
    %v5362 = vpack.c.b16 %v5316, %v5314
    %v5363 = vpack.c.b16 %v5319, %v5317
    %v5364 = vpack.c.b16 %v5320, %v5318
    %v5365 = vpack.c.b16 %v5323, %v5321
    %v5366 = vpack.c.b16 %v5324, %v5322
    %v5367 = vpack.c.b16 %v5327, %v5325
    %v5368 = vpack.c.b16 %v5328, %v5326
    %v5369 = vpack.c.b16 %v5331, %v5329
    %v5370 = vpack.c.b16 %v5332, %v5330
    %v5371 = vpack.c.b16 %v5335, %v5333
    %v5372 = vpack.c.b16 %v5336, %v5334
    %v5373 = vpack.c.b16 %v5339, %v5337
    %v5374 = vpack.c.b16 %v5340, %v5338
    %v5375 = vpack.c.b16 %v5343, %v5341
    %v5376 = vpack.c.b16 %v5344, %v5342
    %5409 = vmatpush.bf16.msra.mxu0 %v5359
    %5410 = vmatpush.bf16.msra.mxu0 %v5357
    %5411 = vmatpush.bf16.msra.mxu0 %v5355
    %5412 = vmatpush.bf16.msra.mxu0 %v5353
    %5413 = vmatpush.bf16.msra.mxu0 %v5351
    %5414 = vmatpush.bf16.msra.mxu0 %v5349
    %5415 = vmatpush.bf16.msra.mxu0 %v5347
    %5416 = vmatpush.bf16.msra.mxu0 %v5345
    %5417 = vmatmul.bf16.gmra.mxu0 %v5209
    %v5418 = vpop.f32.mrf.mxu0
    %v5419 = vadd.f32 %v5245, %v5418
    %v5420 = vpop.f32.mrf.mxu0
    %v5421 = vadd.f32 %v5245, %v5420
    %5422 = vdwg.mxu0
    %5423 = vmatpush.bf16.msra.mxu0 %v5375
    %5424 = vmatpush.bf16.msra.mxu0 %v5373
    %5425 = vmatpush.bf16.msra.mxu0 %v5371
    %5426 = vmatpush.bf16.msra.mxu0 %v5369
    %5427 = vmatpush.bf16.msra.mxu0 %v5367
    %5428 = vmatpush.bf16.msra.mxu0 %v5365
    %5429 = vmatpush.bf16.msra.mxu0 %v5363
    %5430 = vmatpush.bf16.msra.mxu0 %v5361
    %5431 = vmatmul.bf16.gmra.mxu0 %v5210
    %v5432 = vpop.f32.mrf.mxu0
    %v5433 = vadd.f32 %v5419, %v5432
    %v5434 = vpop.f32.mrf.mxu0
    %v5435 = vadd.f32 %v5421, %v5434
    %5436 = vdwg.mxu0
    %5437 = vmatpush.bf16.msra.mxu0 %v5360
    %5438 = vmatpush.bf16.msra.mxu0 %v5358
    %5439 = vmatpush.bf16.msra.mxu0 %v5356
    %5440 = vmatpush.bf16.msra.mxu0 %v5354
    %5441 = vmatpush.bf16.msra.mxu0 %v5352
    %5442 = vmatpush.bf16.msra.mxu0 %v5350
    %5443 = vmatpush.bf16.msra.mxu0 %v5348
    %5444 = vmatpush.bf16.msra.mxu0 %v5346
    %5445 = vmatmul.bf16.gmra.mxu0 %v5209
    %v5446 = vpop.f32.mrf.mxu0
    %v5447 = vadd.f32 %v5246, %v5446
    %v5448 = vpop.f32.mrf.mxu0
    %v5449 = vadd.f32 %v5246, %v5448
    %5450 = vdwg.mxu0
    %5451 = vmatpush.bf16.msra.mxu0 %v5376
    %5452 = vmatpush.bf16.msra.mxu0 %v5374
    %5453 = vmatpush.bf16.msra.mxu0 %v5372
    %5454 = vmatpush.bf16.msra.mxu0 %v5370
    %5455 = vmatpush.bf16.msra.mxu0 %v5368
    %5456 = vmatpush.bf16.msra.mxu0 %v5366
    %5457 = vmatpush.bf16.msra.mxu0 %v5364
    %5458 = vmatpush.bf16.msra.mxu0 %v5362
    %5459 = vmatmul.bf16.gmra.mxu0 %v5210
    %v5460 = vpop.f32.mrf.mxu0
    %v5461 = vadd.f32 %v5447, %v5460
    %v5462 = vpop.f32.mrf.mxu0
    %v5463 = vadd.f32 %v5449, %v5462
    %5464 = vdwg.mxu0
    %v5465 = vmax.f32 %v5433, 0.0
    %v5466 = vmax.f32 %v5461, 0.0
    %v5467 = vmax.f32 %v5435, 0.0
    %v5468 = vmax.f32 %v5463, 0.0
    %v5469 = vpack.c.bf16 %v5467, %v5465
    %v5470 = vpack.c.bf16 %v5468, %v5466
    %v5471 = vld [vmem:[#allocation12] sm:$0xf]
    %v5472 = vld [vmem:[#allocation12 + $0x4] sm:$0xf]
    %v5473 = vld [vmem:[#allocation12 + $0x8] sm:$0xf]
    %v5474 = vld [vmem:[#allocation12 + $0xc] sm:$0xf]
    %v5475 = vld [vmem:[#allocation12 + $0x10] sm:$0xf]
    %v5476 = vld [vmem:[#allocation12 + $0x14] sm:$0xf]
    %v5477 = vld [vmem:[#allocation12 + $0x18] sm:$0xf]
    %v5478 = vld [vmem:[#allocation12 + $0x1c] sm:$0xf]
    %v5479 = vld [vmem:[#allocation12 + $0x20] sm:$0xf]
    %v5480 = vld [vmem:[#allocation12 + $0x24] sm:$0xf]
    %v5481 = vld [vmem:[#allocation12 + $0x28] sm:$0xf]
    %v5482 = vld [vmem:[#allocation12 + $0x2c] sm:$0xf]
    %v5483 = vld [vmem:[#allocation12 + $0x30] sm:$0xf]
    %v5484 = vld [vmem:[#allocation12 + $0x34] sm:$0xf]
    %v5485 = vld [vmem:[#allocation12 + $0x38] sm:$0xf]
    %v5486 = vld [vmem:[#allocation12 + $0x3c] sm:$0xf]
    %v5487 = vld [vmem:[#allocation12 + $0x40] sm:$0xf]
    %v5488 = vld [vmem:[#allocation12 + $0x44] sm:$0xf]
    %v5489 = vld [vmem:[#allocation12 + $0x48] sm:$0xf]
    %v5490 = vld [vmem:[#allocation12 + $0x4c] sm:$0xf]
    %v5491 = vld [vmem:[#allocation12 + $0x50] sm:$0xf]
    %v5492 = vld [vmem:[#allocation12 + $0x54] sm:$0xf]
    %v5493 = vld [vmem:[#allocation12 + $0x58] sm:$0xf]
    %v5494 = vld [vmem:[#allocation12 + $0x5c] sm:$0xf]
    %v5495 = vld [vmem:[#allocation12 + $0x60] sm:$0xf]
    %v5496 = vld [vmem:[#allocation12 + $0x64] sm:$0xf]
    %v5497 = vld [vmem:[#allocation12 + $0x68] sm:$0xf]
    %v5498 = vld [vmem:[#allocation12 + $0x6c] sm:$0xf]
    %v5499 = vld [vmem:[#allocation12 + $0x70] sm:$0xf]
    %v5500 = vld [vmem:[#allocation12 + $0x74] sm:$0xf]
    %v5501 = vld [vmem:[#allocation12 + $0x78] sm:$0xf]
    %v5502 = vld [vmem:[#allocation12 + $0x7c] sm:$0xf]
    %v5503 = vld [vmem:[#allocation13] sm:$0x1]
    %v5505 = vperm.slane %v5503, 0
    %v5539 = vunpack.c.l.b16 %v5471
    %v5540 = vunpack.c.l.b16 %v5472
    %v5541 = vunpack.c.l.b16 %v5473
    %v5542 = vunpack.c.l.b16 %v5474
    %v5543 = vunpack.c.l.b16 %v5475
    %v5544 = vunpack.c.l.b16 %v5476
    %v5545 = vunpack.c.l.b16 %v5477
    %v5546 = vunpack.c.l.b16 %v5478
    %v5547 = vunpack.c.l.b16 %v5479
    %v5548 = vunpack.c.l.b16 %v5480
    %v5549 = vunpack.c.l.b16 %v5481
    %v5550 = vunpack.c.l.b16 %v5482
    %v5551 = vunpack.c.l.b16 %v5483
    %v5552 = vunpack.c.l.b16 %v5484
    %v5553 = vunpack.c.l.b16 %v5485
    %v5554 = vunpack.c.l.b16 %v5486
    %v5555 = vunpack.c.l.b16 %v5487
    %v5556 = vunpack.c.l.b16 %v5488
    %v5557 = vunpack.c.l.b16 %v5489
    %v5558 = vunpack.c.l.b16 %v5490
    %v5559 = vunpack.c.l.b16 %v5491
    %v5560 = vunpack.c.l.b16 %v5492
    %v5561 = vunpack.c.l.b16 %v5493
    %v5562 = vunpack.c.l.b16 %v5494
    %v5563 = vunpack.c.l.b16 %v5495
    %v5564 = vunpack.c.l.b16 %v5496
    %v5565 = vunpack.c.l.b16 %v5497
    %v5566 = vunpack.c.l.b16 %v5498
    %v5567 = vunpack.c.l.b16 %v5499
    %v5568 = vunpack.c.l.b16 %v5500
    %v5569 = vunpack.c.l.b16 %v5501
    %v5570 = vunpack.c.l.b16 %v5502
    %v5571 = vpack.c.b16 %v5540, %v5539
    %v5572 = vpack.c.b16 %v5542, %v5541
    %v5573 = vpack.c.b16 %v5544, %v5543
    %v5574 = vpack.c.b16 %v5546, %v5545
    %v5575 = vpack.c.b16 %v5548, %v5547
    %v5576 = vpack.c.b16 %v5550, %v5549
    %v5577 = vpack.c.b16 %v5552, %v5551
    %v5578 = vpack.c.b16 %v5554, %v5553
    %v5579 = vpack.c.b16 %v5556, %v5555
    %v5580 = vpack.c.b16 %v5558, %v5557
    %v5581 = vpack.c.b16 %v5560, %v5559
    %v5582 = vpack.c.b16 %v5562, %v5561
    %v5583 = vpack.c.b16 %v5564, %v5563
    %v5584 = vpack.c.b16 %v5566, %v5565
    %v5585 = vpack.c.b16 %v5568, %v5567
    %v5586 = vpack.c.b16 %v5570, %v5569
    %5603 = vmatpush.bf16.msra.mxu0 %v5578
    %5604 = vmatpush.bf16.msra.mxu0 %v5577
    %5605 = vmatpush.bf16.msra.mxu0 %v5576
    %5606 = vmatpush.bf16.msra.mxu0 %v5575
    %5607 = vmatpush.bf16.msra.mxu0 %v5574
    %5608 = vmatpush.bf16.msra.mxu0 %v5573
    %5609 = vmatpush.bf16.msra.mxu0 %v5572
    %5610 = vmatpush.bf16.msra.mxu0 %v5571
    %5611 = vmatmul.bf16.gmra.mxu0 %v5469
    %v5612 = vpop.f32.mrf.mxu0
    %v5613 = vadd.f32 %v5505, %v5612
    %v5614 = vpop.f32.mrf.mxu0
    %v5615 = vadd.f32 %v5505, %v5614
    %5616 = vdwg.mxu0
    %5617 = vmatpush.bf16.msra.mxu0 %v5586
    %5618 = vmatpush.bf16.msra.mxu0 %v5585
    %5619 = vmatpush.bf16.msra.mxu0 %v5584
    %5620 = vmatpush.bf16.msra.mxu0 %v5583
    %5621 = vmatpush.bf16.msra.mxu0 %v5582
    %5622 = vmatpush.bf16.msra.mxu0 %v5581
    %5623 = vmatpush.bf16.msra.mxu0 %v5580
    %5624 = vmatpush.bf16.msra.mxu0 %v5579
    %5625 = vmatmul.bf16.gmra.mxu0 %v5470
    %v5626 = vpop.f32.mrf.mxu0
    %v5627 = vadd.f32 %v5613, %v5626
    %v5628 = vpop.f32.mrf.mxu0
    %v5629 = vadd.f32 %v5615, %v5628
    %5630 = vdwg.mxu0
    %v5631 = vpack.c.bf16 %v5627, %v5627
    %v5632 = vpack.c.bf16 %v5629, %v5629
    %5633 = vst [vmem:[%s9] sm:$0xf] %v5631
    %5634 = vst [vmem:[%s9 + $0x4] sm:$0xf] %v5632
    // Predicated region
    $region70: #{solver_forward.1} parent=1 // pred_check
      _
    $region71: #{solver_forward.1} parent=1 // pred_check_branch
      %5636 = sbr.rel (0) target = $region73
    $region72: #{solver_forward.1} parent=1 // pred_region
      _
    $region73: #{solver_forward.1} parent=1 // pred_fallthru
      _
    // Predicated region
    $region74: #{solver_forward.1} parent=1 // pred_check
      _
    $region75: #{solver_forward.1} parent=1 // pred_check_branch
      %5638 = sbr.rel (0) target = $region77
    $region76: #{solver_forward.1} parent=1 // pred_region
      _
    $region77: #{solver_forward.1} parent=1 // pred_fallthru
      _
    %5639 = vsyncpa [#allocation3], 1
    %5640 = vsyncpa [#allocation5], 1
    %5641 = vsyncpa [#allocation8], 1
    %5642 = vsyncpa [#allocation11], 1
    %5643 = vsyncpa [#allocation14], 1

</llo_original>
